<compile_context>
chip_gen: v7x
topology: tpu7x:2x2x1
jax: 0.10.0
libtpu: 0.0.40
codegen_flags: <defaults>
</compile_context>

<pallas_src>
import functools

import jax
import jax.numpy as jnp
from jax.experimental import pallas as pl
from jax.experimental.pallas import tpu as pltpu

DROPOUT_P = 0.2
N_EMBD = 384  # module constant (test uses this with a small batch/seq)


def _make_ffn_kernel(p_drop: float, training: bool, block_m: int):
    """Kernel body: seed (SMEM), x (TM,C), w1t (C,H), b1 (1,H), w2t (H,C),
    b2 (1,C), out (TM,C)."""
    apply_dropout = training and p_drop > 0.0
    thresh_u32 = min(int(p_drop * float(1 << 32)), (1 << 32) - 1)
    keep_scale = 1.0 / (1.0 - p_drop) if p_drop < 1.0 else 0.0

    def kernel(seed_ref, x_ref, w1_ref, b1_ref, w2_ref, b2_ref, o_ref):
        x = x_ref[...]  # (TM, C), native dtype (f32 or bf16)

        # Linear 1 + bias + ReLU  (MXU matmul, f32 accumulation)
        h = jnp.dot(x, w1_ref[...], preferred_element_type=jnp.float32)
        h = jnp.maximum(h + b1_ref[...], 0.0)

        # Linear 2 + bias — feed the MXU in the activation dtype again.
        h = h.astype(x.dtype)
        y = jnp.dot(h, w2_ref[...], preferred_element_type=jnp.float32)
        y = y + b2_ref[...]

        if apply_dropout:
            tm, n = o_ref.shape
            # Global (row, col) coordinates -> per-tile-independent mask.
            rows = jax.lax.broadcasted_iota(jnp.int32, (tm, n), 0).astype(jnp.uint32)
            cols = jax.lax.broadcasted_iota(jnp.int32, (tm, n), 1).astype(jnp.uint32)
            row0 = (pl.program_id(0) * block_m).astype(jnp.uint32)
            seed = seed_ref[0].astype(jnp.uint32)
            # Linear mix + murmur3 finalizer -> well-mixed 32-bit hash/element.
            k = ((rows + row0) * jnp.uint32(0x9E3779B1)
                 + cols * jnp.uint32(0x85EBCA77)
                 + seed * jnp.uint32(0xC2B2AE3D))
            k = k ^ (k >> 16)
            k = k * jnp.uint32(0x7FEB352D)
            k = k ^ (k >> 15)
            k = k * jnp.uint32(0x846CA68B)
            k = k ^ (k >> 16)
            # Integer-threshold Bernoulli keep, 1/(1-p) folded into the select.
            y = y * jnp.where(k >= jnp.uint32(thresh_u32),
                              jnp.float32(keep_scale), jnp.float32(0.0))

        o_ref[...] = y.astype(o_ref.dtype)

    return kernel


@functools.partial(jax.jit, static_argnames=("training", "p_drop", "block_m"))
def feed_forward(x, w1t, b1, w2t, b2, seed, *, training=True,
                 p_drop=DROPOUT_P, block_m=256):
    """Fused FFN forward.

    x   : (B, T, C) activations.
    w1t : (C, 4C)  first Linear weight, pre-transposed to (in, out).
    b1  : (4C,)
    w2t : (4C, C)  second Linear weight, pre-transposed to (in, out).
    b2  : (C,)
    seed: int dropout seed (only used when training=True).
    """
    B, T, C = x.shape
    H = w1t.shape[1]
    M = B * T

    tm = min(block_m, M)          # (TM multiple of 8, or TM == M)
    grid_m = pl.cdiv(M, tm)

    x2 = x.reshape(M, C)
    kernel = _make_ffn_kernel(float(p_drop), bool(training), tm)

    out2 = pl.pallas_call(
        kernel,
        out_shape=jax.ShapeDtypeStruct((M, C), x.dtype),
        grid=(grid_m,),
        in_specs=[
            pl.BlockSpec(memory_space=pltpu.MemorySpace.SMEM),  # seed scalar
            pl.BlockSpec((tm, C), lambda i: (i, 0)),            # x row tile
            pl.BlockSpec((C, H), lambda i: (0, 0)),             # W1^T (resident)
            pl.BlockSpec((1, H), lambda i: (0, 0)),             # b1   (resident)
            pl.BlockSpec((H, C), lambda i: (0, 0)),             # W2^T (resident)
            pl.BlockSpec((1, C), lambda i: (0, 0)),             # b2   (resident)
        ],
        out_specs=pl.BlockSpec((tm, C), lambda i: (i, 0)),
        compiler_params=pltpu.CompilerParams(
            dimension_semantics=("parallel",),     # shard row tiles across TCs
            vmem_limit_bytes=64 * 1024 * 1024,
        ),
    )(
        jnp.asarray([seed], jnp.int32),
        x2,
        w1t,
        b1.reshape(1, H),
        w2t,
        b2.reshape(1, C),
    )
    return out2.reshape(B, T, C)


def _ref_feed_forward(x, w1t, b1, w2t, b2):
    """Pure-JAX reference (eval mode, dropout = identity)."""
    h = jnp.maximum(x @ w1t + b1, 0.0)
    return h @ w2t + b2


if __name__ == "__main__":
    B, T, C = 2, 8, N_EMBD
    H = 4 * C

    key = jax.random.PRNGKey(0)
    kx, k1, k2, k3, k4 = jax.random.split(key, 5)

    x = jax.random.normal(kx, (B, T, C), dtype=jnp.float32)
    # PyTorch nn.Linear layout is (out, in); transpose ONCE at parameter-setup
    # time so no transpose sits inside the jitted/steady-state forward path.
    w1 = jax.random.normal(k1, (H, C), dtype=jnp.float32) * 0.02
    b1 = jax.random.normal(k2, (H,), dtype=jnp.float32) * 0.02
    w2 = jax.random.normal(k3, (C, H), dtype=jnp.float32) * 0.02
    b2 = jax.random.normal(k4, (C,), dtype=jnp.float32) * 0.02
    w1t = jnp.asarray(w1.T)   # (C, H)
    w2t = jnp.asarray(w2.T)   # (H, C)

    # Eval mode (dropout = identity): check against pure-JAX reference.
    y_eval = jax.block_until_ready(
        feed_forward(x, w1t, b1, w2t, b2, seed=0, training=False))
    y_ref = _ref_feed_forward(x, w1t, b1, w2t, b2)
    assert y_eval.shape == (B, T, C)
    assert jnp.allclose(y_eval, y_ref, atol=1e-4, rtol=1e-4), "mismatch vs reference"

    # Training mode (dropout p=0.2 via in-kernel hash PRNG, deterministic seed).
    y_train = jax.block_until_ready(
        feed_forward(x, w1t, b1, w2t, b2, seed=1234, training=True))
    assert y_train.shape == (B, T, C)
    assert bool(jnp.all(jnp.isfinite(y_train)))
    drop_frac = float(jnp.mean((y_train == 0.0).astype(jnp.float32)))
    assert 0.05 < drop_frac < 0.45, f"unexpected dropout fraction {drop_frac}"

    print("KERNEL_OK")
</pallas_src>

<mosaic_0001>
module attributes {stable_mosaic.version = 11 : i64} {
  func.func @kernel(%arg0: i32, %arg1: memref<1xi32, #tpu.memory_space<smem>>, %arg2: memref<16x384xf32, #tpu.memory_space<vmem>>, %arg3: memref<384x1536xf32, #tpu.memory_space<vmem>>, %arg4: memref<1x1536xf32, #tpu.memory_space<vmem>>, %arg5: memref<1536x384xf32, #tpu.memory_space<vmem>>, %arg6: memref<1x384xf32, #tpu.memory_space<vmem>>, %arg7: memref<16x384xf32, #tpu.memory_space<vmem>>) attributes {dimension_semantics = [#tpu.dimension_semantics<parallel>], iteration_bounds = array<i64: 1>, scalar_prefetch = 0 : i64, scratch_operands = 0 : i64, tpu.core_type = #tpu.core_type<tc>, window_params = [{transform_indices = @transform_0, window_bounds = array<i64: 1>}, {transform_indices = @transform_1, window_bounds = array<i64: 16, 384>}, {pipeline_mode = #tpu.pipeline_mode<synchronous>, transform_indices = @transform_2, window_bounds = array<i64: 384, 1536>}, {pipeline_mode = #tpu.pipeline_mode<synchronous>, transform_indices = @transform_3, window_bounds = array<i64: 1, 1536>}, {pipeline_mode = #tpu.pipeline_mode<synchronous>, transform_indices = @transform_4, window_bounds = array<i64: 1536, 384>}, {pipeline_mode = #tpu.pipeline_mode<synchronous>, transform_indices = @transform_5, window_bounds = array<i64: 1, 384>}, {transform_indices = @transform_6, window_bounds = array<i64: 16, 384>}]} {
    %c0 = arith.constant 0 : index
    %c0_0 = arith.constant 0 : index
    %0 = vector.load %arg2[%c0, %c0_0] : memref<16x384xf32, #tpu.memory_space<vmem>>, vector<16x384xf32>
    %c0_1 = arith.constant 0 : index
    %c0_2 = arith.constant 0 : index
    %1 = vector.load %arg3[%c0_1, %c0_2] : memref<384x1536xf32, #tpu.memory_space<vmem>>, vector<384x1536xf32>
    %cst = arith.constant dense<0.000000e+00> : vector<16x1536xf32>
    %2 = tpu.matmul %0, %1, %cst {dimension_numbers = #tpu.dot_dimension_numbers<[1], [0], [0], [1], [0, 0, 1, 1], [], []>} : vector<16x384xf32>, vector<384x1536xf32>, vector<16x1536xf32> -> vector<16x1536xf32>
    %c0_3 = arith.constant 0 : index
    %c0_4 = arith.constant 0 : index
    %3 = vector.load %arg4[%c0_3, %c0_4] : memref<1x1536xf32, #tpu.memory_space<vmem>>, vector<1x1536xf32>
    %4 = vector.broadcast %3 : vector<1x1536xf32> to vector<16x1536xf32>
    %5 = arith.addf %2, %4 : vector<16x1536xf32>
    %cst_5 = arith.constant 0.000000e+00 : f32
    %6 = vector.broadcast %cst_5 : f32 to vector<16x1536xf32>
    %7 = arith.maximumf %5, %6 : vector<16x1536xf32>
    %c0_6 = arith.constant 0 : index
    %c0_7 = arith.constant 0 : index
    %8 = vector.load %arg5[%c0_6, %c0_7] : memref<1536x384xf32, #tpu.memory_space<vmem>>, vector<1536x384xf32>
    %cst_8 = arith.constant dense<0.000000e+00> : vector<16x384xf32>
    %9 = tpu.matmul %7, %8, %cst_8 {dimension_numbers = #tpu.dot_dimension_numbers<[1], [0], [0], [1], [0, 0, 1, 1], [], []>} : vector<16x1536xf32>, vector<1536x384xf32>, vector<16x384xf32> -> vector<16x384xf32>
    %c0_9 = arith.constant 0 : index
    %c0_10 = arith.constant 0 : index
    %10 = vector.load %arg6[%c0_9, %c0_10] : memref<1x384xf32, #tpu.memory_space<vmem>>, vector<1x384xf32>
    %11 = vector.broadcast %10 : vector<1x384xf32> to vector<16x384xf32>
    %12 = arith.addf %9, %11 : vector<16x384xf32>
    %c0_11 = arith.constant 0 : index
    %c0_12 = arith.constant 0 : index
    %13 = vector.load %arg7[%c0_11, %c0_12] : memref<16x384xf32, #tpu.memory_space<vmem>>, vector<16x384xf32>
    tpu.vector_store %arg7[%c0_11, %c0_12], %12 {strides = array<i32>} : memref<16x384xf32, #tpu.memory_space<vmem>>, vector<16x384xf32>,
    return
  }
  func.func @transform_0(%arg0: i32) -> i32 {
    %c0_i32 = arith.constant 0 : i32
    %c0_i32_0 = arith.constant 0 : i32
    return %c0_i32 : i32
  }
  func.func @transform_1(%arg0: i32) -> (i32, i32) {
    %c0_i32 = arith.constant 0 : i32
    %c0_i32_0 = arith.constant 0 : i32
    return %arg0, %c0_i32 : i32, i32
  }
  func.func @transform_2(%arg0: i32) -> (i32, i32) {
    %c0_i32 = arith.constant 0 : i32
    %c0_i32_0 = arith.constant 0 : i32
    %c0_i32_1 = arith.constant 0 : i32
    return %c0_i32, %c0_i32_0 : i32, i32
  }
  func.func @transform_3(%arg0: i32) -> (i32, i32) {
    %c0_i32 = arith.constant 0 : i32
    %c0_i32_0 = arith.constant 0 : i32
    %c0_i32_1 = arith.constant 0 : i32
    return %c0_i32, %c0_i32_0 : i32, i32
  }
  func.func @transform_4(%arg0: i32) -> (i32, i32) {
    %c0_i32 = arith.constant 0 : i32
    %c0_i32_0 = arith.constant 0 : i32
    %c0_i32_1 = arith.constant 0 : i32
    return %c0_i32, %c0_i32_0 : i32, i32
  }
  func.func @transform_5(%arg0: i32) -> (i32, i32) {
    %c0_i32 = arith.constant 0 : i32
    %c0_i32_0 = arith.constant 0 : i32
    %c0_i32_1 = arith.constant 0 : i32
    return %c0_i32, %c0_i32_0 : i32, i32
  }
  func.func @transform_6(%arg0: i32) -> (i32, i32) {
    %c0_i32 = arith.constant 0 : i32
    %c0_i32_0 = arith.constant 0 : i32
    return %arg0, %c0_i32 : i32, i32
  }
}

</mosaic_0001>

<llo_original>
// kernel: feed_forward.1
$region0: #{feed_forward.1}
  #allocation0 [shape = 'u32[]', space=smem, size = 0x4, offset = 0x4, fixed_abs, tag = 'smem constant byte address 0x4 - core index']
  #allocation1 [shape = 'u32[144,128]{1,0:T(1,128)}', space=vmem, size = 0x12000, scoped, tag = 'internal scratch']
  #allocation2 [shape = 's32[1]{0:T(128)S(6)}', space=smem, size = 0x200, scoped, tag = 'scoped memory for feed_forward.1']
  %s0 = inlined_call_operand.<no memory space> [shape: s32[1], index: 0, kind: input, shape index: {}]
  %s1 = inlined_call_operand.hbm [shape: f32[16,384], index: 1, kind: input, shape index: {}]
  %s2 = inlined_call_operand.hbm [shape: f32[384,1536], index: 2, kind: input, shape index: {}]
  %s3 = inlined_call_operand.hbm [shape: f32[1,1536], index: 3, kind: input, shape index: {}]
  %s4 = inlined_call_operand.hbm [shape: f32[1536,384], index: 4, kind: input, shape index: {}]
  %s5 = inlined_call_operand.hbm [shape: f32[1,384], index: 5, kind: input, shape index: {}]
  %s6 = inlined_call_operand.hbm [shape: f32[16,384], index: 6, kind: output, shape index: {}]
  %s7 = sld [smem:[#allocation0]]
  $region54: #{feed_forward.1} parent=0
    _
  %s9 = ssub.s32 1, %s7
  %s10 = scalar_select 0, %s9, %s7
  %11 = sst [smem:[#allocation2]] %s0
  $region1: #{feed_forward.1} parent=0
    #allocation3 [shape = 'u8[24576]{0}', space=vmem, size = 0x6000, scoped, tag = 'input window, operand 1, single buffered']
    #allocation4 [shape = 's32[1]{0}', space=sflag, size = 0x4, scoped, tag = 'scoped memory for feed_forward.1']
    #allocation5 [shape = 's32[1]{0}', space=sflag, size = 0x4, scoped, tag = 'scoped memory for feed_forward.1']
    #allocation6 [shape = 'u8[2359296]{0}', space=vmem, size = 0x240000, scoped, tag = 'input window, operand 2, single buffered']
    #allocation7 [shape = 's32[1]{0}', space=sflag, size = 0x4, scoped, tag = 'scoped memory for feed_forward.1']
    #allocation8 [shape = 'u8[6144]{0}', space=vmem, size = 0x1800, scoped, tag = 'input window, operand 3, single buffered']
    #allocation9 [shape = 'u8[2359296]{0}', space=vmem, size = 0x240000, scoped, tag = 'input window, operand 4, single buffered']
    #allocation10 [shape = 's32[1]{0}', space=sflag, size = 0x4, scoped, tag = 'scoped memory for feed_forward.1']
    #allocation11 [shape = 'u8[1536]{0}', space=vmem, size = 0x800, scoped, tag = 'input window, operand 5, single buffered']
    #allocation12 [shape = 'u8[24576]{0}', space=vmem, size = 0x6000, scoped, tag = 'output window, operand 0, single buffered']
    %12 = vsyncpa [#allocation4], 0
    %13 = vsyncpa [#allocation7], 0
    %14 = vsyncpa [#allocation10], 0
    %15 = vsyncpa [#allocation5], 0
    // Predicated region
    $region2: #{feed_forward.1} parent=1 // pred_check
      _
    $region3: #{feed_forward.1} parent=1 // pred_check_branch
      %17 = sbr.rel (0) target = $region5
    $region4: #{feed_forward.1} parent=1 // pred_region
      _
    $region5: #{feed_forward.1} parent=1 // pred_fallthru
      _
    // Predicated region
    $region6: #{feed_forward.1} parent=1 // pred_check
      _
    $region7: #{feed_forward.1} parent=1 // pred_check_branch
      %19 = sbr.rel (0) target = $region9
    $region8: #{feed_forward.1} parent=1 // pred_region
      %s21 = ssub.s32 768, 768
      %22 = vsyncadd [#allocation4], %s21
      %s23 = sshll.u32 [#allocation3], 4
      %s24 = int_to_ptr.vmem [resolvable:$true] %s23
      %29 = dma.hbm_to_vmem [thread:$0]  %s1, 768, %s24, [#allocation4], 384, 384, 24
    $region9: #{feed_forward.1} parent=1 // pred_fallthru
      _
    // Predicated region
    $region10: #{feed_forward.1} parent=1 // pred_check
      _
    $region11: #{feed_forward.1} parent=1 // pred_check_branch
      %31 = sbr.rel (0) target = $region13
    $region12: #{feed_forward.1} parent=1 // pred_region
      %s33 = ssub.s32 73728, 73728
      %34 = vsyncadd [#allocation7], %s33
      %s35 = sshll.u32 [#allocation6], 4
      %s36 = int_to_ptr.vmem [resolvable:$true] %s35
      %41 = dma.hbm_to_vmem [thread:$0]  %s2, 73728, %s36, [#allocation7], 1536, 1536, 96
    $region13: #{feed_forward.1} parent=1 // pred_fallthru
      _
    // Predicated region
    $region14: #{feed_forward.1} parent=1 // pred_check
      _
    $region15: #{feed_forward.1} parent=1 // pred_check_branch
      %43 = sbr.rel (0) target = $region17
    $region16: #{feed_forward.1} parent=1 // pred_region
      %s45 = ssub.s32 192, 192
      %46 = vsyncadd [#allocation7], %s45
      %s48 = sshll.u32 [#allocation8], 4
      %s49 = int_to_ptr.vmem [resolvable:$true] %s48
      %51 = dma.hbm_to_vmem [thread:$0]  %s3, 192, %s49, [#allocation7]
    $region17: #{feed_forward.1} parent=1 // pred_fallthru
      _
    // Predicated region
    $region18: #{feed_forward.1} parent=1 // pred_check
      _
    $region19: #{feed_forward.1} parent=1 // pred_check_branch
      %53 = sbr.rel (0) target = $region21
    $region20: #{feed_forward.1} parent=1 // pred_region
      %s55 = ssub.s32 73728, 73728
      %56 = vsyncadd [#allocation10], %s55
      %s57 = sshll.u32 [#allocation9], 4
      %s58 = int_to_ptr.vmem [resolvable:$true] %s57
      %63 = dma.hbm_to_vmem [thread:$0]  %s4, 73728, %s58, [#allocation10], 384, 384, 24
    $region21: #{feed_forward.1} parent=1 // pred_fallthru
      _
    // Predicated region
    $region22: #{feed_forward.1} parent=1 // pred_check
      _
    $region23: #{feed_forward.1} parent=1 // pred_check_branch
      %65 = sbr.rel (0) target = $region25
    $region24: #{feed_forward.1} parent=1 // pred_region
      %s67 = ssub.s32 48, 48
      %68 = vsyncadd [#allocation10], %s67
      %s70 = sshll.u32 [#allocation11], 4
      %s71 = int_to_ptr.vmem [resolvable:$true] %s70
      %73 = dma.hbm_to_vmem [thread:$0]  %s5, 48, %s71, [#allocation10]
    $region25: #{feed_forward.1} parent=1 // pred_fallthru
      _
    // Predicated region
    $region26: #{feed_forward.1} parent=1 // pred_check
      _
    $region27: #{feed_forward.1} parent=1 // pred_check_branch
      %75 = sbr.rel (0) target = $region29
    $region28: #{feed_forward.1} parent=1 // pred_region
      %76 = dma.done [#allocation4], 768
    $region29: #{feed_forward.1} parent=1 // pred_fallthru
      _
    // Predicated region
    $region30: #{feed_forward.1} parent=1 // pred_check
      _
    $region31: #{feed_forward.1} parent=1 // pred_check_branch
      %78 = sbr.rel (0) target = $region33
    $region32: #{feed_forward.1} parent=1 // pred_region
      %79 = dma.done [#allocation7], 73728
    $region33: #{feed_forward.1} parent=1 // pred_fallthru
      _
    // Predicated region
    $region34: #{feed_forward.1} parent=1 // pred_check
      _
    $region35: #{feed_forward.1} parent=1 // pred_check_branch
      %81 = sbr.rel (0) target = $region37
    $region36: #{feed_forward.1} parent=1 // pred_region
      %82 = dma.done [#allocation7], 192
    $region37: #{feed_forward.1} parent=1 // pred_fallthru
      _
    // Predicated region
    $region38: #{feed_forward.1} parent=1 // pred_check
      _
    $region39: #{feed_forward.1} parent=1 // pred_check_branch
      %84 = sbr.rel (0) target = $region41
    $region40: #{feed_forward.1} parent=1 // pred_region
      %85 = dma.done [#allocation10], 73728
    $region41: #{feed_forward.1} parent=1 // pred_fallthru
      _
    // Predicated region
    $region42: #{feed_forward.1} parent=1 // pred_check
      _
    $region43: #{feed_forward.1} parent=1 // pred_check_branch
      %87 = sbr.rel (0) target = $region45
    $region44: #{feed_forward.1} parent=1 // pred_region
      %88 = dma.done [#allocation10], 48
    $region45: #{feed_forward.1} parent=1 // pred_fallthru
      _
    %v89 = vld [vmem:[#allocation3] sm:$0xff]
    %v90 = vld [vmem:[#allocation3 + $0x8] sm:$0xff]
    %v91 = vld [vmem:[#allocation3 + $0x10] sm:$0xff]
    %v92 = vld [vmem:[#allocation3 + $0x18] sm:$0xff]
    %v93 = vld [vmem:[#allocation3 + $0x20] sm:$0xff]
    %v94 = vld [vmem:[#allocation3 + $0x28] sm:$0xff]
    %v95 = vld [vmem:[#allocation6] sm:$0xff]
    %v96 = vld [vmem:[#allocation6 + $0x8] sm:$0xff]
    %v97 = vld [vmem:[#allocation6 + $0x10] sm:$0xff]
    %v98 = vld [vmem:[#allocation6 + $0x18] sm:$0xff]
    %v99 = vld [vmem:[#allocation6 + $0x20] sm:$0xff]
    %v100 = vld [vmem:[#allocation6 + $0x28] sm:$0xff]
    %v101 = vld [vmem:[#allocation6 + $0x30] sm:$0xff]
    %v102 = vld [vmem:[#allocation6 + $0x38] sm:$0xff]
    %v103 = vld [vmem:[#allocation6 + $0x40] sm:$0xff]
    %v104 = vld [vmem:[#allocation6 + $0x48] sm:$0xff]
    %v105 = vld [vmem:[#allocation6 + $0x50] sm:$0xff]
    %v106 = vld [vmem:[#allocation6 + $0x58] sm:$0xff]
    %v107 = vld [vmem:[#allocation6 + $0x60] sm:$0xff]
    %v108 = vld [vmem:[#allocation6 + $0x68] sm:$0xff]
    %v109 = vld [vmem:[#allocation6 + $0x70] sm:$0xff]
    %v110 = vld [vmem:[#allocation6 + $0x78] sm:$0xff]
    %v111 = vld [vmem:[#allocation6 + $0x80] sm:$0xff]
    %v112 = vld [vmem:[#allocation6 + $0x88] sm:$0xff]
    %v113 = vld [vmem:[#allocation6 + $0x90] sm:$0xff]
    %v114 = vld [vmem:[#allocation6 + $0x98] sm:$0xff]
    %v115 = vld [vmem:[#allocation6 + $0xa0] sm:$0xff]
    %v116 = vld [vmem:[#allocation6 + $0xa8] sm:$0xff]
    %v117 = vld [vmem:[#allocation6 + $0xb0] sm:$0xff]
    %v118 = vld [vmem:[#allocation6 + $0xb8] sm:$0xff]
    %v119 = vld [vmem:[#allocation6 + $0xc0] sm:$0xff]
    %v120 = vld [vmem:[#allocation6 + $0xc8] sm:$0xff]
    %v121 = vld [vmem:[#allocation6 + $0xd0] sm:$0xff]
    %v122 = vld [vmem:[#allocation6 + $0xd8] sm:$0xff]
    %v123 = vld [vmem:[#allocation6 + $0xe0] sm:$0xff]
    %v124 = vld [vmem:[#allocation6 + $0xe8] sm:$0xff]
    %v125 = vld [vmem:[#allocation6 + $0xf0] sm:$0xff]
    %v126 = vld [vmem:[#allocation6 + $0xf8] sm:$0xff]
    %v127 = vld [vmem:[#allocation6 + $0x100] sm:$0xff]
    %v128 = vld [vmem:[#allocation6 + $0x108] sm:$0xff]
    %v129 = vld [vmem:[#allocation6 + $0x110] sm:$0xff]
    %v130 = vld [vmem:[#allocation6 + $0x118] sm:$0xff]
    %v131 = vld [vmem:[#allocation6 + $0x120] sm:$0xff]
    %v132 = vld [vmem:[#allocation6 + $0x128] sm:$0xff]
    %v133 = vld [vmem:[#allocation6 + $0x130] sm:$0xff]
    %v134 = vld [vmem:[#allocation6 + $0x138] sm:$0xff]
    %v135 = vld [vmem:[#allocation6 + $0x140] sm:$0xff]
    %v136 = vld [vmem:[#allocation6 + $0x148] sm:$0xff]
    %v137 = vld [vmem:[#allocation6 + $0x150] sm:$0xff]
    %v138 = vld [vmem:[#allocation6 + $0x158] sm:$0xff]
    %v139 = vld [vmem:[#allocation6 + $0x160] sm:$0xff]
    %v140 = vld [vmem:[#allocation6 + $0x168] sm:$0xff]
    %v141 = vld [vmem:[#allocation6 + $0x170] sm:$0xff]
    %v142 = vld [vmem:[#allocation6 + $0x178] sm:$0xff]
    %v143 = vld [vmem:[#allocation6 + $0x180] sm:$0xff]
    %v144 = vld [vmem:[#allocation6 + $0x188] sm:$0xff]
    %v145 = vld [vmem:[#allocation6 + $0x190] sm:$0xff]
    %v146 = vld [vmem:[#allocation6 + $0x198] sm:$0xff]
    %v147 = vld [vmem:[#allocation6 + $0x1a0] sm:$0xff]
    %v148 = vld [vmem:[#allocation6 + $0x1a8] sm:$0xff]
    %v149 = vld [vmem:[#allocation6 + $0x1b0] sm:$0xff]
    %v150 = vld [vmem:[#allocation6 + $0x1b8] sm:$0xff]
    %v151 = vld [vmem:[#allocation6 + $0x1c0] sm:$0xff]
    %v152 = vld [vmem:[#allocation6 + $0x1c8] sm:$0xff]
    %v153 = vld [vmem:[#allocation6 + $0x1d0] sm:$0xff]
    %v154 = vld [vmem:[#allocation6 + $0x1d8] sm:$0xff]
    %v155 = vld [vmem:[#allocation6 + $0x1e0] sm:$0xff]
    %v156 = vld [vmem:[#allocation6 + $0x1e8] sm:$0xff]
    %v157 = vld [vmem:[#allocation6 + $0x1f0] sm:$0xff]
    %v158 = vld [vmem:[#allocation6 + $0x1f8] sm:$0xff]
    %v159 = vld [vmem:[#allocation6 + $0x200] sm:$0xff]
    %v160 = vld [vmem:[#allocation6 + $0x208] sm:$0xff]
    %v161 = vld [vmem:[#allocation6 + $0x210] sm:$0xff]
    %v162 = vld [vmem:[#allocation6 + $0x218] sm:$0xff]
    %v163 = vld [vmem:[#allocation6 + $0x220] sm:$0xff]
    %v164 = vld [vmem:[#allocation6 + $0x228] sm:$0xff]
    %v165 = vld [vmem:[#allocation6 + $0x230] sm:$0xff]
    %v166 = vld [vmem:[#allocation6 + $0x238] sm:$0xff]
    %v167 = vld [vmem:[#allocation6 + $0x240] sm:$0xff]
    %v168 = vld [vmem:[#allocation6 + $0x248] sm:$0xff]
    %v169 = vld [vmem:[#allocation6 + $0x250] sm:$0xff]
    %v170 = vld [vmem:[#allocation6 + $0x258] sm:$0xff]
    %v171 = vld [vmem:[#allocation6 + $0x260] sm:$0xff]
    %v172 = vld [vmem:[#allocation6 + $0x268] sm:$0xff]
    %v173 = vld [vmem:[#allocation6 + $0x270] sm:$0xff]
    %v174 = vld [vmem:[#allocation6 + $0x278] sm:$0xff]
    %v175 = vld [vmem:[#allocation6 + $0x280] sm:$0xff]
    %v176 = vld [vmem:[#allocation6 + $0x288] sm:$0xff]
    %v177 = vld [vmem:[#allocation6 + $0x290] sm:$0xff]
    %v178 = vld [vmem:[#allocation6 + $0x298] sm:$0xff]
    %v179 = vld [vmem:[#allocation6 + $0x2a0] sm:$0xff]
    %v180 = vld [vmem:[#allocation6 + $0x2a8] sm:$0xff]
    %v181 = vld [vmem:[#allocation6 + $0x2b0] sm:$0xff]
    %v182 = vld [vmem:[#allocation6 + $0x2b8] sm:$0xff]
    %v183 = vld [vmem:[#allocation6 + $0x2c0] sm:$0xff]
    %v184 = vld [vmem:[#allocation6 + $0x2c8] sm:$0xff]
    %v185 = vld [vmem:[#allocation6 + $0x2d0] sm:$0xff]
    %v186 = vld [vmem:[#allocation6 + $0x2d8] sm:$0xff]
    %v187 = vld [vmem:[#allocation6 + $0x2e0] sm:$0xff]
    %v188 = vld [vmem:[#allocation6 + $0x2e8] sm:$0xff]
    %v189 = vld [vmem:[#allocation6 + $0x2f0] sm:$0xff]
    %v190 = vld [vmem:[#allocation6 + $0x2f8] sm:$0xff]
    %v191 = vld [vmem:[#allocation6 + $0x300] sm:$0xff]
    %v192 = vld [vmem:[#allocation6 + $0x308] sm:$0xff]
    %v193 = vld [vmem:[#allocation6 + $0x310] sm:$0xff]
    %v194 = vld [vmem:[#allocation6 + $0x318] sm:$0xff]
    %v195 = vld [vmem:[#allocation6 + $0x320] sm:$0xff]
    %v196 = vld [vmem:[#allocation6 + $0x328] sm:$0xff]
    %v197 = vld [vmem:[#allocation6 + $0x330] sm:$0xff]
    %v198 = vld [vmem:[#allocation6 + $0x338] sm:$0xff]
    %v199 = vld [vmem:[#allocation6 + $0x340] sm:$0xff]
    %v200 = vld [vmem:[#allocation6 + $0x348] sm:$0xff]
    %v201 = vld [vmem:[#allocation6 + $0x350] sm:$0xff]
    %v202 = vld [vmem:[#allocation6 + $0x358] sm:$0xff]
    %v203 = vld [vmem:[#allocation6 + $0x360] sm:$0xff]
    %v204 = vld [vmem:[#allocation6 + $0x368] sm:$0xff]
    %v205 = vld [vmem:[#allocation6 + $0x370] sm:$0xff]
    %v206 = vld [vmem:[#allocation6 + $0x378] sm:$0xff]
    %v207 = vld [vmem:[#allocation6 + $0x380] sm:$0xff]
    %v208 = vld [vmem:[#allocation6 + $0x388] sm:$0xff]
    %v209 = vld [vmem:[#allocation6 + $0x390] sm:$0xff]
    %v210 = vld [vmem:[#allocation6 + $0x398] sm:$0xff]
    %v211 = vld [vmem:[#allocation6 + $0x3a0] sm:$0xff]
    %v212 = vld [vmem:[#allocation6 + $0x3a8] sm:$0xff]
    %v213 = vld [vmem:[#allocation6 + $0x3b0] sm:$0xff]
    %v214 = vld [vmem:[#allocation6 + $0x3b8] sm:$0xff]
    %v215 = vld [vmem:[#allocation6 + $0x3c0] sm:$0xff]
    %v216 = vld [vmem:[#allocation6 + $0x3c8] sm:$0xff]
    %v217 = vld [vmem:[#allocation6 + $0x3d0] sm:$0xff]
    %v218 = vld [vmem:[#allocation6 + $0x3d8] sm:$0xff]
    %v219 = vld [vmem:[#allocation6 + $0x3e0] sm:$0xff]
    %v220 = vld [vmem:[#allocation6 + $0x3e8] sm:$0xff]
    %v221 = vld [vmem:[#allocation6 + $0x3f0] sm:$0xff]
    %v222 = vld [vmem:[#allocation6 + $0x3f8] sm:$0xff]
    %v223 = vld [vmem:[#allocation6 + $0x400] sm:$0xff]
    %v224 = vld [vmem:[#allocation6 + $0x408] sm:$0xff]
    %v225 = vld [vmem:[#allocation6 + $0x410] sm:$0xff]
    %v226 = vld [vmem:[#allocation6 + $0x418] sm:$0xff]
    %v227 = vld [vmem:[#allocation6 + $0x420] sm:$0xff]
    %v228 = vld [vmem:[#allocation6 + $0x428] sm:$0xff]
    %v229 = vld [vmem:[#allocation6 + $0x430] sm:$0xff]
    %v230 = vld [vmem:[#allocation6 + $0x438] sm:$0xff]
    %v231 = vld [vmem:[#allocation6 + $0x440] sm:$0xff]
    %v232 = vld [vmem:[#allocation6 + $0x448] sm:$0xff]
    %v233 = vld [vmem:[#allocation6 + $0x450] sm:$0xff]
    %v234 = vld [vmem:[#allocation6 + $0x458] sm:$0xff]
    %v235 = vld [vmem:[#allocation6 + $0x460] sm:$0xff]
    %v236 = vld [vmem:[#allocation6 + $0x468] sm:$0xff]
    %v237 = vld [vmem:[#allocation6 + $0x470] sm:$0xff]
    %v238 = vld [vmem:[#allocation6 + $0x478] sm:$0xff]
    %v239 = vld [vmem:[#allocation6 + $0x480] sm:$0xff]
    %v240 = vld [vmem:[#allocation6 + $0x488] sm:$0xff]
    %v241 = vld [vmem:[#allocation6 + $0x490] sm:$0xff]
    %v242 = vld [vmem:[#allocation6 + $0x498] sm:$0xff]
    %v243 = vld [vmem:[#allocation6 + $0x4a0] sm:$0xff]
    %v244 = vld [vmem:[#allocation6 + $0x4a8] sm:$0xff]
    %v245 = vld [vmem:[#allocation6 + $0x4b0] sm:$0xff]
    %v246 = vld [vmem:[#allocation6 + $0x4b8] sm:$0xff]
    %v247 = vld [vmem:[#allocation6 + $0x4c0] sm:$0xff]
    %v248 = vld [vmem:[#allocation6 + $0x4c8] sm:$0xff]
    %v249 = vld [vmem:[#allocation6 + $0x4d0] sm:$0xff]
    %v250 = vld [vmem:[#allocation6 + $0x4d8] sm:$0xff]
    %v251 = vld [vmem:[#allocation6 + $0x4e0] sm:$0xff]
    %v252 = vld [vmem:[#allocation6 + $0x4e8] sm:$0xff]
    %v253 = vld [vmem:[#allocation6 + $0x4f0] sm:$0xff]
    %v254 = vld [vmem:[#allocation6 + $0x4f8] sm:$0xff]
    %v255 = vld [vmem:[#allocation6 + $0x500] sm:$0xff]
    %v256 = vld [vmem:[#allocation6 + $0x508] sm:$0xff]
    %v257 = vld [vmem:[#allocation6 + $0x510] sm:$0xff]
    %v258 = vld [vmem:[#allocation6 + $0x518] sm:$0xff]
    %v259 = vld [vmem:[#allocation6 + $0x520] sm:$0xff]
    %v260 = vld [vmem:[#allocation6 + $0x528] sm:$0xff]
    %v261 = vld [vmem:[#allocation6 + $0x530] sm:$0xff]
    %v262 = vld [vmem:[#allocation6 + $0x538] sm:$0xff]
    %v263 = vld [vmem:[#allocation6 + $0x540] sm:$0xff]
    %v264 = vld [vmem:[#allocation6 + $0x548] sm:$0xff]
    %v265 = vld [vmem:[#allocation6 + $0x550] sm:$0xff]
    %v266 = vld [vmem:[#allocation6 + $0x558] sm:$0xff]
    %v267 = vld [vmem:[#allocation6 + $0x560] sm:$0xff]
    %v268 = vld [vmem:[#allocation6 + $0x568] sm:$0xff]
    %v269 = vld [vmem:[#allocation6 + $0x570] sm:$0xff]
    %v270 = vld [vmem:[#allocation6 + $0x578] sm:$0xff]
    %v271 = vld [vmem:[#allocation6 + $0x580] sm:$0xff]
    %v272 = vld [vmem:[#allocation6 + $0x588] sm:$0xff]
    %v273 = vld [vmem:[#allocation6 + $0x590] sm:$0xff]
    %v274 = vld [vmem:[#allocation6 + $0x598] sm:$0xff]
    %v275 = vld [vmem:[#allocation6 + $0x5a0] sm:$0xff]
    %v276 = vld [vmem:[#allocation6 + $0x5a8] sm:$0xff]
    %v277 = vld [vmem:[#allocation6 + $0x5b0] sm:$0xff]
    %v278 = vld [vmem:[#allocation6 + $0x5b8] sm:$0xff]
    %v279 = vld [vmem:[#allocation6 + $0x5c0] sm:$0xff]
    %v280 = vld [vmem:[#allocation6 + $0x5c8] sm:$0xff]
    %v281 = vld [vmem:[#allocation6 + $0x5d0] sm:$0xff]
    %v282 = vld [vmem:[#allocation6 + $0x5d8] sm:$0xff]
    %v283 = vld [vmem:[#allocation6 + $0x5e0] sm:$0xff]
    %v284 = vld [vmem:[#allocation6 + $0x5e8] sm:$0xff]
    %v285 = vld [vmem:[#allocation6 + $0x5f0] sm:$0xff]
    %v286 = vld [vmem:[#allocation6 + $0x5f8] sm:$0xff]
    %v287 = vld [vmem:[#allocation6 + $0x600] sm:$0xff]
    %v288 = vld [vmem:[#allocation6 + $0x608] sm:$0xff]
    %v289 = vld [vmem:[#allocation6 + $0x610] sm:$0xff]
    %v290 = vld [vmem:[#allocation6 + $0x618] sm:$0xff]
    %v291 = vld [vmem:[#allocation6 + $0x620] sm:$0xff]
    %v292 = vld [vmem:[#allocation6 + $0x628] sm:$0xff]
    %v293 = vld [vmem:[#allocation6 + $0x630] sm:$0xff]
    %v294 = vld [vmem:[#allocation6 + $0x638] sm:$0xff]
    %v295 = vld [vmem:[#allocation6 + $0x640] sm:$0xff]
    %v296 = vld [vmem:[#allocation6 + $0x648] sm:$0xff]
    %v297 = vld [vmem:[#allocation6 + $0x650] sm:$0xff]
    %v298 = vld [vmem:[#allocation6 + $0x658] sm:$0xff]
    %v299 = vld [vmem:[#allocation6 + $0x660] sm:$0xff]
    %v300 = vld [vmem:[#allocation6 + $0x668] sm:$0xff]
    %v301 = vld [vmem:[#allocation6 + $0x670] sm:$0xff]
    %v302 = vld [vmem:[#allocation6 + $0x678] sm:$0xff]
    %v303 = vld [vmem:[#allocation6 + $0x680] sm:$0xff]
    %v304 = vld [vmem:[#allocation6 + $0x688] sm:$0xff]
    %v305 = vld [vmem:[#allocation6 + $0x690] sm:$0xff]
    %v306 = vld [vmem:[#allocation6 + $0x698] sm:$0xff]
    %v307 = vld [vmem:[#allocation6 + $0x6a0] sm:$0xff]
    %v308 = vld [vmem:[#allocation6 + $0x6a8] sm:$0xff]
    %v309 = vld [vmem:[#allocation6 + $0x6b0] sm:$0xff]
    %v310 = vld [vmem:[#allocation6 + $0x6b8] sm:$0xff]
    %v311 = vld [vmem:[#allocation6 + $0x6c0] sm:$0xff]
    %v312 = vld [vmem:[#allocation6 + $0x6c8] sm:$0xff]
    %v313 = vld [vmem:[#allocation6 + $0x6d0] sm:$0xff]
    %v314 = vld [vmem:[#allocation6 + $0x6d8] sm:$0xff]
    %v315 = vld [vmem:[#allocation6 + $0x6e0] sm:$0xff]
    %v316 = vld [vmem:[#allocation6 + $0x6e8] sm:$0xff]
    %v317 = vld [vmem:[#allocation6 + $0x6f0] sm:$0xff]
    %v318 = vld [vmem:[#allocation6 + $0x6f8] sm:$0xff]
    %v319 = vld [vmem:[#allocation6 + $0x700] sm:$0xff]
    %v320 = vld [vmem:[#allocation6 + $0x708] sm:$0xff]
    %v321 = vld [vmem:[#allocation6 + $0x710] sm:$0xff]
    %v322 = vld [vmem:[#allocation6 + $0x718] sm:$0xff]
    %v323 = vld [vmem:[#allocation6 + $0x720] sm:$0xff]
    %v324 = vld [vmem:[#allocation6 + $0x728] sm:$0xff]
    %v325 = vld [vmem:[#allocation6 + $0x730] sm:$0xff]
    %v326 = vld [vmem:[#allocation6 + $0x738] sm:$0xff]
    %v327 = vld [vmem:[#allocation6 + $0x740] sm:$0xff]
    %v328 = vld [vmem:[#allocation6 + $0x748] sm:$0xff]
    %v329 = vld [vmem:[#allocation6 + $0x750] sm:$0xff]
    %v330 = vld [vmem:[#allocation6 + $0x758] sm:$0xff]
    %v331 = vld [vmem:[#allocation6 + $0x760] sm:$0xff]
    %v332 = vld [vmem:[#allocation6 + $0x768] sm:$0xff]
    %v333 = vld [vmem:[#allocation6 + $0x770] sm:$0xff]
    %v334 = vld [vmem:[#allocation6 + $0x778] sm:$0xff]
    %v335 = vld [vmem:[#allocation6 + $0x780] sm:$0xff]
    %v336 = vld [vmem:[#allocation6 + $0x788] sm:$0xff]
    %v337 = vld [vmem:[#allocation6 + $0x790] sm:$0xff]
    %v338 = vld [vmem:[#allocation6 + $0x798] sm:$0xff]
    %v339 = vld [vmem:[#allocation6 + $0x7a0] sm:$0xff]
    %v340 = vld [vmem:[#allocation6 + $0x7a8] sm:$0xff]
    %v341 = vld [vmem:[#allocation6 + $0x7b0] sm:$0xff]
    %v342 = vld [vmem:[#allocation6 + $0x7b8] sm:$0xff]
    %v343 = vld [vmem:[#allocation6 + $0x7c0] sm:$0xff]
    %v344 = vld [vmem:[#allocation6 + $0x7c8] sm:$0xff]
    %v345 = vld [vmem:[#allocation6 + $0x7d0] sm:$0xff]
    %v346 = vld [vmem:[#allocation6 + $0x7d8] sm:$0xff]
    %v347 = vld [vmem:[#allocation6 + $0x7e0] sm:$0xff]
    %v348 = vld [vmem:[#allocation6 + $0x7e8] sm:$0xff]
    %v349 = vld [vmem:[#allocation6 + $0x7f0] sm:$0xff]
    %v350 = vld [vmem:[#allocation6 + $0x7f8] sm:$0xff]
    %v351 = vld [vmem:[#allocation6 + $0x800] sm:$0xff]
    %v352 = vld [vmem:[#allocation6 + $0x808] sm:$0xff]
    %v353 = vld [vmem:[#allocation6 + $0x810] sm:$0xff]
    %v354 = vld [vmem:[#allocation6 + $0x818] sm:$0xff]
    %v355 = vld [vmem:[#allocation6 + $0x820] sm:$0xff]
    %v356 = vld [vmem:[#allocation6 + $0x828] sm:$0xff]
    %v357 = vld [vmem:[#allocation6 + $0x830] sm:$0xff]
    %v358 = vld [vmem:[#allocation6 + $0x838] sm:$0xff]
    %v359 = vld [vmem:[#allocation6 + $0x840] sm:$0xff]
    %v360 = vld [vmem:[#allocation6 + $0x848] sm:$0xff]
    %v361 = vld [vmem:[#allocation6 + $0x850] sm:$0xff]
    %v362 = vld [vmem:[#allocation6 + $0x858] sm:$0xff]
    %v363 = vld [vmem:[#allocation6 + $0x860] sm:$0xff]
    %v364 = vld [vmem:[#allocation6 + $0x868] sm:$0xff]
    %v365 = vld [vmem:[#allocation6 + $0x870] sm:$0xff]
    %v366 = vld [vmem:[#allocation6 + $0x878] sm:$0xff]
    %v367 = vld [vmem:[#allocation6 + $0x880] sm:$0xff]
    %v368 = vld [vmem:[#allocation6 + $0x888] sm:$0xff]
    %v369 = vld [vmem:[#allocation6 + $0x890] sm:$0xff]
    %v370 = vld [vmem:[#allocation6 + $0x898] sm:$0xff]
    %v371 = vld [vmem:[#allocation6 + $0x8a0] sm:$0xff]
    %v372 = vld [vmem:[#allocation6 + $0x8a8] sm:$0xff]
    %v373 = vld [vmem:[#allocation6 + $0x8b0] sm:$0xff]
    %v374 = vld [vmem:[#allocation6 + $0x8b8] sm:$0xff]
    %v375 = vld [vmem:[#allocation6 + $0x8c0] sm:$0xff]
    %v376 = vld [vmem:[#allocation6 + $0x8c8] sm:$0xff]
    %v377 = vld [vmem:[#allocation6 + $0x8d0] sm:$0xff]
    %v378 = vld [vmem:[#allocation6 + $0x8d8] sm:$0xff]
    %v379 = vld [vmem:[#allocation6 + $0x8e0] sm:$0xff]
    %v380 = vld [vmem:[#allocation6 + $0x8e8] sm:$0xff]
    %v381 = vld [vmem:[#allocation6 + $0x8f0] sm:$0xff]
    %v382 = vld [vmem:[#allocation6 + $0x8f8] sm:$0xff]
    %v383 = vld [vmem:[#allocation6 + $0x900] sm:$0xff]
    %v384 = vld [vmem:[#allocation6 + $0x908] sm:$0xff]
    %v385 = vld [vmem:[#allocation6 + $0x910] sm:$0xff]
    %v386 = vld [vmem:[#allocation6 + $0x918] sm:$0xff]
    %v387 = vld [vmem:[#allocation6 + $0x920] sm:$0xff]
    %v388 = vld [vmem:[#allocation6 + $0x928] sm:$0xff]
    %v389 = vld [vmem:[#allocation6 + $0x930] sm:$0xff]
    %v390 = vld [vmem:[#allocation6 + $0x938] sm:$0xff]
    %v391 = vld [vmem:[#allocation6 + $0x940] sm:$0xff]
    %v392 = vld [vmem:[#allocation6 + $0x948] sm:$0xff]
    %v393 = vld [vmem:[#allocation6 + $0x950] sm:$0xff]
    %v394 = vld [vmem:[#allocation6 + $0x958] sm:$0xff]
    %v395 = vld [vmem:[#allocation6 + $0x960] sm:$0xff]
    %v396 = vld [vmem:[#allocation6 + $0x968] sm:$0xff]
    %v397 = vld [vmem:[#allocation6 + $0x970] sm:$0xff]
    %v398 = vld [vmem:[#allocation6 + $0x978] sm:$0xff]
    %v399 = vld [vmem:[#allocation6 + $0x980] sm:$0xff]
    %v400 = vld [vmem:[#allocation6 + $0x988] sm:$0xff]
    %v401 = vld [vmem:[#allocation6 + $0x990] sm:$0xff]
    %v402 = vld [vmem:[#allocation6 + $0x998] sm:$0xff]
    %v403 = vld [vmem:[#allocation6 + $0x9a0] sm:$0xff]
    %v404 = vld [vmem:[#allocation6 + $0x9a8] sm:$0xff]
    %v405 = vld [vmem:[#allocation6 + $0x9b0] sm:$0xff]
    %v406 = vld [vmem:[#allocation6 + $0x9b8] sm:$0xff]
    %v407 = vld [vmem:[#allocation6 + $0x9c0] sm:$0xff]
    %v408 = vld [vmem:[#allocation6 + $0x9c8] sm:$0xff]
    %v409 = vld [vmem:[#allocation6 + $0x9d0] sm:$0xff]
    %v410 = vld [vmem:[#allocation6 + $0x9d8] sm:$0xff]
    %v411 = vld [vmem:[#allocation6 + $0x9e0] sm:$0xff]
    %v412 = vld [vmem:[#allocation6 + $0x9e8] sm:$0xff]
    %v413 = vld [vmem:[#allocation6 + $0x9f0] sm:$0xff]
    %v414 = vld [vmem:[#allocation6 + $0x9f8] sm:$0xff]
    %v415 = vld [vmem:[#allocation6 + $0xa00] sm:$0xff]
    %v416 = vld [vmem:[#allocation6 + $0xa08] sm:$0xff]
    %v417 = vld [vmem:[#allocation6 + $0xa10] sm:$0xff]
    %v418 = vld [vmem:[#allocation6 + $0xa18] sm:$0xff]
    %v419 = vld [vmem:[#allocation6 + $0xa20] sm:$0xff]
    %v420 = vld [vmem:[#allocation6 + $0xa28] sm:$0xff]
    %v421 = vld [vmem:[#allocation6 + $0xa30] sm:$0xff]
    %v422 = vld [vmem:[#allocation6 + $0xa38] sm:$0xff]
    %v423 = vld [vmem:[#allocation6 + $0xa40] sm:$0xff]
    %v424 = vld [vmem:[#allocation6 + $0xa48] sm:$0xff]
    %v425 = vld [vmem:[#allocation6 + $0xa50] sm:$0xff]
    %v426 = vld [vmem:[#allocation6 + $0xa58] sm:$0xff]
    %v427 = vld [vmem:[#allocation6 + $0xa60] sm:$0xff]
    %v428 = vld [vmem:[#allocation6 + $0xa68] sm:$0xff]
    %v429 = vld [vmem:[#allocation6 + $0xa70] sm:$0xff]
    %v430 = vld [vmem:[#allocation6 + $0xa78] sm:$0xff]
    %v431 = vld [vmem:[#allocation6 + $0xa80] sm:$0xff]
    %v432 = vld [vmem:[#allocation6 + $0xa88] sm:$0xff]
    %v433 = vld [vmem:[#allocation6 + $0xa90] sm:$0xff]
    %v434 = vld [vmem:[#allocation6 + $0xa98] sm:$0xff]
    %v435 = vld [vmem:[#allocation6 + $0xaa0] sm:$0xff]
    %v436 = vld [vmem:[#allocation6 + $0xaa8] sm:$0xff]
    %v437 = vld [vmem:[#allocation6 + $0xab0] sm:$0xff]
    %v438 = vld [vmem:[#allocation6 + $0xab8] sm:$0xff]
    %v439 = vld [vmem:[#allocation6 + $0xac0] sm:$0xff]
    %v440 = vld [vmem:[#allocation6 + $0xac8] sm:$0xff]
    %v441 = vld [vmem:[#allocation6 + $0xad0] sm:$0xff]
    %v442 = vld [vmem:[#allocation6 + $0xad8] sm:$0xff]
    %v443 = vld [vmem:[#allocation6 + $0xae0] sm:$0xff]
    %v444 = vld [vmem:[#allocation6 + $0xae8] sm:$0xff]
    %v445 = vld [vmem:[#allocation6 + $0xaf0] sm:$0xff]
    %v446 = vld [vmem:[#allocation6 + $0xaf8] sm:$0xff]
    %v447 = vld [vmem:[#allocation6 + $0xb00] sm:$0xff]
    %v448 = vld [vmem:[#allocation6 + $0xb08] sm:$0xff]
    %v449 = vld [vmem:[#allocation6 + $0xb10] sm:$0xff]
    %v450 = vld [vmem:[#allocation6 + $0xb18] sm:$0xff]
    %v451 = vld [vmem:[#allocation6 + $0xb20] sm:$0xff]
    %v452 = vld [vmem:[#allocation6 + $0xb28] sm:$0xff]
    %v453 = vld [vmem:[#allocation6 + $0xb30] sm:$0xff]
    %v454 = vld [vmem:[#allocation6 + $0xb38] sm:$0xff]
    %v455 = vld [vmem:[#allocation6 + $0xb40] sm:$0xff]
    %v456 = vld [vmem:[#allocation6 + $0xb48] sm:$0xff]
    %v457 = vld [vmem:[#allocation6 + $0xb50] sm:$0xff]
    %v458 = vld [vmem:[#allocation6 + $0xb58] sm:$0xff]
    %v459 = vld [vmem:[#allocation6 + $0xb60] sm:$0xff]
    %v460 = vld [vmem:[#allocation6 + $0xb68] sm:$0xff]
    %v461 = vld [vmem:[#allocation6 + $0xb70] sm:$0xff]
    %v462 = vld [vmem:[#allocation6 + $0xb78] sm:$0xff]
    %v463 = vld [vmem:[#allocation6 + $0xb80] sm:$0xff]
    %v464 = vld [vmem:[#allocation6 + $0xb88] sm:$0xff]
    %v465 = vld [vmem:[#allocation6 + $0xb90] sm:$0xff]
    %v466 = vld [vmem:[#allocation6 + $0xb98] sm:$0xff]
    %v467 = vld [vmem:[#allocation6 + $0xba0] sm:$0xff]
    %v468 = vld [vmem:[#allocation6 + $0xba8] sm:$0xff]
    %v469 = vld [vmem:[#allocation6 + $0xbb0] sm:$0xff]
    %v470 = vld [vmem:[#allocation6 + $0xbb8] sm:$0xff]
    %v471 = vld [vmem:[#allocation6 + $0xbc0] sm:$0xff]
    %v472 = vld [vmem:[#allocation6 + $0xbc8] sm:$0xff]
    %v473 = vld [vmem:[#allocation6 + $0xbd0] sm:$0xff]
    %v474 = vld [vmem:[#allocation6 + $0xbd8] sm:$0xff]
    %v475 = vld [vmem:[#allocation6 + $0xbe0] sm:$0xff]
    %v476 = vld [vmem:[#allocation6 + $0xbe8] sm:$0xff]
    %v477 = vld [vmem:[#allocation6 + $0xbf0] sm:$0xff]
    %v478 = vld [vmem:[#allocation6 + $0xbf8] sm:$0xff]
    %v479 = vld [vmem:[#allocation6 + $0xc00] sm:$0xff]
    %v480 = vld [vmem:[#allocation6 + $0xc08] sm:$0xff]
    %v481 = vld [vmem:[#allocation6 + $0xc10] sm:$0xff]
    %v482 = vld [vmem:[#allocation6 + $0xc18] sm:$0xff]
    %v483 = vld [vmem:[#allocation6 + $0xc20] sm:$0xff]
    %v484 = vld [vmem:[#allocation6 + $0xc28] sm:$0xff]
    %v485 = vld [vmem:[#allocation6 + $0xc30] sm:$0xff]
    %v486 = vld [vmem:[#allocation6 + $0xc38] sm:$0xff]
    %v487 = vld [vmem:[#allocation6 + $0xc40] sm:$0xff]
    %v488 = vld [vmem:[#allocation6 + $0xc48] sm:$0xff]
    %v489 = vld [vmem:[#allocation6 + $0xc50] sm:$0xff]
    %v490 = vld [vmem:[#allocation6 + $0xc58] sm:$0xff]
    %v491 = vld [vmem:[#allocation6 + $0xc60] sm:$0xff]
    %v492 = vld [vmem:[#allocation6 + $0xc68] sm:$0xff]
    %v493 = vld [vmem:[#allocation6 + $0xc70] sm:$0xff]
    %v494 = vld [vmem:[#allocation6 + $0xc78] sm:$0xff]
    %v495 = vld [vmem:[#allocation6 + $0xc80] sm:$0xff]
    %v496 = vld [vmem:[#allocation6 + $0xc88] sm:$0xff]
    %v497 = vld [vmem:[#allocation6 + $0xc90] sm:$0xff]
    %v498 = vld [vmem:[#allocation6 + $0xc98] sm:$0xff]
    %v499 = vld [vmem:[#allocation6 + $0xca0] sm:$0xff]
    %v500 = vld [vmem:[#allocation6 + $0xca8] sm:$0xff]
    %v501 = vld [vmem:[#allocation6 + $0xcb0] sm:$0xff]
    %v502 = vld [vmem:[#allocation6 + $0xcb8] sm:$0xff]
    %v503 = vld [vmem:[#allocation6 + $0xcc0] sm:$0xff]
    %v504 = vld [vmem:[#allocation6 + $0xcc8] sm:$0xff]
    %v505 = vld [vmem:[#allocation6 + $0xcd0] sm:$0xff]
    %v506 = vld [vmem:[#allocation6 + $0xcd8] sm:$0xff]
    %v507 = vld [vmem:[#allocation6 + $0xce0] sm:$0xff]
    %v508 = vld [vmem:[#allocation6 + $0xce8] sm:$0xff]
    %v509 = vld [vmem:[#allocation6 + $0xcf0] sm:$0xff]
    %v510 = vld [vmem:[#allocation6 + $0xcf8] sm:$0xff]
    %v511 = vld [vmem:[#allocation6 + $0xd00] sm:$0xff]
    %v512 = vld [vmem:[#allocation6 + $0xd08] sm:$0xff]
    %v513 = vld [vmem:[#allocation6 + $0xd10] sm:$0xff]
    %v514 = vld [vmem:[#allocation6 + $0xd18] sm:$0xff]
    %v515 = vld [vmem:[#allocation6 + $0xd20] sm:$0xff]
    %v516 = vld [vmem:[#allocation6 + $0xd28] sm:$0xff]
    %v517 = vld [vmem:[#allocation6 + $0xd30] sm:$0xff]
    %v518 = vld [vmem:[#allocation6 + $0xd38] sm:$0xff]
    %v519 = vld [vmem:[#allocation6 + $0xd40] sm:$0xff]
    %v520 = vld [vmem:[#allocation6 + $0xd48] sm:$0xff]
    %v521 = vld [vmem:[#allocation6 + $0xd50] sm:$0xff]
    %v522 = vld [vmem:[#allocation6 + $0xd58] sm:$0xff]
    %v523 = vld [vmem:[#allocation6 + $0xd60] sm:$0xff]
    %v524 = vld [vmem:[#allocation6 + $0xd68] sm:$0xff]
    %v525 = vld [vmem:[#allocation6 + $0xd70] sm:$0xff]
    %v526 = vld [vmem:[#allocation6 + $0xd78] sm:$0xff]
    %v527 = vld [vmem:[#allocation6 + $0xd80] sm:$0xff]
    %v528 = vld [vmem:[#allocation6 + $0xd88] sm:$0xff]
    %v529 = vld [vmem:[#allocation6 + $0xd90] sm:$0xff]
    %v530 = vld [vmem:[#allocation6 + $0xd98] sm:$0xff]
    %v531 = vld [vmem:[#allocation6 + $0xda0] sm:$0xff]
    %v532 = vld [vmem:[#allocation6 + $0xda8] sm:$0xff]
    %v533 = vld [vmem:[#allocation6 + $0xdb0] sm:$0xff]
    %v534 = vld [vmem:[#allocation6 + $0xdb8] sm:$0xff]
    %v535 = vld [vmem:[#allocation6 + $0xdc0] sm:$0xff]
    %v536 = vld [vmem:[#allocation6 + $0xdc8] sm:$0xff]
    %v537 = vld [vmem:[#allocation6 + $0xdd0] sm:$0xff]
    %v538 = vld [vmem:[#allocation6 + $0xdd8] sm:$0xff]
    %v539 = vld [vmem:[#allocation6 + $0xde0] sm:$0xff]
    %v540 = vld [vmem:[#allocation6 + $0xde8] sm:$0xff]
    %v541 = vld [vmem:[#allocation6 + $0xdf0] sm:$0xff]
    %v542 = vld [vmem:[#allocation6 + $0xdf8] sm:$0xff]
    %v543 = vld [vmem:[#allocation6 + $0xe00] sm:$0xff]
    %v544 = vld [vmem:[#allocation6 + $0xe08] sm:$0xff]
    %v545 = vld [vmem:[#allocation6 + $0xe10] sm:$0xff]
    %v546 = vld [vmem:[#allocation6 + $0xe18] sm:$0xff]
    %v547 = vld [vmem:[#allocation6 + $0xe20] sm:$0xff]
    %v548 = vld [vmem:[#allocation6 + $0xe28] sm:$0xff]
    %v549 = vld [vmem:[#allocation6 + $0xe30] sm:$0xff]
    %v550 = vld [vmem:[#allocation6 + $0xe38] sm:$0xff]
    %v551 = vld [vmem:[#allocation6 + $0xe40] sm:$0xff]
    %v552 = vld [vmem:[#allocation6 + $0xe48] sm:$0xff]
    %v553 = vld [vmem:[#allocation6 + $0xe50] sm:$0xff]
    %v554 = vld [vmem:[#allocation6 + $0xe58] sm:$0xff]
    %v555 = vld [vmem:[#allocation6 + $0xe60] sm:$0xff]
    %v556 = vld [vmem:[#allocation6 + $0xe68] sm:$0xff]
    %v557 = vld [vmem:[#allocation6 + $0xe70] sm:$0xff]
    %v558 = vld [vmem:[#allocation6 + $0xe78] sm:$0xff]
    %v559 = vld [vmem:[#allocation6 + $0xe80] sm:$0xff]
    %v560 = vld [vmem:[#allocation6 + $0xe88] sm:$0xff]
    %v561 = vld [vmem:[#allocation6 + $0xe90] sm:$0xff]
    %v562 = vld [vmem:[#allocation6 + $0xe98] sm:$0xff]
    %v563 = vld [vmem:[#allocation6 + $0xea0] sm:$0xff]
    %v564 = vld [vmem:[#allocation6 + $0xea8] sm:$0xff]
    %v565 = vld [vmem:[#allocation6 + $0xeb0] sm:$0xff]
    %v566 = vld [vmem:[#allocation6 + $0xeb8] sm:$0xff]
    %v567 = vld [vmem:[#allocation6 + $0xec0] sm:$0xff]
    %v568 = vld [vmem:[#allocation6 + $0xec8] sm:$0xff]
    %v569 = vld [vmem:[#allocation6 + $0xed0] sm:$0xff]
    %v570 = vld [vmem:[#allocation6 + $0xed8] sm:$0xff]
    %v571 = vld [vmem:[#allocation6 + $0xee0] sm:$0xff]
    %v572 = vld [vmem:[#allocation6 + $0xee8] sm:$0xff]
    %v573 = vld [vmem:[#allocation6 + $0xef0] sm:$0xff]
    %v574 = vld [vmem:[#allocation6 + $0xef8] sm:$0xff]
    %v575 = vld [vmem:[#allocation6 + $0xf00] sm:$0xff]
    %v576 = vld [vmem:[#allocation6 + $0xf08] sm:$0xff]
    %v577 = vld [vmem:[#allocation6 + $0xf10] sm:$0xff]
    %v578 = vld [vmem:[#allocation6 + $0xf18] sm:$0xff]
    %v579 = vld [vmem:[#allocation6 + $0xf20] sm:$0xff]
    %v580 = vld [vmem:[#allocation6 + $0xf28] sm:$0xff]
    %v581 = vld [vmem:[#allocation6 + $0xf30] sm:$0xff]
    %v582 = vld [vmem:[#allocation6 + $0xf38] sm:$0xff]
    %v583 = vld [vmem:[#allocation6 + $0xf40] sm:$0xff]
    %v584 = vld [vmem:[#allocation6 + $0xf48] sm:$0xff]
    %v585 = vld [vmem:[#allocation6 + $0xf50] sm:$0xff]
    %v586 = vld [vmem:[#allocation6 + $0xf58] sm:$0xff]
    %v587 = vld [vmem:[#allocation6 + $0xf60] sm:$0xff]
    %v588 = vld [vmem:[#allocation6 + $0xf68] sm:$0xff]
    %v589 = vld [vmem:[#allocation6 + $0xf70] sm:$0xff]
    %v590 = vld [vmem:[#allocation6 + $0xf78] sm:$0xff]
    %v591 = vld [vmem:[#allocation6 + $0xf80] sm:$0xff]
    %v592 = vld [vmem:[#allocation6 + $0xf88] sm:$0xff]
    %v593 = vld [vmem:[#allocation6 + $0xf90] sm:$0xff]
    %v594 = vld [vmem:[#allocation6 + $0xf98] sm:$0xff]
    %v595 = vld [vmem:[#allocation6 + $0xfa0] sm:$0xff]
    %v596 = vld [vmem:[#allocation6 + $0xfa8] sm:$0xff]
    %v597 = vld [vmem:[#allocation6 + $0xfb0] sm:$0xff]
    %v598 = vld [vmem:[#allocation6 + $0xfb8] sm:$0xff]
    %v599 = vld [vmem:[#allocation6 + $0xfc0] sm:$0xff]
    %v600 = vld [vmem:[#allocation6 + $0xfc8] sm:$0xff]
    %v601 = vld [vmem:[#allocation6 + $0xfd0] sm:$0xff]
    %v602 = vld [vmem:[#allocation6 + $0xfd8] sm:$0xff]
    %v603 = vld [vmem:[#allocation6 + $0xfe0] sm:$0xff]
    %v604 = vld [vmem:[#allocation6 + $0xfe8] sm:$0xff]
    %v605 = vld [vmem:[#allocation6 + $0xff0] sm:$0xff]
    %v606 = vld [vmem:[#allocation6 + $0xff8] sm:$0xff]
    %v607 = vld [vmem:[#allocation6 + $0x1000] sm:$0xff]
    %v608 = vld [vmem:[#allocation6 + $0x1008] sm:$0xff]
    %v609 = vld [vmem:[#allocation6 + $0x1010] sm:$0xff]
    %v610 = vld [vmem:[#allocation6 + $0x1018] sm:$0xff]
    %v611 = vld [vmem:[#allocation6 + $0x1020] sm:$0xff]
    %v612 = vld [vmem:[#allocation6 + $0x1028] sm:$0xff]
    %v613 = vld [vmem:[#allocation6 + $0x1030] sm:$0xff]
    %v614 = vld [vmem:[#allocation6 + $0x1038] sm:$0xff]
    %v615 = vld [vmem:[#allocation6 + $0x1040] sm:$0xff]
    %v616 = vld [vmem:[#allocation6 + $0x1048] sm:$0xff]
    %v617 = vld [vmem:[#allocation6 + $0x1050] sm:$0xff]
    %v618 = vld [vmem:[#allocation6 + $0x1058] sm:$0xff]
    %v619 = vld [vmem:[#allocation6 + $0x1060] sm:$0xff]
    %v620 = vld [vmem:[#allocation6 + $0x1068] sm:$0xff]
    %v621 = vld [vmem:[#allocation6 + $0x1070] sm:$0xff]
    %v622 = vld [vmem:[#allocation6 + $0x1078] sm:$0xff]
    %v623 = vld [vmem:[#allocation6 + $0x1080] sm:$0xff]
    %v624 = vld [vmem:[#allocation6 + $0x1088] sm:$0xff]
    %v625 = vld [vmem:[#allocation6 + $0x1090] sm:$0xff]
    %v626 = vld [vmem:[#allocation6 + $0x1098] sm:$0xff]
    %v627 = vld [vmem:[#allocation6 + $0x10a0] sm:$0xff]
    %v628 = vld [vmem:[#allocation6 + $0x10a8] sm:$0xff]
    %v629 = vld [vmem:[#allocation6 + $0x10b0] sm:$0xff]
    %v630 = vld [vmem:[#allocation6 + $0x10b8] sm:$0xff]
    %v631 = vld [vmem:[#allocation6 + $0x10c0] sm:$0xff]
    %v632 = vld [vmem:[#allocation6 + $0x10c8] sm:$0xff]
    %v633 = vld [vmem:[#allocation6 + $0x10d0] sm:$0xff]
    %v634 = vld [vmem:[#allocation6 + $0x10d8] sm:$0xff]
    %v635 = vld [vmem:[#allocation6 + $0x10e0] sm:$0xff]
    %v636 = vld [vmem:[#allocation6 + $0x10e8] sm:$0xff]
    %v637 = vld [vmem:[#allocation6 + $0x10f0] sm:$0xff]
    %v638 = vld [vmem:[#allocation6 + $0x10f8] sm:$0xff]
    %v639 = vld [vmem:[#allocation6 + $0x1100] sm:$0xff]
    %v640 = vld [vmem:[#allocation6 + $0x1108] sm:$0xff]
    %v641 = vld [vmem:[#allocation6 + $0x1110] sm:$0xff]
    %v642 = vld [vmem:[#allocation6 + $0x1118] sm:$0xff]
    %v643 = vld [vmem:[#allocation6 + $0x1120] sm:$0xff]
    %v644 = vld [vmem:[#allocation6 + $0x1128] sm:$0xff]
    %v645 = vld [vmem:[#allocation6 + $0x1130] sm:$0xff]
    %v646 = vld [vmem:[#allocation6 + $0x1138] sm:$0xff]
    %v647 = vld [vmem:[#allocation6 + $0x1140] sm:$0xff]
    %v648 = vld [vmem:[#allocation6 + $0x1148] sm:$0xff]
    %v649 = vld [vmem:[#allocation6 + $0x1150] sm:$0xff]
    %v650 = vld [vmem:[#allocation6 + $0x1158] sm:$0xff]
    %v651 = vld [vmem:[#allocation6 + $0x1160] sm:$0xff]
    %v652 = vld [vmem:[#allocation6 + $0x1168] sm:$0xff]
    %v653 = vld [vmem:[#allocation6 + $0x1170] sm:$0xff]
    %v654 = vld [vmem:[#allocation6 + $0x1178] sm:$0xff]
    %v655 = vld [vmem:[#allocation6 + $0x1180] sm:$0xff]
    %v656 = vld [vmem:[#allocation6 + $0x1188] sm:$0xff]
    %v657 = vld [vmem:[#allocation6 + $0x1190] sm:$0xff]
    %v658 = vld [vmem:[#allocation6 + $0x1198] sm:$0xff]
    %v659 = vld [vmem:[#allocation6 + $0x11a0] sm:$0xff]
    %v660 = vld [vmem:[#allocation6 + $0x11a8] sm:$0xff]
    %v661 = vld [vmem:[#allocation6 + $0x11b0] sm:$0xff]
    %v662 = vld [vmem:[#allocation6 + $0x11b8] sm:$0xff]
    %v663 = vld [vmem:[#allocation6 + $0x11c0] sm:$0xff]
    %v664 = vld [vmem:[#allocation6 + $0x11c8] sm:$0xff]
    %v665 = vld [vmem:[#allocation6 + $0x11d0] sm:$0xff]
    %v666 = vld [vmem:[#allocation6 + $0x11d8] sm:$0xff]
    %v667 = vld [vmem:[#allocation6 + $0x11e0] sm:$0xff]
    %v668 = vld [vmem:[#allocation6 + $0x11e8] sm:$0xff]
    %v669 = vld [vmem:[#allocation6 + $0x11f0] sm:$0xff]
    %v670 = vld [vmem:[#allocation6 + $0x11f8] sm:$0xff]
    %v671 = vld [vmem:[#allocation8] sm:$0xff]
    %v672 = vld [vmem:[#allocation8 + $0x8] sm:$0xf]
    %v675 = vlaneseq
    %v676 = vshrl.u32 %v675, 7
    %v677 = vsub.s32 0, %v676
    %v678 = vrot.slane %v671, %v677
    %v679 = vlaneseq
    %v680 = vshrl.u32 %v679, 7
    %v681 = vsub.s32 1, %v680
    %v682 = vrot.slane %v671, %v681
    %v683 = vlaneseq
    %v684 = vshrl.u32 %v683, 7
    %v685 = vsub.s32 2, %v684
    %v686 = vrot.slane %v671, %v685
    %v687 = vlaneseq
    %v688 = vshrl.u32 %v687, 7
    %v689 = vsub.s32 3, %v688
    %v690 = vrot.slane %v671, %v689
    %v691 = vlaneseq
    %v692 = vshrl.u32 %v691, 7
    %v693 = vsub.s32 4, %v692
    %v694 = vrot.slane %v671, %v693
    %v695 = vlaneseq
    %v696 = vshrl.u32 %v695, 7
    %v697 = vsub.s32 5, %v696
    %v698 = vrot.slane %v671, %v697
    %v699 = vlaneseq
    %v700 = vshrl.u32 %v699, 7
    %v701 = vsub.s32 6, %v700
    %v702 = vrot.slane %v671, %v701
    %v703 = vlaneseq
    %v704 = vshrl.u32 %v703, 7
    %v705 = vsub.s32 7, %v704
    %v706 = vrot.slane %v671, %v705
    %v707 = vlaneseq
    %v708 = vshrl.u32 %v707, 7
    %v709 = vsub.s32 0, %v708
    %v710 = vrot.slane %v672, %v709
    %v711 = vlaneseq
    %v712 = vshrl.u32 %v711, 7
    %v713 = vsub.s32 1, %v712
    %v714 = vrot.slane %v672, %v713
    %v715 = vlaneseq
    %v716 = vshrl.u32 %v715, 7
    %v717 = vsub.s32 2, %v716
    %v718 = vrot.slane %v672, %v717
    %v719 = vlaneseq
    %v720 = vshrl.u32 %v719, 7
    %v721 = vsub.s32 3, %v720
    %v722 = vrot.slane %v672, %v721
    %735 = vmatprep.subr.mxu0 %v96
    %736 = vmatpush1.msra.mxu0 %v95
    %737 = vmatprep.subr.mxu0 %v108
    %738 = vmatpush1.msra.mxu0 %v107
    %739 = vmatprep.subr.mxu0 %v120
    %740 = vmatpush1.msra.mxu0 %v119
    %741 = vmatprep.subr.mxu0 %v132
    %742 = vmatpush1.msra.mxu0 %v131
    %743 = vmatprep.subr.mxu0 %v144
    %744 = vmatpush1.msra.mxu0 %v143
    %745 = vmatprep.subr.mxu0 %v156
    %746 = vmatpush1.msra.mxu0 %v155
    %747 = vmatprep.subr.mxu0 %v168
    %748 = vmatpush1.msra.mxu0 %v167
    %749 = vmatprep.subr.mxu0 %v180
    %750 = vmatpush1.msra.mxu0 %v179
    %751 = vmatprep.subr.mxu0 %v192
    %752 = vmatpush1.msra.mxu0 %v191
    %753 = vmatprep.subr.mxu0 %v204
    %754 = vmatpush1.msra.mxu0 %v203
    %755 = vmatprep.subr.mxu0 %v216
    %756 = vmatpush1.msra.mxu0 %v215
    %757 = vmatprep.subr.mxu0 %v228
    %758 = vmatpush1.msra.mxu0 %v227
    %759 = vmatprep.subr.mxu0 %v240
    %760 = vmatpush1.msra.mxu0 %v239
    %761 = vmatprep.subr.mxu0 %v252
    %762 = vmatpush1.msra.mxu0 %v251
    %763 = vmatprep.subr.mxu0 %v264
    %764 = vmatpush1.msra.mxu0 %v263
    %765 = vmatprep.subr.mxu0 %v276
    %766 = vmatpush1.msra.mxu0 %v275
    %767 = vmatprep.subr.mxu0 %v288
    %768 = vmatpush1.msra.mxu0 %v287
    %769 = vmatprep.subr.mxu0 %v300
    %770 = vmatpush1.msra.mxu0 %v299
    %771 = vmatprep.subr.mxu0 %v312
    %772 = vmatpush1.msra.mxu0 %v311
    %773 = vmatprep.subr.mxu0 %v324
    %774 = vmatpush1.msra.mxu0 %v323
    %775 = vmatprep.subr.mxu0 %v336
    %776 = vmatpush1.msra.mxu0 %v335
    %777 = vmatprep.subr.mxu0 %v348
    %778 = vmatpush1.msra.mxu0 %v347
    %779 = vmatprep.subr.mxu0 %v360
    %780 = vmatpush1.msra.mxu0 %v359
    %781 = vmatprep.subr.mxu0 %v372
    %782 = vmatpush1.msra.mxu0 %v371
    %783 = vmatprep.subr.mxu0 %v384
    %784 = vmatpush1.msra.mxu0 %v383
    %785 = vmatprep.subr.mxu0 %v396
    %786 = vmatpush1.msra.mxu0 %v395
    %787 = vmatprep.subr.mxu0 %v408
    %788 = vmatpush1.msra.mxu0 %v407
    %789 = vmatprep.subr.mxu0 %v420
    %790 = vmatpush1.msra.mxu0 %v419
    %791 = vmatprep.subr.mxu0 %v432
    %792 = vmatpush1.msra.mxu0 %v431
    %793 = vmatprep.subr.mxu0 %v444
    %794 = vmatpush1.msra.mxu0 %v443
    %795 = vmatprep.subr.mxu0 %v456
    %796 = vmatpush1.msra.mxu0 %v455
    %797 = vmatprep.subr.mxu0 %v468
    %798 = vmatpush1.msra.mxu0 %v467
    %799 = vmatprep.mubr.f32.mxu0 %v90
    %800 = vmatmul.mubr.f32.gmra.mrb[0].mxu0 %v89
    %v801 = vpop.f32.mrb[0].mxu0
    %v802 = vadd.f32 %v678, %v801
    %v803 = vpop.f32.mrb[0].mxu0
    %v804 = vadd.f32 %v682, %v803
    %805 = vmatprep.mubr.f32.mxu0 %v93
    %806 = vmatmul.mubr.f32.gmra.mrb[0].mxu0 %v92
    %v807 = vpop.f32.mrb[0].mxu0
    %v808 = vadd.f32 %v678, %v807
    %v809 = vpop.f32.mrb[0].mxu0
    %v810 = vadd.f32 %v682, %v809
    %811 = vdwg.mxu0
    %812 = vmatprep.subr.mxu0 %v480
    %813 = vmatpush1.msra.mxu0 %v479
    %814 = vmatprep.subr.mxu0 %v492
    %815 = vmatpush1.msra.mxu0 %v491
    %816 = vmatprep.subr.mxu0 %v504
    %817 = vmatpush1.msra.mxu0 %v503
    %818 = vmatprep.subr.mxu0 %v516
    %819 = vmatpush1.msra.mxu0 %v515
    %820 = vmatprep.subr.mxu0 %v528
    %821 = vmatpush1.msra.mxu0 %v527
    %822 = vmatprep.subr.mxu0 %v540
    %823 = vmatpush1.msra.mxu0 %v539
    %824 = vmatprep.subr.mxu0 %v552
    %825 = vmatpush1.msra.mxu0 %v551
    %826 = vmatprep.subr.mxu0 %v564
    %827 = vmatpush1.msra.mxu0 %v563
    %828 = vmatprep.subr.mxu0 %v576
    %829 = vmatpush1.msra.mxu0 %v575
    %830 = vmatprep.subr.mxu0 %v588
    %831 = vmatpush1.msra.mxu0 %v587
    %832 = vmatprep.subr.mxu0 %v600
    %833 = vmatpush1.msra.mxu0 %v599
    %834 = vmatprep.subr.mxu0 %v612
    %835 = vmatpush1.msra.mxu0 %v611
    %836 = vmatprep.subr.mxu0 %v624
    %837 = vmatpush1.msra.mxu0 %v623
    %838 = vmatprep.subr.mxu0 %v636
    %839 = vmatpush1.msra.mxu0 %v635
    %840 = vmatprep.subr.mxu0 %v648
    %841 = vmatpush1.msra.mxu0 %v647
    %842 = vmatprep.subr.mxu0 %v660
    %843 = vmatpush1.msra.mxu0 %v659
    %844 = vmatprep.subr.mxu0 0.0
    %845 = vmatpush1.msra.mxu0 0.0
    %846 = vmatprep.subr.mxu0 0.0
    %847 = vmatpush1.msra.mxu0 0.0
    %848 = vmatprep.subr.mxu0 0.0
    %849 = vmatpush1.msra.mxu0 0.0
    %850 = vmatprep.subr.mxu0 0.0
    %851 = vmatpush1.msra.mxu0 0.0
    %852 = vmatprep.subr.mxu0 0.0
    %853 = vmatpush1.msra.mxu0 0.0
    %854 = vmatprep.subr.mxu0 0.0
    %855 = vmatpush1.msra.mxu0 0.0
    %856 = vmatprep.subr.mxu0 0.0
    %857 = vmatpush1.msra.mxu0 0.0
    %858 = vmatprep.subr.mxu0 0.0
    %859 = vmatpush1.msra.mxu0 0.0
    %860 = vmatprep.subr.mxu0 0.0
    %861 = vmatpush1.msra.mxu0 0.0
    %862 = vmatprep.subr.mxu0 0.0
    %863 = vmatpush1.msra.mxu0 0.0
    %864 = vmatprep.subr.mxu0 0.0
    %865 = vmatpush1.msra.mxu0 0.0
    %866 = vmatprep.subr.mxu0 0.0
    %867 = vmatpush1.msra.mxu0 0.0
    %868 = vmatprep.subr.mxu0 0.0
    %869 = vmatpush1.msra.mxu0 0.0
    %870 = vmatprep.subr.mxu0 0.0
    %871 = vmatpush1.msra.mxu0 0.0
    %872 = vmatprep.subr.mxu0 0.0
    %873 = vmatpush1.msra.mxu0 0.0
    %874 = vmatprep.subr.mxu0 0.0
    %875 = vmatpush1.msra.mxu0 0.0
    %876 = vmatprep.mubr.f32.mxu0 0.0
    %877 = vmatmul.mubr.f32.gmra.mrb[0].mxu0 %v91
    %v878 = vpop.f32.mrb[0].mxu0
    %v879 = vadd.f32 %v802, %v878
    %v880 = vpop.f32.mrb[0].mxu0
    %v881 = vadd.f32 %v804, %v880
    %882 = vmatprep.mubr.f32.mxu0 0.0
    %883 = vmatmul.mubr.f32.gmra.mrb[0].mxu0 %v94
    %v884 = vpop.f32.mrb[0].mxu0
    %v885 = vadd.f32 %v808, %v884
    %v886 = vpop.f32.mrb[0].mxu0
    %v887 = vadd.f32 %v810, %v886
    %888 = vdwg.mxu0
    %889 = vmatprep.subr.mxu0 %v98
    %890 = vmatpush1.msra.mxu0 %v97
    %891 = vmatprep.subr.mxu0 %v110
    %892 = vmatpush1.msra.mxu0 %v109
    %893 = vmatprep.subr.mxu0 %v122
    %894 = vmatpush1.msra.mxu0 %v121
    %895 = vmatprep.subr.mxu0 %v134
    %896 = vmatpush1.msra.mxu0 %v133
    %897 = vmatprep.subr.mxu0 %v146
    %898 = vmatpush1.msra.mxu0 %v145
    %899 = vmatprep.subr.mxu0 %v158
    %900 = vmatpush1.msra.mxu0 %v157
    %901 = vmatprep.subr.mxu0 %v170
    %902 = vmatpush1.msra.mxu0 %v169
    %903 = vmatprep.subr.mxu0 %v182
    %904 = vmatpush1.msra.mxu0 %v181
    %905 = vmatprep.subr.mxu0 %v194
    %906 = vmatpush1.msra.mxu0 %v193
    %907 = vmatprep.subr.mxu0 %v206
    %908 = vmatpush1.msra.mxu0 %v205
    %909 = vmatprep.subr.mxu0 %v218
    %910 = vmatpush1.msra.mxu0 %v217
    %911 = vmatprep.subr.mxu0 %v230
    %912 = vmatpush1.msra.mxu0 %v229
    %913 = vmatprep.subr.mxu0 %v242
    %914 = vmatpush1.msra.mxu0 %v241
    %915 = vmatprep.subr.mxu0 %v254
    %916 = vmatpush1.msra.mxu0 %v253
    %917 = vmatprep.subr.mxu0 %v266
    %918 = vmatpush1.msra.mxu0 %v265
    %919 = vmatprep.subr.mxu0 %v278
    %920 = vmatpush1.msra.mxu0 %v277
    %921 = vmatprep.subr.mxu0 %v290
    %922 = vmatpush1.msra.mxu0 %v289
    %923 = vmatprep.subr.mxu0 %v302
    %924 = vmatpush1.msra.mxu0 %v301
    %925 = vmatprep.subr.mxu0 %v314
    %926 = vmatpush1.msra.mxu0 %v313
    %927 = vmatprep.subr.mxu0 %v326
    %928 = vmatpush1.msra.mxu0 %v325
    %929 = vmatprep.subr.mxu0 %v338
    %930 = vmatpush1.msra.mxu0 %v337
    %931 = vmatprep.subr.mxu0 %v350
    %932 = vmatpush1.msra.mxu0 %v349
    %933 = vmatprep.subr.mxu0 %v362
    %934 = vmatpush1.msra.mxu0 %v361
    %935 = vmatprep.subr.mxu0 %v374
    %936 = vmatpush1.msra.mxu0 %v373
    %937 = vmatprep.subr.mxu0 %v386
    %938 = vmatpush1.msra.mxu0 %v385
    %939 = vmatprep.subr.mxu0 %v398
    %940 = vmatpush1.msra.mxu0 %v397
    %941 = vmatprep.subr.mxu0 %v410
    %942 = vmatpush1.msra.mxu0 %v409
    %943 = vmatprep.subr.mxu0 %v422
    %944 = vmatpush1.msra.mxu0 %v421
    %945 = vmatprep.subr.mxu0 %v434
    %946 = vmatpush1.msra.mxu0 %v433
    %947 = vmatprep.subr.mxu0 %v446
    %948 = vmatpush1.msra.mxu0 %v445
    %949 = vmatprep.subr.mxu0 %v458
    %950 = vmatpush1.msra.mxu0 %v457
    %951 = vmatprep.subr.mxu0 %v470
    %952 = vmatpush1.msra.mxu0 %v469
    %953 = vmatprep.mubr.f32.mxu0 %v90
    %954 = vmatmul.mubr.f32.gmra.mrb[0].mxu0 %v89
    %v955 = vpop.f32.mrb[0].mxu0
    %v956 = vadd.f32 %v686, %v955
    %v957 = vpop.f32.mrb[0].mxu0
    %v958 = vadd.f32 %v690, %v957
    %959 = vmatprep.mubr.f32.mxu0 %v93
    %960 = vmatmul.mubr.f32.gmra.mrb[0].mxu0 %v92
    %v961 = vpop.f32.mrb[0].mxu0
    %v962 = vadd.f32 %v686, %v961
    %v963 = vpop.f32.mrb[0].mxu0
    %v964 = vadd.f32 %v690, %v963
    %965 = vdwg.mxu0
    %966 = vmatprep.subr.mxu0 %v482
    %967 = vmatpush1.msra.mxu0 %v481
    %968 = vmatprep.subr.mxu0 %v494
    %969 = vmatpush1.msra.mxu0 %v493
    %970 = vmatprep.subr.mxu0 %v506
    %971 = vmatpush1.msra.mxu0 %v505
    %972 = vmatprep.subr.mxu0 %v518
    %973 = vmatpush1.msra.mxu0 %v517
    %974 = vmatprep.subr.mxu0 %v530
    %975 = vmatpush1.msra.mxu0 %v529
    %976 = vmatprep.subr.mxu0 %v542
    %977 = vmatpush1.msra.mxu0 %v541
    %978 = vmatprep.subr.mxu0 %v554
    %979 = vmatpush1.msra.mxu0 %v553
    %980 = vmatprep.subr.mxu0 %v566
    %981 = vmatpush1.msra.mxu0 %v565
    %982 = vmatprep.subr.mxu0 %v578
    %983 = vmatpush1.msra.mxu0 %v577
    %984 = vmatprep.subr.mxu0 %v590
    %985 = vmatpush1.msra.mxu0 %v589
    %986 = vmatprep.subr.mxu0 %v602
    %987 = vmatpush1.msra.mxu0 %v601
    %988 = vmatprep.subr.mxu0 %v614
    %989 = vmatpush1.msra.mxu0 %v613
    %990 = vmatprep.subr.mxu0 %v626
    %991 = vmatpush1.msra.mxu0 %v625
    %992 = vmatprep.subr.mxu0 %v638
    %993 = vmatpush1.msra.mxu0 %v637
    %994 = vmatprep.subr.mxu0 %v650
    %995 = vmatpush1.msra.mxu0 %v649
    %996 = vmatprep.subr.mxu0 %v662
    %997 = vmatpush1.msra.mxu0 %v661
    %998 = vmatprep.subr.mxu0 0.0
    %999 = vmatpush1.msra.mxu0 0.0
    %1000 = vmatprep.subr.mxu0 0.0
    %1001 = vmatpush1.msra.mxu0 0.0
    %1002 = vmatprep.subr.mxu0 0.0
    %1003 = vmatpush1.msra.mxu0 0.0
    %1004 = vmatprep.subr.mxu0 0.0
    %1005 = vmatpush1.msra.mxu0 0.0
    %1006 = vmatprep.subr.mxu0 0.0
    %1007 = vmatpush1.msra.mxu0 0.0
    %1008 = vmatprep.subr.mxu0 0.0
    %1009 = vmatpush1.msra.mxu0 0.0
    %1010 = vmatprep.subr.mxu0 0.0
    %1011 = vmatpush1.msra.mxu0 0.0
    %1012 = vmatprep.subr.mxu0 0.0
    %1013 = vmatpush1.msra.mxu0 0.0
    %1014 = vmatprep.subr.mxu0 0.0
    %1015 = vmatpush1.msra.mxu0 0.0
    %1016 = vmatprep.subr.mxu0 0.0
    %1017 = vmatpush1.msra.mxu0 0.0
    %1018 = vmatprep.subr.mxu0 0.0
    %1019 = vmatpush1.msra.mxu0 0.0
    %1020 = vmatprep.subr.mxu0 0.0
    %1021 = vmatpush1.msra.mxu0 0.0
    %1022 = vmatprep.subr.mxu0 0.0
    %1023 = vmatpush1.msra.mxu0 0.0
    %1024 = vmatprep.subr.mxu0 0.0
    %1025 = vmatpush1.msra.mxu0 0.0
    %1026 = vmatprep.subr.mxu0 0.0
    %1027 = vmatpush1.msra.mxu0 0.0
    %1028 = vmatprep.subr.mxu0 0.0
    %1029 = vmatpush1.msra.mxu0 0.0
    %1030 = vmatprep.mubr.f32.mxu0 0.0
    %1031 = vmatmul.mubr.f32.gmra.mrb[0].mxu0 %v91
    %v1032 = vpop.f32.mrb[0].mxu0
    %v1033 = vadd.f32 %v956, %v1032
    %v1034 = vpop.f32.mrb[0].mxu0
    %v1035 = vadd.f32 %v958, %v1034
    %1036 = vmatprep.mubr.f32.mxu0 0.0
    %1037 = vmatmul.mubr.f32.gmra.mrb[0].mxu0 %v94
    %v1038 = vpop.f32.mrb[0].mxu0
    %v1039 = vadd.f32 %v962, %v1038
    %v1040 = vpop.f32.mrb[0].mxu0
    %v1041 = vadd.f32 %v964, %v1040
    %1042 = vdwg.mxu0
    %1043 = vmatprep.subr.mxu0 %v100
    %1044 = vmatpush1.msra.mxu0 %v99
    %1045 = vmatprep.subr.mxu0 %v112
    %1046 = vmatpush1.msra.mxu0 %v111
    %1047 = vmatprep.subr.mxu0 %v124
    %1048 = vmatpush1.msra.mxu0 %v123
    %1049 = vmatprep.subr.mxu0 %v136
    %1050 = vmatpush1.msra.mxu0 %v135
    %1051 = vmatprep.subr.mxu0 %v148
    %1052 = vmatpush1.msra.mxu0 %v147
    %1053 = vmatprep.subr.mxu0 %v160
    %1054 = vmatpush1.msra.mxu0 %v159
    %1055 = vmatprep.subr.mxu0 %v172
    %1056 = vmatpush1.msra.mxu0 %v171
    %1057 = vmatprep.subr.mxu0 %v184
    %1058 = vmatpush1.msra.mxu0 %v183
    %1059 = vmatprep.subr.mxu0 %v196
    %1060 = vmatpush1.msra.mxu0 %v195
    %1061 = vmatprep.subr.mxu0 %v208
    %1062 = vmatpush1.msra.mxu0 %v207
    %1063 = vmatprep.subr.mxu0 %v220
    %1064 = vmatpush1.msra.mxu0 %v219
    %1065 = vmatprep.subr.mxu0 %v232
    %1066 = vmatpush1.msra.mxu0 %v231
    %1067 = vmatprep.subr.mxu0 %v244
    %1068 = vmatpush1.msra.mxu0 %v243
    %1069 = vmatprep.subr.mxu0 %v256
    %1070 = vmatpush1.msra.mxu0 %v255
    %1071 = vmatprep.subr.mxu0 %v268
    %1072 = vmatpush1.msra.mxu0 %v267
    %1073 = vmatprep.subr.mxu0 %v280
    %1074 = vmatpush1.msra.mxu0 %v279
    %1075 = vmatprep.subr.mxu0 %v292
    %1076 = vmatpush1.msra.mxu0 %v291
    %1077 = vmatprep.subr.mxu0 %v304
    %1078 = vmatpush1.msra.mxu0 %v303
    %1079 = vmatprep.subr.mxu0 %v316
    %1080 = vmatpush1.msra.mxu0 %v315
    %1081 = vmatprep.subr.mxu0 %v328
    %1082 = vmatpush1.msra.mxu0 %v327
    %1083 = vmatprep.subr.mxu0 %v340
    %1084 = vmatpush1.msra.mxu0 %v339
    %1085 = vmatprep.subr.mxu0 %v352
    %1086 = vmatpush1.msra.mxu0 %v351
    %1087 = vmatprep.subr.mxu0 %v364
    %1088 = vmatpush1.msra.mxu0 %v363
    %1089 = vmatprep.subr.mxu0 %v376
    %1090 = vmatpush1.msra.mxu0 %v375
    %1091 = vmatprep.subr.mxu0 %v388
    %1092 = vmatpush1.msra.mxu0 %v387
    %1093 = vmatprep.subr.mxu0 %v400
    %1094 = vmatpush1.msra.mxu0 %v399
    %1095 = vmatprep.subr.mxu0 %v412
    %1096 = vmatpush1.msra.mxu0 %v411
    %1097 = vmatprep.subr.mxu0 %v424
    %1098 = vmatpush1.msra.mxu0 %v423
    %1099 = vmatprep.subr.mxu0 %v436
    %1100 = vmatpush1.msra.mxu0 %v435
    %1101 = vmatprep.subr.mxu0 %v448
    %1102 = vmatpush1.msra.mxu0 %v447
    %1103 = vmatprep.subr.mxu0 %v460
    %1104 = vmatpush1.msra.mxu0 %v459
    %1105 = vmatprep.subr.mxu0 %v472
    %1106 = vmatpush1.msra.mxu0 %v471
    %1107 = vmatprep.mubr.f32.mxu0 %v90
    %1108 = vmatmul.mubr.f32.gmra.mrb[0].mxu0 %v89
    %v1109 = vpop.f32.mrb[0].mxu0
    %v1110 = vadd.f32 %v694, %v1109
    %v1111 = vpop.f32.mrb[0].mxu0
    %v1112 = vadd.f32 %v698, %v1111
    %1113 = vmatprep.mubr.f32.mxu0 %v93
    %1114 = vmatmul.mubr.f32.gmra.mrb[0].mxu0 %v92
    %v1115 = vpop.f32.mrb[0].mxu0
    %v1116 = vadd.f32 %v694, %v1115
    %v1117 = vpop.f32.mrb[0].mxu0
    %v1118 = vadd.f32 %v698, %v1117
    %1119 = vdwg.mxu0
    %1120 = vmatprep.subr.mxu0 %v484
    %1121 = vmatpush1.msra.mxu0 %v483
    %1122 = vmatprep.subr.mxu0 %v496
    %1123 = vmatpush1.msra.mxu0 %v495
    %1124 = vmatprep.subr.mxu0 %v508
    %1125 = vmatpush1.msra.mxu0 %v507
    %1126 = vmatprep.subr.mxu0 %v520
    %1127 = vmatpush1.msra.mxu0 %v519
    %1128 = vmatprep.subr.mxu0 %v532
    %1129 = vmatpush1.msra.mxu0 %v531
    %1130 = vmatprep.subr.mxu0 %v544
    %1131 = vmatpush1.msra.mxu0 %v543
    %1132 = vmatprep.subr.mxu0 %v556
    %1133 = vmatpush1.msra.mxu0 %v555
    %1134 = vmatprep.subr.mxu0 %v568
    %1135 = vmatpush1.msra.mxu0 %v567
    %1136 = vmatprep.subr.mxu0 %v580
    %1137 = vmatpush1.msra.mxu0 %v579
    %1138 = vmatprep.subr.mxu0 %v592
    %1139 = vmatpush1.msra.mxu0 %v591
    %1140 = vmatprep.subr.mxu0 %v604
    %1141 = vmatpush1.msra.mxu0 %v603
    %1142 = vmatprep.subr.mxu0 %v616
    %1143 = vmatpush1.msra.mxu0 %v615
    %1144 = vmatprep.subr.mxu0 %v628
    %1145 = vmatpush1.msra.mxu0 %v627
    %1146 = vmatprep.subr.mxu0 %v640
    %1147 = vmatpush1.msra.mxu0 %v639
    %1148 = vmatprep.subr.mxu0 %v652
    %1149 = vmatpush1.msra.mxu0 %v651
    %1150 = vmatprep.subr.mxu0 %v664
    %1151 = vmatpush1.msra.mxu0 %v663
    %1152 = vmatprep.subr.mxu0 0.0
    %1153 = vmatpush1.msra.mxu0 0.0
    %1154 = vmatprep.subr.mxu0 0.0
    %1155 = vmatpush1.msra.mxu0 0.0
    %1156 = vmatprep.subr.mxu0 0.0
    %1157 = vmatpush1.msra.mxu0 0.0
    %1158 = vmatprep.subr.mxu0 0.0
    %1159 = vmatpush1.msra.mxu0 0.0
    %1160 = vmatprep.subr.mxu0 0.0
    %1161 = vmatpush1.msra.mxu0 0.0
    %1162 = vmatprep.subr.mxu0 0.0
    %1163 = vmatpush1.msra.mxu0 0.0
    %1164 = vmatprep.subr.mxu0 0.0
    %1165 = vmatpush1.msra.mxu0 0.0
    %1166 = vmatprep.subr.mxu0 0.0
    %1167 = vmatpush1.msra.mxu0 0.0
    %1168 = vmatprep.subr.mxu0 0.0
    %1169 = vmatpush1.msra.mxu0 0.0
    %1170 = vmatprep.subr.mxu0 0.0
    %1171 = vmatpush1.msra.mxu0 0.0
    %1172 = vmatprep.subr.mxu0 0.0
    %1173 = vmatpush1.msra.mxu0 0.0
    %1174 = vmatprep.subr.mxu0 0.0
    %1175 = vmatpush1.msra.mxu0 0.0
    %1176 = vmatprep.subr.mxu0 0.0
    %1177 = vmatpush1.msra.mxu0 0.0
    %1178 = vmatprep.subr.mxu0 0.0
    %1179 = vmatpush1.msra.mxu0 0.0
    %1180 = vmatprep.subr.mxu0 0.0
    %1181 = vmatpush1.msra.mxu0 0.0
    %1182 = vmatprep.subr.mxu0 0.0
    %1183 = vmatpush1.msra.mxu0 0.0
    %1184 = vmatprep.mubr.f32.mxu0 0.0
    %1185 = vmatmul.mubr.f32.gmra.mrb[0].mxu0 %v91
    %v1186 = vpop.f32.mrb[0].mxu0
    %v1187 = vadd.f32 %v1110, %v1186
    %v1188 = vpop.f32.mrb[0].mxu0
    %v1189 = vadd.f32 %v1112, %v1188
    %1190 = vmatprep.mubr.f32.mxu0 0.0
    %1191 = vmatmul.mubr.f32.gmra.mrb[0].mxu0 %v94
    %v1192 = vpop.f32.mrb[0].mxu0
    %v1193 = vadd.f32 %v1116, %v1192
    %v1194 = vpop.f32.mrb[0].mxu0
    %v1195 = vadd.f32 %v1118, %v1194
    %1196 = vdwg.mxu0
    %1197 = vmatprep.subr.mxu0 %v102
    %1198 = vmatpush1.msra.mxu0 %v101
    %1199 = vmatprep.subr.mxu0 %v114
    %1200 = vmatpush1.msra.mxu0 %v113
    %1201 = vmatprep.subr.mxu0 %v126
    %1202 = vmatpush1.msra.mxu0 %v125
    %1203 = vmatprep.subr.mxu0 %v138
    %1204 = vmatpush1.msra.mxu0 %v137
    %1205 = vmatprep.subr.mxu0 %v150
    %1206 = vmatpush1.msra.mxu0 %v149
    %1207 = vmatprep.subr.mxu0 %v162
    %1208 = vmatpush1.msra.mxu0 %v161
    %1209 = vmatprep.subr.mxu0 %v174
    %1210 = vmatpush1.msra.mxu0 %v173
    %1211 = vmatprep.subr.mxu0 %v186
    %1212 = vmatpush1.msra.mxu0 %v185
    %1213 = vmatprep.subr.mxu0 %v198
    %1214 = vmatpush1.msra.mxu0 %v197
    %1215 = vmatprep.subr.mxu0 %v210
    %1216 = vmatpush1.msra.mxu0 %v209
    %1217 = vmatprep.subr.mxu0 %v222
    %1218 = vmatpush1.msra.mxu0 %v221
    %1219 = vmatprep.subr.mxu0 %v234
    %1220 = vmatpush1.msra.mxu0 %v233
    %1221 = vmatprep.subr.mxu0 %v246
    %1222 = vmatpush1.msra.mxu0 %v245
    %1223 = vmatprep.subr.mxu0 %v258
    %1224 = vmatpush1.msra.mxu0 %v257
    %1225 = vmatprep.subr.mxu0 %v270
    %1226 = vmatpush1.msra.mxu0 %v269
    %1227 = vmatprep.subr.mxu0 %v282
    %1228 = vmatpush1.msra.mxu0 %v281
    %1229 = vmatprep.subr.mxu0 %v294
    %1230 = vmatpush1.msra.mxu0 %v293
    %1231 = vmatprep.subr.mxu0 %v306
    %1232 = vmatpush1.msra.mxu0 %v305
    %1233 = vmatprep.subr.mxu0 %v318
    %1234 = vmatpush1.msra.mxu0 %v317
    %1235 = vmatprep.subr.mxu0 %v330
    %1236 = vmatpush1.msra.mxu0 %v329
    %1237 = vmatprep.subr.mxu0 %v342
    %1238 = vmatpush1.msra.mxu0 %v341
    %1239 = vmatprep.subr.mxu0 %v354
    %1240 = vmatpush1.msra.mxu0 %v353
    %1241 = vmatprep.subr.mxu0 %v366
    %1242 = vmatpush1.msra.mxu0 %v365
    %1243 = vmatprep.subr.mxu0 %v378
    %1244 = vmatpush1.msra.mxu0 %v377
    %1245 = vmatprep.subr.mxu0 %v390
    %1246 = vmatpush1.msra.mxu0 %v389
    %1247 = vmatprep.subr.mxu0 %v402
    %1248 = vmatpush1.msra.mxu0 %v401
    %1249 = vmatprep.subr.mxu0 %v414
    %1250 = vmatpush1.msra.mxu0 %v413
    %1251 = vmatprep.subr.mxu0 %v426
    %1252 = vmatpush1.msra.mxu0 %v425
    %1253 = vmatprep.subr.mxu0 %v438
    %1254 = vmatpush1.msra.mxu0 %v437
    %1255 = vmatprep.subr.mxu0 %v450
    %1256 = vmatpush1.msra.mxu0 %v449
    %1257 = vmatprep.subr.mxu0 %v462
    %1258 = vmatpush1.msra.mxu0 %v461
    %1259 = vmatprep.subr.mxu0 %v474
    %1260 = vmatpush1.msra.mxu0 %v473
    %1261 = vmatprep.mubr.f32.mxu0 %v90
    %1262 = vmatmul.mubr.f32.gmra.mrb[0].mxu0 %v89
    %v1263 = vpop.f32.mrb[0].mxu0
    %v1264 = vadd.f32 %v702, %v1263
    %v1265 = vpop.f32.mrb[0].mxu0
    %v1266 = vadd.f32 %v706, %v1265
    %1267 = vmatprep.mubr.f32.mxu0 %v93
    %1268 = vmatmul.mubr.f32.gmra.mrb[0].mxu0 %v92
    %v1269 = vpop.f32.mrb[0].mxu0
    %v1270 = vadd.f32 %v702, %v1269
    %v1271 = vpop.f32.mrb[0].mxu0
    %v1272 = vadd.f32 %v706, %v1271
    %1273 = vdwg.mxu0
    %1274 = vmatprep.subr.mxu0 %v486
    %1275 = vmatpush1.msra.mxu0 %v485
    %1276 = vmatprep.subr.mxu0 %v498
    %1277 = vmatpush1.msra.mxu0 %v497
    %1278 = vmatprep.subr.mxu0 %v510
    %1279 = vmatpush1.msra.mxu0 %v509
    %1280 = vmatprep.subr.mxu0 %v522
    %1281 = vmatpush1.msra.mxu0 %v521
    %1282 = vmatprep.subr.mxu0 %v534
    %1283 = vmatpush1.msra.mxu0 %v533
    %1284 = vmatprep.subr.mxu0 %v546
    %1285 = vmatpush1.msra.mxu0 %v545
    %1286 = vmatprep.subr.mxu0 %v558
    %1287 = vmatpush1.msra.mxu0 %v557
    %1288 = vmatprep.subr.mxu0 %v570
    %1289 = vmatpush1.msra.mxu0 %v569
    %1290 = vmatprep.subr.mxu0 %v582
    %1291 = vmatpush1.msra.mxu0 %v581
    %1292 = vmatprep.subr.mxu0 %v594
    %1293 = vmatpush1.msra.mxu0 %v593
    %1294 = vmatprep.subr.mxu0 %v606
    %1295 = vmatpush1.msra.mxu0 %v605
    %1296 = vmatprep.subr.mxu0 %v618
    %1297 = vmatpush1.msra.mxu0 %v617
    %1298 = vmatprep.subr.mxu0 %v630
    %1299 = vmatpush1.msra.mxu0 %v629
    %1300 = vmatprep.subr.mxu0 %v642
    %1301 = vmatpush1.msra.mxu0 %v641
    %1302 = vmatprep.subr.mxu0 %v654
    %1303 = vmatpush1.msra.mxu0 %v653
    %1304 = vmatprep.subr.mxu0 %v666
    %1305 = vmatpush1.msra.mxu0 %v665
    %1306 = vmatprep.subr.mxu0 0.0
    %1307 = vmatpush1.msra.mxu0 0.0
    %1308 = vmatprep.subr.mxu0 0.0
    %1309 = vmatpush1.msra.mxu0 0.0
    %1310 = vmatprep.subr.mxu0 0.0
    %1311 = vmatpush1.msra.mxu0 0.0
    %1312 = vmatprep.subr.mxu0 0.0
    %1313 = vmatpush1.msra.mxu0 0.0
    %1314 = vmatprep.subr.mxu0 0.0
    %1315 = vmatpush1.msra.mxu0 0.0
    %1316 = vmatprep.subr.mxu0 0.0
    %1317 = vmatpush1.msra.mxu0 0.0
    %1318 = vmatprep.subr.mxu0 0.0
    %1319 = vmatpush1.msra.mxu0 0.0
    %1320 = vmatprep.subr.mxu0 0.0
    %1321 = vmatpush1.msra.mxu0 0.0
    %1322 = vmatprep.subr.mxu0 0.0
    %1323 = vmatpush1.msra.mxu0 0.0
    %1324 = vmatprep.subr.mxu0 0.0
    %1325 = vmatpush1.msra.mxu0 0.0
    %1326 = vmatprep.subr.mxu0 0.0
    %1327 = vmatpush1.msra.mxu0 0.0
    %1328 = vmatprep.subr.mxu0 0.0
    %1329 = vmatpush1.msra.mxu0 0.0
    %1330 = vmatprep.subr.mxu0 0.0
    %1331 = vmatpush1.msra.mxu0 0.0
    %1332 = vmatprep.subr.mxu0 0.0
    %1333 = vmatpush1.msra.mxu0 0.0
    %1334 = vmatprep.subr.mxu0 0.0
    %1335 = vmatpush1.msra.mxu0 0.0
    %1336 = vmatprep.subr.mxu0 0.0
    %1337 = vmatpush1.msra.mxu0 0.0
    %1338 = vmatprep.mubr.f32.mxu0 0.0
    %1339 = vmatmul.mubr.f32.gmra.mrb[0].mxu0 %v91
    %v1340 = vpop.f32.mrb[0].mxu0
    %v1341 = vadd.f32 %v1264, %v1340
    %v1342 = vpop.f32.mrb[0].mxu0
    %v1343 = vadd.f32 %v1266, %v1342
    %1344 = vmatprep.mubr.f32.mxu0 0.0
    %1345 = vmatmul.mubr.f32.gmra.mrb[0].mxu0 %v94
    %v1346 = vpop.f32.mrb[0].mxu0
    %v1347 = vadd.f32 %v1270, %v1346
    %v1348 = vpop.f32.mrb[0].mxu0
    %v1349 = vadd.f32 %v1272, %v1348
    %1350 = vdwg.mxu0
    %1351 = vmatprep.subr.mxu0 %v104
    %1352 = vmatpush1.msra.mxu0 %v103
    %1353 = vmatprep.subr.mxu0 %v116
    %1354 = vmatpush1.msra.mxu0 %v115
    %1355 = vmatprep.subr.mxu0 %v128
    %1356 = vmatpush1.msra.mxu0 %v127
    %1357 = vmatprep.subr.mxu0 %v140
    %1358 = vmatpush1.msra.mxu0 %v139
    %1359 = vmatprep.subr.mxu0 %v152
    %1360 = vmatpush1.msra.mxu0 %v151
    %1361 = vmatprep.subr.mxu0 %v164
    %1362 = vmatpush1.msra.mxu0 %v163
    %1363 = vmatprep.subr.mxu0 %v176
    %1364 = vmatpush1.msra.mxu0 %v175
    %1365 = vmatprep.subr.mxu0 %v188
    %1366 = vmatpush1.msra.mxu0 %v187
    %1367 = vmatprep.subr.mxu0 %v200
    %1368 = vmatpush1.msra.mxu0 %v199
    %1369 = vmatprep.subr.mxu0 %v212
    %1370 = vmatpush1.msra.mxu0 %v211
    %1371 = vmatprep.subr.mxu0 %v224
    %1372 = vmatpush1.msra.mxu0 %v223
    %1373 = vmatprep.subr.mxu0 %v236
    %1374 = vmatpush1.msra.mxu0 %v235
    %1375 = vmatprep.subr.mxu0 %v248
    %1376 = vmatpush1.msra.mxu0 %v247
    %1377 = vmatprep.subr.mxu0 %v260
    %1378 = vmatpush1.msra.mxu0 %v259
    %1379 = vmatprep.subr.mxu0 %v272
    %1380 = vmatpush1.msra.mxu0 %v271
    %1381 = vmatprep.subr.mxu0 %v284
    %1382 = vmatpush1.msra.mxu0 %v283
    %1383 = vmatprep.subr.mxu0 %v296
    %1384 = vmatpush1.msra.mxu0 %v295
    %1385 = vmatprep.subr.mxu0 %v308
    %1386 = vmatpush1.msra.mxu0 %v307
    %1387 = vmatprep.subr.mxu0 %v320
    %1388 = vmatpush1.msra.mxu0 %v319
    %1389 = vmatprep.subr.mxu0 %v332
    %1390 = vmatpush1.msra.mxu0 %v331
    %1391 = vmatprep.subr.mxu0 %v344
    %1392 = vmatpush1.msra.mxu0 %v343
    %1393 = vmatprep.subr.mxu0 %v356
    %1394 = vmatpush1.msra.mxu0 %v355
    %1395 = vmatprep.subr.mxu0 %v368
    %1396 = vmatpush1.msra.mxu0 %v367
    %1397 = vmatprep.subr.mxu0 %v380
    %1398 = vmatpush1.msra.mxu0 %v379
    %1399 = vmatprep.subr.mxu0 %v392
    %1400 = vmatpush1.msra.mxu0 %v391
    %1401 = vmatprep.subr.mxu0 %v404
    %1402 = vmatpush1.msra.mxu0 %v403
    %1403 = vmatprep.subr.mxu0 %v416
    %1404 = vmatpush1.msra.mxu0 %v415
    %1405 = vmatprep.subr.mxu0 %v428
    %1406 = vmatpush1.msra.mxu0 %v427
    %1407 = vmatprep.subr.mxu0 %v440
    %1408 = vmatpush1.msra.mxu0 %v439
    %1409 = vmatprep.subr.mxu0 %v452
    %1410 = vmatpush1.msra.mxu0 %v451
    %1411 = vmatprep.subr.mxu0 %v464
    %1412 = vmatpush1.msra.mxu0 %v463
    %1413 = vmatprep.subr.mxu0 %v476
    %1414 = vmatpush1.msra.mxu0 %v475
    %1415 = vmatprep.mubr.f32.mxu0 %v90
    %1416 = vmatmul.mubr.f32.gmra.mrb[0].mxu0 %v89
    %v1417 = vpop.f32.mrb[0].mxu0
    %v1418 = vadd.f32 %v710, %v1417
    %v1419 = vpop.f32.mrb[0].mxu0
    %v1420 = vadd.f32 %v714, %v1419
    %1421 = vmatprep.mubr.f32.mxu0 %v93
    %1422 = vmatmul.mubr.f32.gmra.mrb[0].mxu0 %v92
    %v1423 = vpop.f32.mrb[0].mxu0
    %v1424 = vadd.f32 %v710, %v1423
    %v1425 = vpop.f32.mrb[0].mxu0
    %v1426 = vadd.f32 %v714, %v1425
    %1427 = vdwg.mxu0
    %1428 = vmatprep.subr.mxu0 %v488
    %1429 = vmatpush1.msra.mxu0 %v487
    %1430 = vmatprep.subr.mxu0 %v500
    %1431 = vmatpush1.msra.mxu0 %v499
    %1432 = vmatprep.subr.mxu0 %v512
    %1433 = vmatpush1.msra.mxu0 %v511
    %1434 = vmatprep.subr.mxu0 %v524
    %1435 = vmatpush1.msra.mxu0 %v523
    %1436 = vmatprep.subr.mxu0 %v536
    %1437 = vmatpush1.msra.mxu0 %v535
    %1438 = vmatprep.subr.mxu0 %v548
    %1439 = vmatpush1.msra.mxu0 %v547
    %1440 = vmatprep.subr.mxu0 %v560
    %1441 = vmatpush1.msra.mxu0 %v559
    %1442 = vmatprep.subr.mxu0 %v572
    %1443 = vmatpush1.msra.mxu0 %v571
    %1444 = vmatprep.subr.mxu0 %v584
    %1445 = vmatpush1.msra.mxu0 %v583
    %1446 = vmatprep.subr.mxu0 %v596
    %1447 = vmatpush1.msra.mxu0 %v595
    %1448 = vmatprep.subr.mxu0 %v608
    %1449 = vmatpush1.msra.mxu0 %v607
    %1450 = vmatprep.subr.mxu0 %v620
    %1451 = vmatpush1.msra.mxu0 %v619
    %1452 = vmatprep.subr.mxu0 %v632
    %1453 = vmatpush1.msra.mxu0 %v631
    %1454 = vmatprep.subr.mxu0 %v644
    %1455 = vmatpush1.msra.mxu0 %v643
    %1456 = vmatprep.subr.mxu0 %v656
    %1457 = vmatpush1.msra.mxu0 %v655
    %1458 = vmatprep.subr.mxu0 %v668
    %1459 = vmatpush1.msra.mxu0 %v667
    %1460 = vmatprep.subr.mxu0 0.0
    %1461 = vmatpush1.msra.mxu0 0.0
    %1462 = vmatprep.subr.mxu0 0.0
    %1463 = vmatpush1.msra.mxu0 0.0
    %1464 = vmatprep.subr.mxu0 0.0
    %1465 = vmatpush1.msra.mxu0 0.0
    %1466 = vmatprep.subr.mxu0 0.0
    %1467 = vmatpush1.msra.mxu0 0.0
    %1468 = vmatprep.subr.mxu0 0.0
    %1469 = vmatpush1.msra.mxu0 0.0
    %1470 = vmatprep.subr.mxu0 0.0
    %1471 = vmatpush1.msra.mxu0 0.0
    %1472 = vmatprep.subr.mxu0 0.0
    %1473 = vmatpush1.msra.mxu0 0.0
    %1474 = vmatprep.subr.mxu0 0.0
    %1475 = vmatpush1.msra.mxu0 0.0
    %1476 = vmatprep.subr.mxu0 0.0
    %1477 = vmatpush1.msra.mxu0 0.0
    %1478 = vmatprep.subr.mxu0 0.0
    %1479 = vmatpush1.msra.mxu0 0.0
    %1480 = vmatprep.subr.mxu0 0.0
    %1481 = vmatpush1.msra.mxu0 0.0
    %1482 = vmatprep.subr.mxu0 0.0
    %1483 = vmatpush1.msra.mxu0 0.0
    %1484 = vmatprep.subr.mxu0 0.0
    %1485 = vmatpush1.msra.mxu0 0.0
    %1486 = vmatprep.subr.mxu0 0.0
    %1487 = vmatpush1.msra.mxu0 0.0
    %1488 = vmatprep.subr.mxu0 0.0
    %1489 = vmatpush1.msra.mxu0 0.0
    %1490 = vmatprep.subr.mxu0 0.0
    %1491 = vmatpush1.msra.mxu0 0.0
    %1492 = vmatprep.mubr.f32.mxu0 0.0
    %1493 = vmatmul.mubr.f32.gmra.mrb[0].mxu0 %v91
    %v1494 = vpop.f32.mrb[0].mxu0
    %v1495 = vadd.f32 %v1418, %v1494
    %v1496 = vpop.f32.mrb[0].mxu0
    %v1497 = vadd.f32 %v1420, %v1496
    %1498 = vmatprep.mubr.f32.mxu0 0.0
    %1499 = vmatmul.mubr.f32.gmra.mrb[0].mxu0 %v94
    %v1500 = vpop.f32.mrb[0].mxu0
    %v1501 = vadd.f32 %v1424, %v1500
    %v1502 = vpop.f32.mrb[0].mxu0
    %v1503 = vadd.f32 %v1426, %v1502
    %1504 = vdwg.mxu0
    %1505 = vmatprep.subr.mxu0 %v106
    %1506 = vmatpush1.msra.mxu0 %v105
    %1507 = vmatprep.subr.mxu0 %v118
    %1508 = vmatpush1.msra.mxu0 %v117
    %1509 = vmatprep.subr.mxu0 %v130
    %1510 = vmatpush1.msra.mxu0 %v129
    %1511 = vmatprep.subr.mxu0 %v142
    %1512 = vmatpush1.msra.mxu0 %v141
    %1513 = vmatprep.subr.mxu0 %v154
    %1514 = vmatpush1.msra.mxu0 %v153
    %1515 = vmatprep.subr.mxu0 %v166
    %1516 = vmatpush1.msra.mxu0 %v165
    %1517 = vmatprep.subr.mxu0 %v178
    %1518 = vmatpush1.msra.mxu0 %v177
    %1519 = vmatprep.subr.mxu0 %v190
    %1520 = vmatpush1.msra.mxu0 %v189
    %1521 = vmatprep.subr.mxu0 %v202
    %1522 = vmatpush1.msra.mxu0 %v201
    %1523 = vmatprep.subr.mxu0 %v214
    %1524 = vmatpush1.msra.mxu0 %v213
    %1525 = vmatprep.subr.mxu0 %v226
    %1526 = vmatpush1.msra.mxu0 %v225
    %1527 = vmatprep.subr.mxu0 %v238
    %1528 = vmatpush1.msra.mxu0 %v237
    %1529 = vmatprep.subr.mxu0 %v250
    %1530 = vmatpush1.msra.mxu0 %v249
    %1531 = vmatprep.subr.mxu0 %v262
    %1532 = vmatpush1.msra.mxu0 %v261
    %1533 = vmatprep.subr.mxu0 %v274
    %1534 = vmatpush1.msra.mxu0 %v273
    %1535 = vmatprep.subr.mxu0 %v286
    %1536 = vmatpush1.msra.mxu0 %v285
    %1537 = vmatprep.subr.mxu0 %v298
    %1538 = vmatpush1.msra.mxu0 %v297
    %1539 = vmatprep.subr.mxu0 %v310
    %1540 = vmatpush1.msra.mxu0 %v309
    %1541 = vmatprep.subr.mxu0 %v322
    %1542 = vmatpush1.msra.mxu0 %v321
    %1543 = vmatprep.subr.mxu0 %v334
    %1544 = vmatpush1.msra.mxu0 %v333
    %1545 = vmatprep.subr.mxu0 %v346
    %1546 = vmatpush1.msra.mxu0 %v345
    %1547 = vmatprep.subr.mxu0 %v358
    %1548 = vmatpush1.msra.mxu0 %v357
    %1549 = vmatprep.subr.mxu0 %v370
    %1550 = vmatpush1.msra.mxu0 %v369
    %1551 = vmatprep.subr.mxu0 %v382
    %1552 = vmatpush1.msra.mxu0 %v381
    %1553 = vmatprep.subr.mxu0 %v394
    %1554 = vmatpush1.msra.mxu0 %v393
    %1555 = vmatprep.subr.mxu0 %v406
    %1556 = vmatpush1.msra.mxu0 %v405
    %1557 = vmatprep.subr.mxu0 %v418
    %1558 = vmatpush1.msra.mxu0 %v417
    %1559 = vmatprep.subr.mxu0 %v430
    %1560 = vmatpush1.msra.mxu0 %v429
    %1561 = vmatprep.subr.mxu0 %v442
    %1562 = vmatpush1.msra.mxu0 %v441
    %1563 = vmatprep.subr.mxu0 %v454
    %1564 = vmatpush1.msra.mxu0 %v453
    %1565 = vmatprep.subr.mxu0 %v466
    %1566 = vmatpush1.msra.mxu0 %v465
    %1567 = vmatprep.subr.mxu0 %v478
    %1568 = vmatpush1.msra.mxu0 %v477
    %1569 = vmatprep.mubr.f32.mxu0 %v90
    %1570 = vmatmul.mubr.f32.gmra.mrb[0].mxu0 %v89
    %v1571 = vpop.f32.mrb[0].mxu0
    %v1572 = vadd.f32 %v718, %v1571
    %v1573 = vpop.f32.mrb[0].mxu0
    %v1574 = vadd.f32 %v722, %v1573
    %1575 = vmatprep.mubr.f32.mxu0 %v93
    %1576 = vmatmul.mubr.f32.gmra.mrb[0].mxu0 %v92
    %v1577 = vpop.f32.mrb[0].mxu0
    %v1578 = vadd.f32 %v718, %v1577
    %v1579 = vpop.f32.mrb[0].mxu0
    %v1580 = vadd.f32 %v722, %v1579
    %1581 = vdwg.mxu0
    %1582 = vmatprep.subr.mxu0 %v490
    %1583 = vmatpush1.msra.mxu0 %v489
    %1584 = vmatprep.subr.mxu0 %v502
    %1585 = vmatpush1.msra.mxu0 %v501
    %1586 = vmatprep.subr.mxu0 %v514
    %1587 = vmatpush1.msra.mxu0 %v513
    %1588 = vmatprep.subr.mxu0 %v526
    %1589 = vmatpush1.msra.mxu0 %v525
    %1590 = vmatprep.subr.mxu0 %v538
    %1591 = vmatpush1.msra.mxu0 %v537
    %1592 = vmatprep.subr.mxu0 %v550
    %1593 = vmatpush1.msra.mxu0 %v549
    %1594 = vmatprep.subr.mxu0 %v562
    %1595 = vmatpush1.msra.mxu0 %v561
    %1596 = vmatprep.subr.mxu0 %v574
    %1597 = vmatpush1.msra.mxu0 %v573
    %1598 = vmatprep.subr.mxu0 %v586
    %1599 = vmatpush1.msra.mxu0 %v585
    %1600 = vmatprep.subr.mxu0 %v598
    %1601 = vmatpush1.msra.mxu0 %v597
    %1602 = vmatprep.subr.mxu0 %v610
    %1603 = vmatpush1.msra.mxu0 %v609
    %1604 = vmatprep.subr.mxu0 %v622
    %1605 = vmatpush1.msra.mxu0 %v621
    %1606 = vmatprep.subr.mxu0 %v634
    %1607 = vmatpush1.msra.mxu0 %v633
    %1608 = vmatprep.subr.mxu0 %v646
    %1609 = vmatpush1.msra.mxu0 %v645
    %1610 = vmatprep.subr.mxu0 %v658
    %1611 = vmatpush1.msra.mxu0 %v657
    %1612 = vmatprep.subr.mxu0 %v670
    %1613 = vmatpush1.msra.mxu0 %v669
    %1614 = vmatprep.subr.mxu0 0.0
    %1615 = vmatpush1.msra.mxu0 0.0
    %1616 = vmatprep.subr.mxu0 0.0
    %1617 = vmatpush1.msra.mxu0 0.0
    %1618 = vmatprep.subr.mxu0 0.0
    %1619 = vmatpush1.msra.mxu0 0.0
    %1620 = vmatprep.subr.mxu0 0.0
    %1621 = vmatpush1.msra.mxu0 0.0
    %1622 = vmatprep.subr.mxu0 0.0
    %1623 = vmatpush1.msra.mxu0 0.0
    %1624 = vmatprep.subr.mxu0 0.0
    %1625 = vmatpush1.msra.mxu0 0.0
    %1626 = vmatprep.subr.mxu0 0.0
    %1627 = vmatpush1.msra.mxu0 0.0
    %1628 = vmatprep.subr.mxu0 0.0
    %1629 = vmatpush1.msra.mxu0 0.0
    %1630 = vmatprep.subr.mxu0 0.0
    %1631 = vmatpush1.msra.mxu0 0.0
    %1632 = vmatprep.subr.mxu0 0.0
    %1633 = vmatpush1.msra.mxu0 0.0
    %1634 = vmatprep.subr.mxu0 0.0
    %1635 = vmatpush1.msra.mxu0 0.0
    %1636 = vmatprep.subr.mxu0 0.0
    %1637 = vmatpush1.msra.mxu0 0.0
    %1638 = vmatprep.subr.mxu0 0.0
    %1639 = vmatpush1.msra.mxu0 0.0
    %1640 = vmatprep.subr.mxu0 0.0
    %1641 = vmatpush1.msra.mxu0 0.0
    %1642 = vmatprep.subr.mxu0 0.0
    %1643 = vmatpush1.msra.mxu0 0.0
    %1644 = vmatprep.subr.mxu0 0.0
    %1645 = vmatpush1.msra.mxu0 0.0
    %1646 = vmatprep.mubr.f32.mxu0 0.0
    %1647 = vmatmul.mubr.f32.gmra.mrb[0].mxu0 %v91
    %v1648 = vpop.f32.mrb[0].mxu0
    %v1649 = vadd.f32 %v1572, %v1648
    %v1650 = vpop.f32.mrb[0].mxu0
    %v1651 = vadd.f32 %v1574, %v1650
    %1652 = vmatprep.mubr.f32.mxu0 0.0
    %1653 = vmatmul.mubr.f32.gmra.mrb[0].mxu0 %v94
    %v1654 = vpop.f32.mrb[0].mxu0
    %v1655 = vadd.f32 %v1578, %v1654
    %v1656 = vpop.f32.mrb[0].mxu0
    %v1657 = vadd.f32 %v1580, %v1656
    %1658 = vdwg.mxu0
    %v1659 = vmax.f32 %v879, 0.0
    %v1660 = vmax.f32 %v881, 0.0
    %v1661 = vmax.f32 %v1033, 0.0
    %v1662 = vmax.f32 %v1035, 0.0
    %v1663 = vmax.f32 %v1187, 0.0
    %v1664 = vmax.f32 %v1189, 0.0
    %v1665 = vmax.f32 %v1341, 0.0
    %v1666 = vmax.f32 %v1343, 0.0
    %v1667 = vmax.f32 %v1495, 0.0
    %v1668 = vmax.f32 %v1497, 0.0
    %v1669 = vmax.f32 %v1649, 0.0
    %v1670 = vmax.f32 %v1651, 0.0
    %v1671 = vmax.f32 %v885, 0.0
    %v1672 = vmax.f32 %v887, 0.0
    %v1673 = vmax.f32 %v1039, 0.0
    %v1674 = vmax.f32 %v1041, 0.0
    %v1675 = vmax.f32 %v1193, 0.0
    %v1676 = vmax.f32 %v1195, 0.0
    %v1677 = vmax.f32 %v1347, 0.0
    %v1678 = vmax.f32 %v1349, 0.0
    %v1679 = vmax.f32 %v1501, 0.0
    %v1680 = vmax.f32 %v1503, 0.0
    %v1681 = vmax.f32 %v1655, 0.0
    %v1682 = vmax.f32 %v1657, 0.0
    %v1683 = vld [vmem:[#allocation9] sm:$0xff]
    %v1684 = vld [vmem:[#allocation9 + $0x8] sm:$0xff]
    %v1685 = vld [vmem:[#allocation9 + $0x10] sm:$0xff]
    %v1686 = vld [vmem:[#allocation9 + $0x18] sm:$0xff]
    %v1687 = vld [vmem:[#allocation9 + $0x20] sm:$0xff]
    %v1688 = vld [vmem:[#allocation9 + $0x28] sm:$0xff]
    %v1689 = vld [vmem:[#allocation9 + $0x30] sm:$0xff]
    %v1690 = vld [vmem:[#allocation9 + $0x38] sm:$0xff]
    %v1691 = vld [vmem:[#allocation9 + $0x40] sm:$0xff]
    %v1692 = vld [vmem:[#allocation9 + $0x48] sm:$0xff]
    %v1693 = vld [vmem:[#allocation9 + $0x50] sm:$0xff]
    %v1694 = vld [vmem:[#allocation9 + $0x58] sm:$0xff]
    %v1695 = vld [vmem:[#allocation9 + $0x60] sm:$0xff]
    %v1696 = vld [vmem:[#allocation9 + $0x68] sm:$0xff]
    %v1697 = vld [vmem:[#allocation9 + $0x70] sm:$0xff]
    %v1698 = vld [vmem:[#allocation9 + $0x78] sm:$0xff]
    %v1699 = vld [vmem:[#allocation9 + $0x80] sm:$0xff]
    %v1700 = vld [vmem:[#allocation9 + $0x88] sm:$0xff]
    %v1701 = vld [vmem:[#allocation9 + $0x90] sm:$0xff]
    %v1702 = vld [vmem:[#allocation9 + $0x98] sm:$0xff]
    %v1703 = vld [vmem:[#allocation9 + $0xa0] sm:$0xff]
    %v1704 = vld [vmem:[#allocation9 + $0xa8] sm:$0xff]
    %v1705 = vld [vmem:[#allocation9 + $0xb0] sm:$0xff]
    %v1706 = vld [vmem:[#allocation9 + $0xb8] sm:$0xff]
    %v1707 = vld [vmem:[#allocation9 + $0xc0] sm:$0xff]
    %v1708 = vld [vmem:[#allocation9 + $0xc8] sm:$0xff]
    %v1709 = vld [vmem:[#allocation9 + $0xd0] sm:$0xff]
    %v1710 = vld [vmem:[#allocation9 + $0xd8] sm:$0xff]
    %v1711 = vld [vmem:[#allocation9 + $0xe0] sm:$0xff]
    %v1712 = vld [vmem:[#allocation9 + $0xe8] sm:$0xff]
    %v1713 = vld [vmem:[#allocation9 + $0xf0] sm:$0xff]
    %v1714 = vld [vmem:[#allocation9 + $0xf8] sm:$0xff]
    %v1715 = vld [vmem:[#allocation9 + $0x100] sm:$0xff]
    %v1716 = vld [vmem:[#allocation9 + $0x108] sm:$0xff]
    %v1717 = vld [vmem:[#allocation9 + $0x110] sm:$0xff]
    %v1718 = vld [vmem:[#allocation9 + $0x118] sm:$0xff]
    %v1719 = vld [vmem:[#allocation9 + $0x120] sm:$0xff]
    %v1720 = vld [vmem:[#allocation9 + $0x128] sm:$0xff]
    %v1721 = vld [vmem:[#allocation9 + $0x130] sm:$0xff]
    %v1722 = vld [vmem:[#allocation9 + $0x138] sm:$0xff]
    %v1723 = vld [vmem:[#allocation9 + $0x140] sm:$0xff]
    %v1724 = vld [vmem:[#allocation9 + $0x148] sm:$0xff]
    %v1725 = vld [vmem:[#allocation9 + $0x150] sm:$0xff]
    %v1726 = vld [vmem:[#allocation9 + $0x158] sm:$0xff]
    %v1727 = vld [vmem:[#allocation9 + $0x160] sm:$0xff]
    %v1728 = vld [vmem:[#allocation9 + $0x168] sm:$0xff]
    %v1729 = vld [vmem:[#allocation9 + $0x170] sm:$0xff]
    %v1730 = vld [vmem:[#allocation9 + $0x178] sm:$0xff]
    %v1731 = vld [vmem:[#allocation9 + $0x180] sm:$0xff]
    %v1732 = vld [vmem:[#allocation9 + $0x188] sm:$0xff]
    %v1733 = vld [vmem:[#allocation9 + $0x190] sm:$0xff]
    %v1734 = vld [vmem:[#allocation9 + $0x198] sm:$0xff]
    %v1735 = vld [vmem:[#allocation9 + $0x1a0] sm:$0xff]
    %v1736 = vld [vmem:[#allocation9 + $0x1a8] sm:$0xff]
    %v1737 = vld [vmem:[#allocation9 + $0x1b0] sm:$0xff]
    %v1738 = vld [vmem:[#allocation9 + $0x1b8] sm:$0xff]
    %v1739 = vld [vmem:[#allocation9 + $0x1c0] sm:$0xff]
    %v1740 = vld [vmem:[#allocation9 + $0x1c8] sm:$0xff]
    %v1741 = vld [vmem:[#allocation9 + $0x1d0] sm:$0xff]
    %v1742 = vld [vmem:[#allocation9 + $0x1d8] sm:$0xff]
    %v1743 = vld [vmem:[#allocation9 + $0x1e0] sm:$0xff]
    %v1744 = vld [vmem:[#allocation9 + $0x1e8] sm:$0xff]
    %v1745 = vld [vmem:[#allocation9 + $0x1f0] sm:$0xff]
    %v1746 = vld [vmem:[#allocation9 + $0x1f8] sm:$0xff]
    %v1747 = vld [vmem:[#allocation9 + $0x200] sm:$0xff]
    %v1748 = vld [vmem:[#allocation9 + $0x208] sm:$0xff]
    %v1749 = vld [vmem:[#allocation9 + $0x210] sm:$0xff]
    %v1750 = vld [vmem:[#allocation9 + $0x218] sm:$0xff]
    %v1751 = vld [vmem:[#allocation9 + $0x220] sm:$0xff]
    %v1752 = vld [vmem:[#allocation9 + $0x228] sm:$0xff]
    %v1753 = vld [vmem:[#allocation9 + $0x230] sm:$0xff]
    %v1754 = vld [vmem:[#allocation9 + $0x238] sm:$0xff]
    %v1755 = vld [vmem:[#allocation9 + $0x240] sm:$0xff]
    %v1756 = vld [vmem:[#allocation9 + $0x248] sm:$0xff]
    %v1757 = vld [vmem:[#allocation9 + $0x250] sm:$0xff]
    %v1758 = vld [vmem:[#allocation9 + $0x258] sm:$0xff]
    %v1759 = vld [vmem:[#allocation9 + $0x260] sm:$0xff]
    %v1760 = vld [vmem:[#allocation9 + $0x268] sm:$0xff]
    %v1761 = vld [vmem:[#allocation9 + $0x270] sm:$0xff]
    %v1762 = vld [vmem:[#allocation9 + $0x278] sm:$0xff]
    %v1763 = vld [vmem:[#allocation9 + $0x280] sm:$0xff]
    %v1764 = vld [vmem:[#allocation9 + $0x288] sm:$0xff]
    %v1765 = vld [vmem:[#allocation9 + $0x290] sm:$0xff]
    %v1766 = vld [vmem:[#allocation9 + $0x298] sm:$0xff]
    %v1767 = vld [vmem:[#allocation9 + $0x2a0] sm:$0xff]
    %v1768 = vld [vmem:[#allocation9 + $0x2a8] sm:$0xff]
    %v1769 = vld [vmem:[#allocation9 + $0x2b0] sm:$0xff]
    %v1770 = vld [vmem:[#allocation9 + $0x2b8] sm:$0xff]
    %v1771 = vld [vmem:[#allocation9 + $0x2c0] sm:$0xff]
    %v1772 = vld [vmem:[#allocation9 + $0x2c8] sm:$0xff]
    %v1773 = vld [vmem:[#allocation9 + $0x2d0] sm:$0xff]
    %v1774 = vld [vmem:[#allocation9 + $0x2d8] sm:$0xff]
    %v1775 = vld [vmem:[#allocation9 + $0x2e0] sm:$0xff]
    %v1776 = vld [vmem:[#allocation9 + $0x2e8] sm:$0xff]
    %v1777 = vld [vmem:[#allocation9 + $0x2f0] sm:$0xff]
    %v1778 = vld [vmem:[#allocation9 + $0x2f8] sm:$0xff]
    %v1779 = vld [vmem:[#allocation9 + $0x300] sm:$0xff]
    %v1780 = vld [vmem:[#allocation9 + $0x308] sm:$0xff]
    %v1781 = vld [vmem:[#allocation9 + $0x310] sm:$0xff]
    %v1782 = vld [vmem:[#allocation9 + $0x318] sm:$0xff]
    %v1783 = vld [vmem:[#allocation9 + $0x320] sm:$0xff]
    %v1784 = vld [vmem:[#allocation9 + $0x328] sm:$0xff]
    %v1785 = vld [vmem:[#allocation9 + $0x330] sm:$0xff]
    %v1786 = vld [vmem:[#allocation9 + $0x338] sm:$0xff]
    %v1787 = vld [vmem:[#allocation9 + $0x340] sm:$0xff]
    %v1788 = vld [vmem:[#allocation9 + $0x348] sm:$0xff]
    %v1789 = vld [vmem:[#allocation9 + $0x350] sm:$0xff]
    %v1790 = vld [vmem:[#allocation9 + $0x358] sm:$0xff]
    %v1791 = vld [vmem:[#allocation9 + $0x360] sm:$0xff]
    %v1792 = vld [vmem:[#allocation9 + $0x368] sm:$0xff]
    %v1793 = vld [vmem:[#allocation9 + $0x370] sm:$0xff]
    %v1794 = vld [vmem:[#allocation9 + $0x378] sm:$0xff]
    %v1795 = vld [vmem:[#allocation9 + $0x380] sm:$0xff]
    %v1796 = vld [vmem:[#allocation9 + $0x388] sm:$0xff]
    %v1797 = vld [vmem:[#allocation9 + $0x390] sm:$0xff]
    %v1798 = vld [vmem:[#allocation9 + $0x398] sm:$0xff]
    %v1799 = vld [vmem:[#allocation9 + $0x3a0] sm:$0xff]
    %v1800 = vld [vmem:[#allocation9 + $0x3a8] sm:$0xff]
    %v1801 = vld [vmem:[#allocation9 + $0x3b0] sm:$0xff]
    %v1802 = vld [vmem:[#allocation9 + $0x3b8] sm:$0xff]
    %v1803 = vld [vmem:[#allocation9 + $0x3c0] sm:$0xff]
    %v1804 = vld [vmem:[#allocation9 + $0x3c8] sm:$0xff]
    %v1805 = vld [vmem:[#allocation9 + $0x3d0] sm:$0xff]
    %v1806 = vld [vmem:[#allocation9 + $0x3d8] sm:$0xff]
    %v1807 = vld [vmem:[#allocation9 + $0x3e0] sm:$0xff]
    %v1808 = vld [vmem:[#allocation9 + $0x3e8] sm:$0xff]
    %v1809 = vld [vmem:[#allocation9 + $0x3f0] sm:$0xff]
    %v1810 = vld [vmem:[#allocation9 + $0x3f8] sm:$0xff]
    %v1811 = vld [vmem:[#allocation9 + $0x400] sm:$0xff]
    %v1812 = vld [vmem:[#allocation9 + $0x408] sm:$0xff]
    %v1813 = vld [vmem:[#allocation9 + $0x410] sm:$0xff]
    %v1814 = vld [vmem:[#allocation9 + $0x418] sm:$0xff]
    %v1815 = vld [vmem:[#allocation9 + $0x420] sm:$0xff]
    %v1816 = vld [vmem:[#allocation9 + $0x428] sm:$0xff]
    %v1817 = vld [vmem:[#allocation9 + $0x430] sm:$0xff]
    %v1818 = vld [vmem:[#allocation9 + $0x438] sm:$0xff]
    %v1819 = vld [vmem:[#allocation9 + $0x440] sm:$0xff]
    %v1820 = vld [vmem:[#allocation9 + $0x448] sm:$0xff]
    %v1821 = vld [vmem:[#allocation9 + $0x450] sm:$0xff]
    %v1822 = vld [vmem:[#allocation9 + $0x458] sm:$0xff]
    %v1823 = vld [vmem:[#allocation9 + $0x460] sm:$0xff]
    %v1824 = vld [vmem:[#allocation9 + $0x468] sm:$0xff]
    %v1825 = vld [vmem:[#allocation9 + $0x470] sm:$0xff]
    %v1826 = vld [vmem:[#allocation9 + $0x478] sm:$0xff]
    %v1827 = vld [vmem:[#allocation9 + $0x480] sm:$0xff]
    %v1828 = vld [vmem:[#allocation9 + $0x488] sm:$0xff]
    %v1829 = vld [vmem:[#allocation9 + $0x490] sm:$0xff]
    %v1830 = vld [vmem:[#allocation9 + $0x498] sm:$0xff]
    %v1831 = vld [vmem:[#allocation9 + $0x4a0] sm:$0xff]
    %v1832 = vld [vmem:[#allocation9 + $0x4a8] sm:$0xff]
    %v1833 = vld [vmem:[#allocation9 + $0x4b0] sm:$0xff]
    %v1834 = vld [vmem:[#allocation9 + $0x4b8] sm:$0xff]
    %v1835 = vld [vmem:[#allocation9 + $0x4c0] sm:$0xff]
    %v1836 = vld [vmem:[#allocation9 + $0x4c8] sm:$0xff]
    %v1837 = vld [vmem:[#allocation9 + $0x4d0] sm:$0xff]
    %v1838 = vld [vmem:[#allocation9 + $0x4d8] sm:$0xff]
    %v1839 = vld [vmem:[#allocation9 + $0x4e0] sm:$0xff]
    %v1840 = vld [vmem:[#allocation9 + $0x4e8] sm:$0xff]
    %v1841 = vld [vmem:[#allocation9 + $0x4f0] sm:$0xff]
    %v1842 = vld [vmem:[#allocation9 + $0x4f8] sm:$0xff]
    %v1843 = vld [vmem:[#allocation9 + $0x500] sm:$0xff]
    %v1844 = vld [vmem:[#allocation9 + $0x508] sm:$0xff]
    %v1845 = vld [vmem:[#allocation9 + $0x510] sm:$0xff]
    %v1846 = vld [vmem:[#allocation9 + $0x518] sm:$0xff]
    %v1847 = vld [vmem:[#allocation9 + $0x520] sm:$0xff]
    %v1848 = vld [vmem:[#allocation9 + $0x528] sm:$0xff]
    %v1849 = vld [vmem:[#allocation9 + $0x530] sm:$0xff]
    %v1850 = vld [vmem:[#allocation9 + $0x538] sm:$0xff]
    %v1851 = vld [vmem:[#allocation9 + $0x540] sm:$0xff]
    %v1852 = vld [vmem:[#allocation9 + $0x548] sm:$0xff]
    %v1853 = vld [vmem:[#allocation9 + $0x550] sm:$0xff]
    %v1854 = vld [vmem:[#allocation9 + $0x558] sm:$0xff]
    %v1855 = vld [vmem:[#allocation9 + $0x560] sm:$0xff]
    %v1856 = vld [vmem:[#allocation9 + $0x568] sm:$0xff]
    %v1857 = vld [vmem:[#allocation9 + $0x570] sm:$0xff]
    %v1858 = vld [vmem:[#allocation9 + $0x578] sm:$0xff]
    %v1859 = vld [vmem:[#allocation9 + $0x580] sm:$0xff]
    %v1860 = vld [vmem:[#allocation9 + $0x588] sm:$0xff]
    %v1861 = vld [vmem:[#allocation9 + $0x590] sm:$0xff]
    %v1862 = vld [vmem:[#allocation9 + $0x598] sm:$0xff]
    %v1863 = vld [vmem:[#allocation9 + $0x5a0] sm:$0xff]
    %v1864 = vld [vmem:[#allocation9 + $0x5a8] sm:$0xff]
    %v1865 = vld [vmem:[#allocation9 + $0x5b0] sm:$0xff]
    %v1866 = vld [vmem:[#allocation9 + $0x5b8] sm:$0xff]
    %v1867 = vld [vmem:[#allocation9 + $0x5c0] sm:$0xff]
    %v1868 = vld [vmem:[#allocation9 + $0x5c8] sm:$0xff]
    %v1869 = vld [vmem:[#allocation9 + $0x5d0] sm:$0xff]
    %v1870 = vld [vmem:[#allocation9 + $0x5d8] sm:$0xff]
    %v1871 = vld [vmem:[#allocation9 + $0x5e0] sm:$0xff]
    %v1872 = vld [vmem:[#allocation9 + $0x5e8] sm:$0xff]
    %v1873 = vld [vmem:[#allocation9 + $0x5f0] sm:$0xff]
    %v1874 = vld [vmem:[#allocation9 + $0x5f8] sm:$0xff]
    %v1875 = vld [vmem:[#allocation9 + $0x600] sm:$0xff]
    %v1876 = vld [vmem:[#allocation9 + $0x608] sm:$0xff]
    %v1877 = vld [vmem:[#allocation9 + $0x610] sm:$0xff]
    %v1878 = vld [vmem:[#allocation9 + $0x618] sm:$0xff]
    %v1879 = vld [vmem:[#allocation9 + $0x620] sm:$0xff]
    %v1880 = vld [vmem:[#allocation9 + $0x628] sm:$0xff]
    %v1881 = vld [vmem:[#allocation9 + $0x630] sm:$0xff]
    %v1882 = vld [vmem:[#allocation9 + $0x638] sm:$0xff]
    %v1883 = vld [vmem:[#allocation9 + $0x640] sm:$0xff]
    %v1884 = vld [vmem:[#allocation9 + $0x648] sm:$0xff]
    %v1885 = vld [vmem:[#allocation9 + $0x650] sm:$0xff]
    %v1886 = vld [vmem:[#allocation9 + $0x658] sm:$0xff]
    %v1887 = vld [vmem:[#allocation9 + $0x660] sm:$0xff]
    %v1888 = vld [vmem:[#allocation9 + $0x668] sm:$0xff]
    %v1889 = vld [vmem:[#allocation9 + $0x670] sm:$0xff]
    %v1890 = vld [vmem:[#allocation9 + $0x678] sm:$0xff]
    %v1891 = vld [vmem:[#allocation9 + $0x680] sm:$0xff]
    %v1892 = vld [vmem:[#allocation9 + $0x688] sm:$0xff]
    %v1893 = vld [vmem:[#allocation9 + $0x690] sm:$0xff]
    %v1894 = vld [vmem:[#allocation9 + $0x698] sm:$0xff]
    %v1895 = vld [vmem:[#allocation9 + $0x6a0] sm:$0xff]
    %v1896 = vld [vmem:[#allocation9 + $0x6a8] sm:$0xff]
    %v1897 = vld [vmem:[#allocation9 + $0x6b0] sm:$0xff]
    %v1898 = vld [vmem:[#allocation9 + $0x6b8] sm:$0xff]
    %v1899 = vld [vmem:[#allocation9 + $0x6c0] sm:$0xff]
    %v1900 = vld [vmem:[#allocation9 + $0x6c8] sm:$0xff]
    %v1901 = vld [vmem:[#allocation9 + $0x6d0] sm:$0xff]
    %v1902 = vld [vmem:[#allocation9 + $0x6d8] sm:$0xff]
    %v1903 = vld [vmem:[#allocation9 + $0x6e0] sm:$0xff]
    %v1904 = vld [vmem:[#allocation9 + $0x6e8] sm:$0xff]
    %v1905 = vld [vmem:[#allocation9 + $0x6f0] sm:$0xff]
    %v1906 = vld [vmem:[#allocation9 + $0x6f8] sm:$0xff]
    %v1907 = vld [vmem:[#allocation9 + $0x700] sm:$0xff]
    %v1908 = vld [vmem:[#allocation9 + $0x708] sm:$0xff]
    %v1909 = vld [vmem:[#allocation9 + $0x710] sm:$0xff]
    %v1910 = vld [vmem:[#allocation9 + $0x718] sm:$0xff]
    %v1911 = vld [vmem:[#allocation9 + $0x720] sm:$0xff]
    %v1912 = vld [vmem:[#allocation9 + $0x728] sm:$0xff]
    %v1913 = vld [vmem:[#allocation9 + $0x730] sm:$0xff]
    %v1914 = vld [vmem:[#allocation9 + $0x738] sm:$0xff]
    %v1915 = vld [vmem:[#allocation9 + $0x740] sm:$0xff]
    %v1916 = vld [vmem:[#allocation9 + $0x748] sm:$0xff]
    %v1917 = vld [vmem:[#allocation9 + $0x750] sm:$0xff]
    %v1918 = vld [vmem:[#allocation9 + $0x758] sm:$0xff]
    %v1919 = vld [vmem:[#allocation9 + $0x760] sm:$0xff]
    %v1920 = vld [vmem:[#allocation9 + $0x768] sm:$0xff]
    %v1921 = vld [vmem:[#allocation9 + $0x770] sm:$0xff]
    %v1922 = vld [vmem:[#allocation9 + $0x778] sm:$0xff]
    %v1923 = vld [vmem:[#allocation9 + $0x780] sm:$0xff]
    %v1924 = vld [vmem:[#allocation9 + $0x788] sm:$0xff]
    %v1925 = vld [vmem:[#allocation9 + $0x790] sm:$0xff]
    %v1926 = vld [vmem:[#allocation9 + $0x798] sm:$0xff]
    %v1927 = vld [vmem:[#allocation9 + $0x7a0] sm:$0xff]
    %v1928 = vld [vmem:[#allocation9 + $0x7a8] sm:$0xff]
    %v1929 = vld [vmem:[#allocation9 + $0x7b0] sm:$0xff]
    %v1930 = vld [vmem:[#allocation9 + $0x7b8] sm:$0xff]
    %v1931 = vld [vmem:[#allocation9 + $0x7c0] sm:$0xff]
    %v1932 = vld [vmem:[#allocation9 + $0x7c8] sm:$0xff]
    %v1933 = vld [vmem:[#allocation9 + $0x7d0] sm:$0xff]
    %v1934 = vld [vmem:[#allocation9 + $0x7d8] sm:$0xff]
    %v1935 = vld [vmem:[#allocation9 + $0x7e0] sm:$0xff]
    %v1936 = vld [vmem:[#allocation9 + $0x7e8] sm:$0xff]
    %v1937 = vld [vmem:[#allocation9 + $0x7f0] sm:$0xff]
    %v1938 = vld [vmem:[#allocation9 + $0x7f8] sm:$0xff]
    %v1939 = vld [vmem:[#allocation9 + $0x800] sm:$0xff]
    %v1940 = vld [vmem:[#allocation9 + $0x808] sm:$0xff]
    %v1941 = vld [vmem:[#allocation9 + $0x810] sm:$0xff]
    %v1942 = vld [vmem:[#allocation9 + $0x818] sm:$0xff]
    %v1943 = vld [vmem:[#allocation9 + $0x820] sm:$0xff]
    %v1944 = vld [vmem:[#allocation9 + $0x828] sm:$0xff]
    %v1945 = vld [vmem:[#allocation9 + $0x830] sm:$0xff]
    %v1946 = vld [vmem:[#allocation9 + $0x838] sm:$0xff]
    %v1947 = vld [vmem:[#allocation9 + $0x840] sm:$0xff]
    %v1948 = vld [vmem:[#allocation9 + $0x848] sm:$0xff]
    %v1949 = vld [vmem:[#allocation9 + $0x850] sm:$0xff]
    %v1950 = vld [vmem:[#allocation9 + $0x858] sm:$0xff]
    %v1951 = vld [vmem:[#allocation9 + $0x860] sm:$0xff]
    %v1952 = vld [vmem:[#allocation9 + $0x868] sm:$0xff]
    %v1953 = vld [vmem:[#allocation9 + $0x870] sm:$0xff]
    %v1954 = vld [vmem:[#allocation9 + $0x878] sm:$0xff]
    %v1955 = vld [vmem:[#allocation9 + $0x880] sm:$0xff]
    %v1956 = vld [vmem:[#allocation9 + $0x888] sm:$0xff]
    %v1957 = vld [vmem:[#allocation9 + $0x890] sm:$0xff]
    %v1958 = vld [vmem:[#allocation9 + $0x898] sm:$0xff]
    %v1959 = vld [vmem:[#allocation9 + $0x8a0] sm:$0xff]
    %v1960 = vld [vmem:[#allocation9 + $0x8a8] sm:$0xff]
    %v1961 = vld [vmem:[#allocation9 + $0x8b0] sm:$0xff]
    %v1962 = vld [vmem:[#allocation9 + $0x8b8] sm:$0xff]
    %v1963 = vld [vmem:[#allocation9 + $0x8c0] sm:$0xff]
    %v1964 = vld [vmem:[#allocation9 + $0x8c8] sm:$0xff]
    %v1965 = vld [vmem:[#allocation9 + $0x8d0] sm:$0xff]
    %v1966 = vld [vmem:[#allocation9 + $0x8d8] sm:$0xff]
    %v1967 = vld [vmem:[#allocation9 + $0x8e0] sm:$0xff]
    %v1968 = vld [vmem:[#allocation9 + $0x8e8] sm:$0xff]
    %v1969 = vld [vmem:[#allocation9 + $0x8f0] sm:$0xff]
    %v1970 = vld [vmem:[#allocation9 + $0x8f8] sm:$0xff]
    %v1971 = vld [vmem:[#allocation9 + $0x900] sm:$0xff]
    %v1972 = vld [vmem:[#allocation9 + $0x908] sm:$0xff]
    %v1973 = vld [vmem:[#allocation9 + $0x910] sm:$0xff]
    %v1974 = vld [vmem:[#allocation9 + $0x918] sm:$0xff]
    %v1975 = vld [vmem:[#allocation9 + $0x920] sm:$0xff]
    %v1976 = vld [vmem:[#allocation9 + $0x928] sm:$0xff]
    %v1977 = vld [vmem:[#allocation9 + $0x930] sm:$0xff]
    %v1978 = vld [vmem:[#allocation9 + $0x938] sm:$0xff]
    %v1979 = vld [vmem:[#allocation9 + $0x940] sm:$0xff]
    %v1980 = vld [vmem:[#allocation9 + $0x948] sm:$0xff]
    %v1981 = vld [vmem:[#allocation9 + $0x950] sm:$0xff]
    %v1982 = vld [vmem:[#allocation9 + $0x958] sm:$0xff]
    %v1983 = vld [vmem:[#allocation9 + $0x960] sm:$0xff]
    %v1984 = vld [vmem:[#allocation9 + $0x968] sm:$0xff]
    %v1985 = vld [vmem:[#allocation9 + $0x970] sm:$0xff]
    %v1986 = vld [vmem:[#allocation9 + $0x978] sm:$0xff]
    %v1987 = vld [vmem:[#allocation9 + $0x980] sm:$0xff]
    %v1988 = vld [vmem:[#allocation9 + $0x988] sm:$0xff]
    %v1989 = vld [vmem:[#allocation9 + $0x990] sm:$0xff]
    %v1990 = vld [vmem:[#allocation9 + $0x998] sm:$0xff]
    %v1991 = vld [vmem:[#allocation9 + $0x9a0] sm:$0xff]
    %v1992 = vld [vmem:[#allocation9 + $0x9a8] sm:$0xff]
    %v1993 = vld [vmem:[#allocation9 + $0x9b0] sm:$0xff]
    %v1994 = vld [vmem:[#allocation9 + $0x9b8] sm:$0xff]
    %v1995 = vld [vmem:[#allocation9 + $0x9c0] sm:$0xff]
    %v1996 = vld [vmem:[#allocation9 + $0x9c8] sm:$0xff]
    %v1997 = vld [vmem:[#allocation9 + $0x9d0] sm:$0xff]
    %v1998 = vld [vmem:[#allocation9 + $0x9d8] sm:$0xff]
    %v1999 = vld [vmem:[#allocation9 + $0x9e0] sm:$0xff]
    %v2000 = vld [vmem:[#allocation9 + $0x9e8] sm:$0xff]
    %v2001 = vld [vmem:[#allocation9 + $0x9f0] sm:$0xff]
    %v2002 = vld [vmem:[#allocation9 + $0x9f8] sm:$0xff]
    %v2003 = vld [vmem:[#allocation9 + $0xa00] sm:$0xff]
    %v2004 = vld [vmem:[#allocation9 + $0xa08] sm:$0xff]
    %v2005 = vld [vmem:[#allocation9 + $0xa10] sm:$0xff]
    %v2006 = vld [vmem:[#allocation9 + $0xa18] sm:$0xff]
    %v2007 = vld [vmem:[#allocation9 + $0xa20] sm:$0xff]
    %v2008 = vld [vmem:[#allocation9 + $0xa28] sm:$0xff]
    %v2009 = vld [vmem:[#allocation9 + $0xa30] sm:$0xff]
    %v2010 = vld [vmem:[#allocation9 + $0xa38] sm:$0xff]
    %v2011 = vld [vmem:[#allocation9 + $0xa40] sm:$0xff]
    %v2012 = vld [vmem:[#allocation9 + $0xa48] sm:$0xff]
    %v2013 = vld [vmem:[#allocation9 + $0xa50] sm:$0xff]
    %v2014 = vld [vmem:[#allocation9 + $0xa58] sm:$0xff]
    %v2015 = vld [vmem:[#allocation9 + $0xa60] sm:$0xff]
    %v2016 = vld [vmem:[#allocation9 + $0xa68] sm:$0xff]
    %v2017 = vld [vmem:[#allocation9 + $0xa70] sm:$0xff]
    %v2018 = vld [vmem:[#allocation9 + $0xa78] sm:$0xff]
    %v2019 = vld [vmem:[#allocation9 + $0xa80] sm:$0xff]
    %v2020 = vld [vmem:[#allocation9 + $0xa88] sm:$0xff]
    %v2021 = vld [vmem:[#allocation9 + $0xa90] sm:$0xff]
    %v2022 = vld [vmem:[#allocation9 + $0xa98] sm:$0xff]
    %v2023 = vld [vmem:[#allocation9 + $0xaa0] sm:$0xff]
    %v2024 = vld [vmem:[#allocation9 + $0xaa8] sm:$0xff]
    %v2025 = vld [vmem:[#allocation9 + $0xab0] sm:$0xff]
    %v2026 = vld [vmem:[#allocation9 + $0xab8] sm:$0xff]
    %v2027 = vld [vmem:[#allocation9 + $0xac0] sm:$0xff]
    %v2028 = vld [vmem:[#allocation9 + $0xac8] sm:$0xff]
    %v2029 = vld [vmem:[#allocation9 + $0xad0] sm:$0xff]
    %v2030 = vld [vmem:[#allocation9 + $0xad8] sm:$0xff]
    %v2031 = vld [vmem:[#allocation9 + $0xae0] sm:$0xff]
    %v2032 = vld [vmem:[#allocation9 + $0xae8] sm:$0xff]
    %v2033 = vld [vmem:[#allocation9 + $0xaf0] sm:$0xff]
    %v2034 = vld [vmem:[#allocation9 + $0xaf8] sm:$0xff]
    %v2035 = vld [vmem:[#allocation9 + $0xb00] sm:$0xff]
    %v2036 = vld [vmem:[#allocation9 + $0xb08] sm:$0xff]
    %v2037 = vld [vmem:[#allocation9 + $0xb10] sm:$0xff]
    %v2038 = vld [vmem:[#allocation9 + $0xb18] sm:$0xff]
    %v2039 = vld [vmem:[#allocation9 + $0xb20] sm:$0xff]
    %v2040 = vld [vmem:[#allocation9 + $0xb28] sm:$0xff]
    %v2041 = vld [vmem:[#allocation9 + $0xb30] sm:$0xff]
    %v2042 = vld [vmem:[#allocation9 + $0xb38] sm:$0xff]
    %v2043 = vld [vmem:[#allocation9 + $0xb40] sm:$0xff]
    %v2044 = vld [vmem:[#allocation9 + $0xb48] sm:$0xff]
    %v2045 = vld [vmem:[#allocation9 + $0xb50] sm:$0xff]
    %v2046 = vld [vmem:[#allocation9 + $0xb58] sm:$0xff]
    %v2047 = vld [vmem:[#allocation9 + $0xb60] sm:$0xff]
    %v2048 = vld [vmem:[#allocation9 + $0xb68] sm:$0xff]
    %v2049 = vld [vmem:[#allocation9 + $0xb70] sm:$0xff]
    %v2050 = vld [vmem:[#allocation9 + $0xb78] sm:$0xff]
    %v2051 = vld [vmem:[#allocation9 + $0xb80] sm:$0xff]
    %v2052 = vld [vmem:[#allocation9 + $0xb88] sm:$0xff]
    %v2053 = vld [vmem:[#allocation9 + $0xb90] sm:$0xff]
    %v2054 = vld [vmem:[#allocation9 + $0xb98] sm:$0xff]
    %v2055 = vld [vmem:[#allocation9 + $0xba0] sm:$0xff]
    %v2056 = vld [vmem:[#allocation9 + $0xba8] sm:$0xff]
    %v2057 = vld [vmem:[#allocation9 + $0xbb0] sm:$0xff]
    %v2058 = vld [vmem:[#allocation9 + $0xbb8] sm:$0xff]
    %v2059 = vld [vmem:[#allocation9 + $0xbc0] sm:$0xff]
    %v2060 = vld [vmem:[#allocation9 + $0xbc8] sm:$0xff]
    %v2061 = vld [vmem:[#allocation9 + $0xbd0] sm:$0xff]
    %v2062 = vld [vmem:[#allocation9 + $0xbd8] sm:$0xff]
    %v2063 = vld [vmem:[#allocation9 + $0xbe0] sm:$0xff]
    %v2064 = vld [vmem:[#allocation9 + $0xbe8] sm:$0xff]
    %v2065 = vld [vmem:[#allocation9 + $0xbf0] sm:$0xff]
    %v2066 = vld [vmem:[#allocation9 + $0xbf8] sm:$0xff]
    %v2067 = vld [vmem:[#allocation9 + $0xc00] sm:$0xff]
    %v2068 = vld [vmem:[#allocation9 + $0xc08] sm:$0xff]
    %v2069 = vld [vmem:[#allocation9 + $0xc10] sm:$0xff]
    %v2070 = vld [vmem:[#allocation9 + $0xc18] sm:$0xff]
    %v2071 = vld [vmem:[#allocation9 + $0xc20] sm:$0xff]
    %v2072 = vld [vmem:[#allocation9 + $0xc28] sm:$0xff]
    %v2073 = vld [vmem:[#allocation9 + $0xc30] sm:$0xff]
    %v2074 = vld [vmem:[#allocation9 + $0xc38] sm:$0xff]
    %v2075 = vld [vmem:[#allocation9 + $0xc40] sm:$0xff]
    %v2076 = vld [vmem:[#allocation9 + $0xc48] sm:$0xff]
    %v2077 = vld [vmem:[#allocation9 + $0xc50] sm:$0xff]
    %v2078 = vld [vmem:[#allocation9 + $0xc58] sm:$0xff]
    %v2079 = vld [vmem:[#allocation9 + $0xc60] sm:$0xff]
    %v2080 = vld [vmem:[#allocation9 + $0xc68] sm:$0xff]
    %v2081 = vld [vmem:[#allocation9 + $0xc70] sm:$0xff]
    %v2082 = vld [vmem:[#allocation9 + $0xc78] sm:$0xff]
    %v2083 = vld [vmem:[#allocation9 + $0xc80] sm:$0xff]
    %v2084 = vld [vmem:[#allocation9 + $0xc88] sm:$0xff]
    %v2085 = vld [vmem:[#allocation9 + $0xc90] sm:$0xff]
    %v2086 = vld [vmem:[#allocation9 + $0xc98] sm:$0xff]
    %v2087 = vld [vmem:[#allocation9 + $0xca0] sm:$0xff]
    %v2088 = vld [vmem:[#allocation9 + $0xca8] sm:$0xff]
    %v2089 = vld [vmem:[#allocation9 + $0xcb0] sm:$0xff]
    %v2090 = vld [vmem:[#allocation9 + $0xcb8] sm:$0xff]
    %v2091 = vld [vmem:[#allocation9 + $0xcc0] sm:$0xff]
    %v2092 = vld [vmem:[#allocation9 + $0xcc8] sm:$0xff]
    %v2093 = vld [vmem:[#allocation9 + $0xcd0] sm:$0xff]
    %v2094 = vld [vmem:[#allocation9 + $0xcd8] sm:$0xff]
    %v2095 = vld [vmem:[#allocation9 + $0xce0] sm:$0xff]
    %v2096 = vld [vmem:[#allocation9 + $0xce8] sm:$0xff]
    %v2097 = vld [vmem:[#allocation9 + $0xcf0] sm:$0xff]
    %v2098 = vld [vmem:[#allocation9 + $0xcf8] sm:$0xff]
    %v2099 = vld [vmem:[#allocation9 + $0xd00] sm:$0xff]
    %v2100 = vld [vmem:[#allocation9 + $0xd08] sm:$0xff]
    %v2101 = vld [vmem:[#allocation9 + $0xd10] sm:$0xff]
    %v2102 = vld [vmem:[#allocation9 + $0xd18] sm:$0xff]
    %v2103 = vld [vmem:[#allocation9 + $0xd20] sm:$0xff]
    %v2104 = vld [vmem:[#allocation9 + $0xd28] sm:$0xff]
    %v2105 = vld [vmem:[#allocation9 + $0xd30] sm:$0xff]
    %v2106 = vld [vmem:[#allocation9 + $0xd38] sm:$0xff]
    %v2107 = vld [vmem:[#allocation9 + $0xd40] sm:$0xff]
    %v2108 = vld [vmem:[#allocation9 + $0xd48] sm:$0xff]
    %v2109 = vld [vmem:[#allocation9 + $0xd50] sm:$0xff]
    %v2110 = vld [vmem:[#allocation9 + $0xd58] sm:$0xff]
    %v2111 = vld [vmem:[#allocation9 + $0xd60] sm:$0xff]
    %v2112 = vld [vmem:[#allocation9 + $0xd68] sm:$0xff]
    %v2113 = vld [vmem:[#allocation9 + $0xd70] sm:$0xff]
    %v2114 = vld [vmem:[#allocation9 + $0xd78] sm:$0xff]
    %v2115 = vld [vmem:[#allocation9 + $0xd80] sm:$0xff]
    %v2116 = vld [vmem:[#allocation9 + $0xd88] sm:$0xff]
    %v2117 = vld [vmem:[#allocation9 + $0xd90] sm:$0xff]
    %v2118 = vld [vmem:[#allocation9 + $0xd98] sm:$0xff]
    %v2119 = vld [vmem:[#allocation9 + $0xda0] sm:$0xff]
    %v2120 = vld [vmem:[#allocation9 + $0xda8] sm:$0xff]
    %v2121 = vld [vmem:[#allocation9 + $0xdb0] sm:$0xff]
    %v2122 = vld [vmem:[#allocation9 + $0xdb8] sm:$0xff]
    %v2123 = vld [vmem:[#allocation9 + $0xdc0] sm:$0xff]
    %v2124 = vld [vmem:[#allocation9 + $0xdc8] sm:$0xff]
    %v2125 = vld [vmem:[#allocation9 + $0xdd0] sm:$0xff]
    %v2126 = vld [vmem:[#allocation9 + $0xdd8] sm:$0xff]
    %v2127 = vld [vmem:[#allocation9 + $0xde0] sm:$0xff]
    %v2128 = vld [vmem:[#allocation9 + $0xde8] sm:$0xff]
    %v2129 = vld [vmem:[#allocation9 + $0xdf0] sm:$0xff]
    %v2130 = vld [vmem:[#allocation9 + $0xdf8] sm:$0xff]
    %v2131 = vld [vmem:[#allocation9 + $0xe00] sm:$0xff]
    %v2132 = vld [vmem:[#allocation9 + $0xe08] sm:$0xff]
    %v2133 = vld [vmem:[#allocation9 + $0xe10] sm:$0xff]
    %v2134 = vld [vmem:[#allocation9 + $0xe18] sm:$0xff]
    %v2135 = vld [vmem:[#allocation9 + $0xe20] sm:$0xff]
    %v2136 = vld [vmem:[#allocation9 + $0xe28] sm:$0xff]
    %v2137 = vld [vmem:[#allocation9 + $0xe30] sm:$0xff]
    %v2138 = vld [vmem:[#allocation9 + $0xe38] sm:$0xff]
    %v2139 = vld [vmem:[#allocation9 + $0xe40] sm:$0xff]
    %v2140 = vld [vmem:[#allocation9 + $0xe48] sm:$0xff]
    %v2141 = vld [vmem:[#allocation9 + $0xe50] sm:$0xff]
    %v2142 = vld [vmem:[#allocation9 + $0xe58] sm:$0xff]
    %v2143 = vld [vmem:[#allocation9 + $0xe60] sm:$0xff]
    %v2144 = vld [vmem:[#allocation9 + $0xe68] sm:$0xff]
    %v2145 = vld [vmem:[#allocation9 + $0xe70] sm:$0xff]
    %v2146 = vld [vmem:[#allocation9 + $0xe78] sm:$0xff]
    %v2147 = vld [vmem:[#allocation9 + $0xe80] sm:$0xff]
    %v2148 = vld [vmem:[#allocation9 + $0xe88] sm:$0xff]
    %v2149 = vld [vmem:[#allocation9 + $0xe90] sm:$0xff]
    %v2150 = vld [vmem:[#allocation9 + $0xe98] sm:$0xff]
    %v2151 = vld [vmem:[#allocation9 + $0xea0] sm:$0xff]
    %v2152 = vld [vmem:[#allocation9 + $0xea8] sm:$0xff]
    %v2153 = vld [vmem:[#allocation9 + $0xeb0] sm:$0xff]
    %v2154 = vld [vmem:[#allocation9 + $0xeb8] sm:$0xff]
    %v2155 = vld [vmem:[#allocation9 + $0xec0] sm:$0xff]
    %v2156 = vld [vmem:[#allocation9 + $0xec8] sm:$0xff]
    %v2157 = vld [vmem:[#allocation9 + $0xed0] sm:$0xff]
    %v2158 = vld [vmem:[#allocation9 + $0xed8] sm:$0xff]
    %v2159 = vld [vmem:[#allocation9 + $0xee0] sm:$0xff]
    %v2160 = vld [vmem:[#allocation9 + $0xee8] sm:$0xff]
    %v2161 = vld [vmem:[#allocation9 + $0xef0] sm:$0xff]
    %v2162 = vld [vmem:[#allocation9 + $0xef8] sm:$0xff]
    %v2163 = vld [vmem:[#allocation9 + $0xf00] sm:$0xff]
    %v2164 = vld [vmem:[#allocation9 + $0xf08] sm:$0xff]
    %v2165 = vld [vmem:[#allocation9 + $0xf10] sm:$0xff]
    %v2166 = vld [vmem:[#allocation9 + $0xf18] sm:$0xff]
    %v2167 = vld [vmem:[#allocation9 + $0xf20] sm:$0xff]
    %v2168 = vld [vmem:[#allocation9 + $0xf28] sm:$0xff]
    %v2169 = vld [vmem:[#allocation9 + $0xf30] sm:$0xff]
    %v2170 = vld [vmem:[#allocation9 + $0xf38] sm:$0xff]
    %v2171 = vld [vmem:[#allocation9 + $0xf40] sm:$0xff]
    %v2172 = vld [vmem:[#allocation9 + $0xf48] sm:$0xff]
    %v2173 = vld [vmem:[#allocation9 + $0xf50] sm:$0xff]
    %v2174 = vld [vmem:[#allocation9 + $0xf58] sm:$0xff]
    %v2175 = vld [vmem:[#allocation9 + $0xf60] sm:$0xff]
    %v2176 = vld [vmem:[#allocation9 + $0xf68] sm:$0xff]
    %v2177 = vld [vmem:[#allocation9 + $0xf70] sm:$0xff]
    %v2178 = vld [vmem:[#allocation9 + $0xf78] sm:$0xff]
    %v2179 = vld [vmem:[#allocation9 + $0xf80] sm:$0xff]
    %v2180 = vld [vmem:[#allocation9 + $0xf88] sm:$0xff]
    %v2181 = vld [vmem:[#allocation9 + $0xf90] sm:$0xff]
    %v2182 = vld [vmem:[#allocation9 + $0xf98] sm:$0xff]
    %v2183 = vld [vmem:[#allocation9 + $0xfa0] sm:$0xff]
    %v2184 = vld [vmem:[#allocation9 + $0xfa8] sm:$0xff]
    %v2185 = vld [vmem:[#allocation9 + $0xfb0] sm:$0xff]
    %v2186 = vld [vmem:[#allocation9 + $0xfb8] sm:$0xff]
    %v2187 = vld [vmem:[#allocation9 + $0xfc0] sm:$0xff]
    %v2188 = vld [vmem:[#allocation9 + $0xfc8] sm:$0xff]
    %v2189 = vld [vmem:[#allocation9 + $0xfd0] sm:$0xff]
    %v2190 = vld [vmem:[#allocation9 + $0xfd8] sm:$0xff]
    %v2191 = vld [vmem:[#allocation9 + $0xfe0] sm:$0xff]
    %v2192 = vld [vmem:[#allocation9 + $0xfe8] sm:$0xff]
    %v2193 = vld [vmem:[#allocation9 + $0xff0] sm:$0xff]
    %v2194 = vld [vmem:[#allocation9 + $0xff8] sm:$0xff]
    %v2195 = vld [vmem:[#allocation9 + $0x1000] sm:$0xff]
    %v2196 = vld [vmem:[#allocation9 + $0x1008] sm:$0xff]
    %v2197 = vld [vmem:[#allocation9 + $0x1010] sm:$0xff]
    %v2198 = vld [vmem:[#allocation9 + $0x1018] sm:$0xff]
    %v2199 = vld [vmem:[#allocation9 + $0x1020] sm:$0xff]
    %v2200 = vld [vmem:[#allocation9 + $0x1028] sm:$0xff]
    %v2201 = vld [vmem:[#allocation9 + $0x1030] sm:$0xff]
    %v2202 = vld [vmem:[#allocation9 + $0x1038] sm:$0xff]
    %v2203 = vld [vmem:[#allocation9 + $0x1040] sm:$0xff]
    %v2204 = vld [vmem:[#allocation9 + $0x1048] sm:$0xff]
    %v2205 = vld [vmem:[#allocation9 + $0x1050] sm:$0xff]
    %v2206 = vld [vmem:[#allocation9 + $0x1058] sm:$0xff]
    %v2207 = vld [vmem:[#allocation9 + $0x1060] sm:$0xff]
    %v2208 = vld [vmem:[#allocation9 + $0x1068] sm:$0xff]
    %v2209 = vld [vmem:[#allocation9 + $0x1070] sm:$0xff]
    %v2210 = vld [vmem:[#allocation9 + $0x1078] sm:$0xff]
    %v2211 = vld [vmem:[#allocation9 + $0x1080] sm:$0xff]
    %v2212 = vld [vmem:[#allocation9 + $0x1088] sm:$0xff]
    %v2213 = vld [vmem:[#allocation9 + $0x1090] sm:$0xff]
    %v2214 = vld [vmem:[#allocation9 + $0x1098] sm:$0xff]
    %v2215 = vld [vmem:[#allocation9 + $0x10a0] sm:$0xff]
    %v2216 = vld [vmem:[#allocation9 + $0x10a8] sm:$0xff]
    %v2217 = vld [vmem:[#allocation9 + $0x10b0] sm:$0xff]
    %v2218 = vld [vmem:[#allocation9 + $0x10b8] sm:$0xff]
    %v2219 = vld [vmem:[#allocation9 + $0x10c0] sm:$0xff]
    %v2220 = vld [vmem:[#allocation9 + $0x10c8] sm:$0xff]
    %v2221 = vld [vmem:[#allocation9 + $0x10d0] sm:$0xff]
    %v2222 = vld [vmem:[#allocation9 + $0x10d8] sm:$0xff]
    %v2223 = vld [vmem:[#allocation9 + $0x10e0] sm:$0xff]
    %v2224 = vld [vmem:[#allocation9 + $0x10e8] sm:$0xff]
    %v2225 = vld [vmem:[#allocation9 + $0x10f0] sm:$0xff]
    %v2226 = vld [vmem:[#allocation9 + $0x10f8] sm:$0xff]
    %v2227 = vld [vmem:[#allocation9 + $0x1100] sm:$0xff]
    %v2228 = vld [vmem:[#allocation9 + $0x1108] sm:$0xff]
    %v2229 = vld [vmem:[#allocation9 + $0x1110] sm:$0xff]
    %v2230 = vld [vmem:[#allocation9 + $0x1118] sm:$0xff]
    %v2231 = vld [vmem:[#allocation9 + $0x1120] sm:$0xff]
    %v2232 = vld [vmem:[#allocation9 + $0x1128] sm:$0xff]
    %v2233 = vld [vmem:[#allocation9 + $0x1130] sm:$0xff]
    %v2234 = vld [vmem:[#allocation9 + $0x1138] sm:$0xff]
    %v2235 = vld [vmem:[#allocation9 + $0x1140] sm:$0xff]
    %v2236 = vld [vmem:[#allocation9 + $0x1148] sm:$0xff]
    %v2237 = vld [vmem:[#allocation9 + $0x1150] sm:$0xff]
    %v2238 = vld [vmem:[#allocation9 + $0x1158] sm:$0xff]
    %v2239 = vld [vmem:[#allocation9 + $0x1160] sm:$0xff]
    %v2240 = vld [vmem:[#allocation9 + $0x1168] sm:$0xff]
    %v2241 = vld [vmem:[#allocation9 + $0x1170] sm:$0xff]
    %v2242 = vld [vmem:[#allocation9 + $0x1178] sm:$0xff]
    %v2243 = vld [vmem:[#allocation9 + $0x1180] sm:$0xff]
    %v2244 = vld [vmem:[#allocation9 + $0x1188] sm:$0xff]
    %v2245 = vld [vmem:[#allocation9 + $0x1190] sm:$0xff]
    %v2246 = vld [vmem:[#allocation9 + $0x1198] sm:$0xff]
    %v2247 = vld [vmem:[#allocation9 + $0x11a0] sm:$0xff]
    %v2248 = vld [vmem:[#allocation9 + $0x11a8] sm:$0xff]
    %v2249 = vld [vmem:[#allocation9 + $0x11b0] sm:$0xff]
    %v2250 = vld [vmem:[#allocation9 + $0x11b8] sm:$0xff]
    %v2251 = vld [vmem:[#allocation9 + $0x11c0] sm:$0xff]
    %v2252 = vld [vmem:[#allocation9 + $0x11c8] sm:$0xff]
    %v2253 = vld [vmem:[#allocation9 + $0x11d0] sm:$0xff]
    %v2254 = vld [vmem:[#allocation9 + $0x11d8] sm:$0xff]
    %v2255 = vld [vmem:[#allocation9 + $0x11e0] sm:$0xff]
    %v2256 = vld [vmem:[#allocation9 + $0x11e8] sm:$0xff]
    %v2257 = vld [vmem:[#allocation9 + $0x11f0] sm:$0xff]
    %v2258 = vld [vmem:[#allocation9 + $0x11f8] sm:$0xff]
    %v2259 = vld [vmem:[#allocation11] sm:$0x7]
    %v2261 = vlaneseq
    %v2262 = vshrl.u32 %v2261, 7
    %v2263 = vsub.s32 0, %v2262
    %v2264 = vrot.slane %v2259, %v2263
    %v2265 = vlaneseq
    %v2266 = vshrl.u32 %v2265, 7
    %v2267 = vsub.s32 1, %v2266
    %v2268 = vrot.slane %v2259, %v2267
    %v2269 = vlaneseq
    %v2270 = vshrl.u32 %v2269, 7
    %v2271 = vsub.s32 2, %v2270
    %v2272 = vrot.slane %v2259, %v2271
    %2276 = vmatprep.subr.mxu0 %v1684
    %2277 = vmatpush1.msra.mxu0 %v1683
    %2278 = vmatprep.subr.mxu0 %v1687
    %2279 = vmatpush1.msra.mxu0 %v1686
    %2280 = vmatprep.subr.mxu0 %v1690
    %2281 = vmatpush1.msra.mxu0 %v1689
    %2282 = vmatprep.subr.mxu0 %v1693
    %2283 = vmatpush1.msra.mxu0 %v1692
    %2284 = vmatprep.subr.mxu0 %v1696
    %2285 = vmatpush1.msra.mxu0 %v1695
    %2286 = vmatprep.subr.mxu0 %v1699
    %2287 = vmatpush1.msra.mxu0 %v1698
    %2288 = vmatprep.subr.mxu0 %v1702
    %2289 = vmatpush1.msra.mxu0 %v1701
    %2290 = vmatprep.subr.mxu0 %v1705
    %2291 = vmatpush1.msra.mxu0 %v1704
    %2292 = vmatprep.subr.mxu0 %v1708
    %2293 = vmatpush1.msra.mxu0 %v1707
    %2294 = vmatprep.subr.mxu0 %v1711
    %2295 = vmatpush1.msra.mxu0 %v1710
    %2296 = vmatprep.subr.mxu0 %v1714
    %2297 = vmatpush1.msra.mxu0 %v1713
    %2298 = vmatprep.subr.mxu0 %v1717
    %2299 = vmatpush1.msra.mxu0 %v1716
    %2300 = vmatprep.subr.mxu0 %v1720
    %2301 = vmatpush1.msra.mxu0 %v1719
    %2302 = vmatprep.subr.mxu0 %v1723
    %2303 = vmatpush1.msra.mxu0 %v1722
    %2304 = vmatprep.subr.mxu0 %v1726
    %2305 = vmatpush1.msra.mxu0 %v1725
    %2306 = vmatprep.subr.mxu0 %v1729
    %2307 = vmatpush1.msra.mxu0 %v1728
    %2308 = vmatprep.subr.mxu0 %v1732
    %2309 = vmatpush1.msra.mxu0 %v1731
    %2310 = vmatprep.subr.mxu0 %v1735
    %2311 = vmatpush1.msra.mxu0 %v1734
    %2312 = vmatprep.subr.mxu0 %v1738
    %2313 = vmatpush1.msra.mxu0 %v1737
    %2314 = vmatprep.subr.mxu0 %v1741
    %2315 = vmatpush1.msra.mxu0 %v1740
    %2316 = vmatprep.subr.mxu0 %v1744
    %2317 = vmatpush1.msra.mxu0 %v1743
    %2318 = vmatprep.subr.mxu0 %v1747
    %2319 = vmatpush1.msra.mxu0 %v1746
    %2320 = vmatprep.subr.mxu0 %v1750
    %2321 = vmatpush1.msra.mxu0 %v1749
    %2322 = vmatprep.subr.mxu0 %v1753
    %2323 = vmatpush1.msra.mxu0 %v1752
    %2324 = vmatprep.subr.mxu0 %v1756
    %2325 = vmatpush1.msra.mxu0 %v1755
    %2326 = vmatprep.subr.mxu0 %v1759
    %2327 = vmatpush1.msra.mxu0 %v1758
    %2328 = vmatprep.subr.mxu0 %v1762
    %2329 = vmatpush1.msra.mxu0 %v1761
    %2330 = vmatprep.subr.mxu0 %v1765
    %2331 = vmatpush1.msra.mxu0 %v1764
    %2332 = vmatprep.subr.mxu0 %v1768
    %2333 = vmatpush1.msra.mxu0 %v1767
    %2334 = vmatprep.subr.mxu0 %v1771
    %2335 = vmatpush1.msra.mxu0 %v1770
    %2336 = vmatprep.subr.mxu0 %v1774
    %2337 = vmatpush1.msra.mxu0 %v1773
    %2338 = vmatprep.subr.mxu0 %v1777
    %2339 = vmatpush1.msra.mxu0 %v1776
    %2340 = vmatprep.mubr.f32.mxu0 %v1660
    %2341 = vmatmul.mubr.f32.gmra.mrb[0].mxu0 %v1659
    %v2342 = vpop.f32.mrb[0].mxu0
    %v2343 = vadd.f32 %v2264, %v2342
    %v2344 = vpop.f32.mrb[0].mxu0
    %v2345 = vadd.f32 %v2268, %v2344
    %2346 = vmatprep.mubr.f32.mxu0 %v1672
    %2347 = vmatmul.mubr.f32.gmra.mrb[0].mxu0 %v1671
    %v2348 = vpop.f32.mrb[0].mxu0
    %v2349 = vadd.f32 %v2264, %v2348
    %v2350 = vpop.f32.mrb[0].mxu0
    %v2351 = vadd.f32 %v2268, %v2350
    %2352 = vdwg.mxu0
    %2353 = vmatprep.subr.mxu0 %v1780
    %2354 = vmatpush1.msra.mxu0 %v1779
    %2355 = vmatprep.subr.mxu0 %v1783
    %2356 = vmatpush1.msra.mxu0 %v1782
    %2357 = vmatprep.subr.mxu0 %v1786
    %2358 = vmatpush1.msra.mxu0 %v1785
    %2359 = vmatprep.subr.mxu0 %v1789
    %2360 = vmatpush1.msra.mxu0 %v1788
    %2361 = vmatprep.subr.mxu0 %v1792
    %2362 = vmatpush1.msra.mxu0 %v1791
    %2363 = vmatprep.subr.mxu0 %v1795
    %2364 = vmatpush1.msra.mxu0 %v1794
    %2365 = vmatprep.subr.mxu0 %v1798
    %2366 = vmatpush1.msra.mxu0 %v1797
    %2367 = vmatprep.subr.mxu0 %v1801
    %2368 = vmatpush1.msra.mxu0 %v1800
    %2369 = vmatprep.subr.mxu0 %v1804
    %2370 = vmatpush1.msra.mxu0 %v1803
    %2371 = vmatprep.subr.mxu0 %v1807
    %2372 = vmatpush1.msra.mxu0 %v1806
    %2373 = vmatprep.subr.mxu0 %v1810
    %2374 = vmatpush1.msra.mxu0 %v1809
    %2375 = vmatprep.subr.mxu0 %v1813
    %2376 = vmatpush1.msra.mxu0 %v1812
    %2377 = vmatprep.subr.mxu0 %v1816
    %2378 = vmatpush1.msra.mxu0 %v1815
    %2379 = vmatprep.subr.mxu0 %v1819
    %2380 = vmatpush1.msra.mxu0 %v1818
    %2381 = vmatprep.subr.mxu0 %v1822
    %2382 = vmatpush1.msra.mxu0 %v1821
    %2383 = vmatprep.subr.mxu0 %v1825
    %2384 = vmatpush1.msra.mxu0 %v1824
    %2385 = vmatprep.subr.mxu0 %v1828
    %2386 = vmatpush1.msra.mxu0 %v1827
    %2387 = vmatprep.subr.mxu0 %v1831
    %2388 = vmatpush1.msra.mxu0 %v1830
    %2389 = vmatprep.subr.mxu0 %v1834
    %2390 = vmatpush1.msra.mxu0 %v1833
    %2391 = vmatprep.subr.mxu0 %v1837
    %2392 = vmatpush1.msra.mxu0 %v1836
    %2393 = vmatprep.subr.mxu0 %v1840
    %2394 = vmatpush1.msra.mxu0 %v1839
    %2395 = vmatprep.subr.mxu0 %v1843
    %2396 = vmatpush1.msra.mxu0 %v1842
    %2397 = vmatprep.subr.mxu0 %v1846
    %2398 = vmatpush1.msra.mxu0 %v1845
    %2399 = vmatprep.subr.mxu0 %v1849
    %2400 = vmatpush1.msra.mxu0 %v1848
    %2401 = vmatprep.subr.mxu0 %v1852
    %2402 = vmatpush1.msra.mxu0 %v1851
    %2403 = vmatprep.subr.mxu0 %v1855
    %2404 = vmatpush1.msra.mxu0 %v1854
    %2405 = vmatprep.subr.mxu0 %v1858
    %2406 = vmatpush1.msra.mxu0 %v1857
    %2407 = vmatprep.subr.mxu0 %v1861
    %2408 = vmatpush1.msra.mxu0 %v1860
    %2409 = vmatprep.subr.mxu0 %v1864
    %2410 = vmatpush1.msra.mxu0 %v1863
    %2411 = vmatprep.subr.mxu0 %v1867
    %2412 = vmatpush1.msra.mxu0 %v1866
    %2413 = vmatprep.subr.mxu0 %v1870
    %2414 = vmatpush1.msra.mxu0 %v1869
    %2415 = vmatprep.subr.mxu0 %v1873
    %2416 = vmatpush1.msra.mxu0 %v1872
    %2417 = vmatprep.mubr.f32.mxu0 %v1662
    %2418 = vmatmul.mubr.f32.gmra.mrb[0].mxu0 %v1661
    %v2419 = vpop.f32.mrb[0].mxu0
    %v2420 = vadd.f32 %v2343, %v2419
    %v2421 = vpop.f32.mrb[0].mxu0
    %v2422 = vadd.f32 %v2345, %v2421
    %2423 = vmatprep.mubr.f32.mxu0 %v1674
    %2424 = vmatmul.mubr.f32.gmra.mrb[0].mxu0 %v1673
    %v2425 = vpop.f32.mrb[0].mxu0
    %v2426 = vadd.f32 %v2349, %v2425
    %v2427 = vpop.f32.mrb[0].mxu0
    %v2428 = vadd.f32 %v2351, %v2427
    %2429 = vdwg.mxu0
    %2430 = vmatprep.subr.mxu0 %v1876
    %2431 = vmatpush1.msra.mxu0 %v1875
    %2432 = vmatprep.subr.mxu0 %v1879
    %2433 = vmatpush1.msra.mxu0 %v1878
    %2434 = vmatprep.subr.mxu0 %v1882
    %2435 = vmatpush1.msra.mxu0 %v1881
    %2436 = vmatprep.subr.mxu0 %v1885
    %2437 = vmatpush1.msra.mxu0 %v1884
    %2438 = vmatprep.subr.mxu0 %v1888
    %2439 = vmatpush1.msra.mxu0 %v1887
    %2440 = vmatprep.subr.mxu0 %v1891
    %2441 = vmatpush1.msra.mxu0 %v1890
    %2442 = vmatprep.subr.mxu0 %v1894
    %2443 = vmatpush1.msra.mxu0 %v1893
    %2444 = vmatprep.subr.mxu0 %v1897
    %2445 = vmatpush1.msra.mxu0 %v1896
    %2446 = vmatprep.subr.mxu0 %v1900
    %2447 = vmatpush1.msra.mxu0 %v1899
    %2448 = vmatprep.subr.mxu0 %v1903
    %2449 = vmatpush1.msra.mxu0 %v1902
    %2450 = vmatprep.subr.mxu0 %v1906
    %2451 = vmatpush1.msra.mxu0 %v1905
    %2452 = vmatprep.subr.mxu0 %v1909
    %2453 = vmatpush1.msra.mxu0 %v1908
    %2454 = vmatprep.subr.mxu0 %v1912
    %2455 = vmatpush1.msra.mxu0 %v1911
    %2456 = vmatprep.subr.mxu0 %v1915
    %2457 = vmatpush1.msra.mxu0 %v1914
    %2458 = vmatprep.subr.mxu0 %v1918
    %2459 = vmatpush1.msra.mxu0 %v1917
    %2460 = vmatprep.subr.mxu0 %v1921
    %2461 = vmatpush1.msra.mxu0 %v1920
    %2462 = vmatprep.subr.mxu0 %v1924
    %2463 = vmatpush1.msra.mxu0 %v1923
    %2464 = vmatprep.subr.mxu0 %v1927
    %2465 = vmatpush1.msra.mxu0 %v1926
    %2466 = vmatprep.subr.mxu0 %v1930
    %2467 = vmatpush1.msra.mxu0 %v1929
    %2468 = vmatprep.subr.mxu0 %v1933
    %2469 = vmatpush1.msra.mxu0 %v1932
    %2470 = vmatprep.subr.mxu0 %v1936
    %2471 = vmatpush1.msra.mxu0 %v1935
    %2472 = vmatprep.subr.mxu0 %v1939
    %2473 = vmatpush1.msra.mxu0 %v1938
    %2474 = vmatprep.subr.mxu0 %v1942
    %2475 = vmatpush1.msra.mxu0 %v1941
    %2476 = vmatprep.subr.mxu0 %v1945
    %2477 = vmatpush1.msra.mxu0 %v1944
    %2478 = vmatprep.subr.mxu0 %v1948
    %2479 = vmatpush1.msra.mxu0 %v1947
    %2480 = vmatprep.subr.mxu0 %v1951
    %2481 = vmatpush1.msra.mxu0 %v1950
    %2482 = vmatprep.subr.mxu0 %v1954
    %2483 = vmatpush1.msra.mxu0 %v1953
    %2484 = vmatprep.subr.mxu0 %v1957
    %2485 = vmatpush1.msra.mxu0 %v1956
    %2486 = vmatprep.subr.mxu0 %v1960
    %2487 = vmatpush1.msra.mxu0 %v1959
    %2488 = vmatprep.subr.mxu0 %v1963
    %2489 = vmatpush1.msra.mxu0 %v1962
    %2490 = vmatprep.subr.mxu0 %v1966
    %2491 = vmatpush1.msra.mxu0 %v1965
    %2492 = vmatprep.subr.mxu0 %v1969
    %2493 = vmatpush1.msra.mxu0 %v1968
    %2494 = vmatprep.mubr.f32.mxu0 %v1664
    %2495 = vmatmul.mubr.f32.gmra.mrb[0].mxu0 %v1663
    %v2496 = vpop.f32.mrb[0].mxu0
    %v2497 = vadd.f32 %v2420, %v2496
    %v2498 = vpop.f32.mrb[0].mxu0
    %v2499 = vadd.f32 %v2422, %v2498
    %2500 = vmatprep.mubr.f32.mxu0 %v1676
    %2501 = vmatmul.mubr.f32.gmra.mrb[0].mxu0 %v1675
    %v2502 = vpop.f32.mrb[0].mxu0
    %v2503 = vadd.f32 %v2426, %v2502
    %v2504 = vpop.f32.mrb[0].mxu0
    %v2505 = vadd.f32 %v2428, %v2504
    %2506 = vdwg.mxu0
    %2507 = vmatprep.subr.mxu0 %v1972
    %2508 = vmatpush1.msra.mxu0 %v1971
    %2509 = vmatprep.subr.mxu0 %v1975
    %2510 = vmatpush1.msra.mxu0 %v1974
    %2511 = vmatprep.subr.mxu0 %v1978
    %2512 = vmatpush1.msra.mxu0 %v1977
    %2513 = vmatprep.subr.mxu0 %v1981
    %2514 = vmatpush1.msra.mxu0 %v1980
    %2515 = vmatprep.subr.mxu0 %v1984
    %2516 = vmatpush1.msra.mxu0 %v1983
    %2517 = vmatprep.subr.mxu0 %v1987
    %2518 = vmatpush1.msra.mxu0 %v1986
    %2519 = vmatprep.subr.mxu0 %v1990
    %2520 = vmatpush1.msra.mxu0 %v1989
    %2521 = vmatprep.subr.mxu0 %v1993
    %2522 = vmatpush1.msra.mxu0 %v1992
    %2523 = vmatprep.subr.mxu0 %v1996
    %2524 = vmatpush1.msra.mxu0 %v1995
    %2525 = vmatprep.subr.mxu0 %v1999
    %2526 = vmatpush1.msra.mxu0 %v1998
    %2527 = vmatprep.subr.mxu0 %v2002
    %2528 = vmatpush1.msra.mxu0 %v2001
    %2529 = vmatprep.subr.mxu0 %v2005
    %2530 = vmatpush1.msra.mxu0 %v2004
    %2531 = vmatprep.subr.mxu0 %v2008
    %2532 = vmatpush1.msra.mxu0 %v2007
    %2533 = vmatprep.subr.mxu0 %v2011
    %2534 = vmatpush1.msra.mxu0 %v2010
    %2535 = vmatprep.subr.mxu0 %v2014
    %2536 = vmatpush1.msra.mxu0 %v2013
    %2537 = vmatprep.subr.mxu0 %v2017
    %2538 = vmatpush1.msra.mxu0 %v2016
    %2539 = vmatprep.subr.mxu0 %v2020
    %2540 = vmatpush1.msra.mxu0 %v2019
    %2541 = vmatprep.subr.mxu0 %v2023
    %2542 = vmatpush1.msra.mxu0 %v2022
    %2543 = vmatprep.subr.mxu0 %v2026
    %2544 = vmatpush1.msra.mxu0 %v2025
    %2545 = vmatprep.subr.mxu0 %v2029
    %2546 = vmatpush1.msra.mxu0 %v2028
    %2547 = vmatprep.subr.mxu0 %v2032
    %2548 = vmatpush1.msra.mxu0 %v2031
    %2549 = vmatprep.subr.mxu0 %v2035
    %2550 = vmatpush1.msra.mxu0 %v2034
    %2551 = vmatprep.subr.mxu0 %v2038
    %2552 = vmatpush1.msra.mxu0 %v2037
    %2553 = vmatprep.subr.mxu0 %v2041
    %2554 = vmatpush1.msra.mxu0 %v2040
    %2555 = vmatprep.subr.mxu0 %v2044
    %2556 = vmatpush1.msra.mxu0 %v2043
    %2557 = vmatprep.subr.mxu0 %v2047
    %2558 = vmatpush1.msra.mxu0 %v2046
    %2559 = vmatprep.subr.mxu0 %v2050
    %2560 = vmatpush1.msra.mxu0 %v2049
    %2561 = vmatprep.subr.mxu0 %v2053
    %2562 = vmatpush1.msra.mxu0 %v2052
    %2563 = vmatprep.subr.mxu0 %v2056
    %2564 = vmatpush1.msra.mxu0 %v2055
    %2565 = vmatprep.subr.mxu0 %v2059
    %2566 = vmatpush1.msra.mxu0 %v2058
    %2567 = vmatprep.subr.mxu0 %v2062
    %2568 = vmatpush1.msra.mxu0 %v2061
    %2569 = vmatprep.subr.mxu0 %v2065
    %2570 = vmatpush1.msra.mxu0 %v2064
    %2571 = vmatprep.mubr.f32.mxu0 %v1666
    %2572 = vmatmul.mubr.f32.gmra.mrb[0].mxu0 %v1665
    %v2573 = vpop.f32.mrb[0].mxu0
    %v2574 = vadd.f32 %v2497, %v2573
    %v2575 = vpop.f32.mrb[0].mxu0
    %v2576 = vadd.f32 %v2499, %v2575
    %2577 = vmatprep.mubr.f32.mxu0 %v1678
    %2578 = vmatmul.mubr.f32.gmra.mrb[0].mxu0 %v1677
    %v2579 = vpop.f32.mrb[0].mxu0
    %v2580 = vadd.f32 %v2503, %v2579
    %v2581 = vpop.f32.mrb[0].mxu0
    %v2582 = vadd.f32 %v2505, %v2581
    %2583 = vdwg.mxu0
    %2584 = vmatprep.subr.mxu0 %v2068
    %2585 = vmatpush1.msra.mxu0 %v2067
    %2586 = vmatprep.subr.mxu0 %v2071
    %2587 = vmatpush1.msra.mxu0 %v2070
    %2588 = vmatprep.subr.mxu0 %v2074
    %2589 = vmatpush1.msra.mxu0 %v2073
    %2590 = vmatprep.subr.mxu0 %v2077
    %2591 = vmatpush1.msra.mxu0 %v2076
    %2592 = vmatprep.subr.mxu0 %v2080
    %2593 = vmatpush1.msra.mxu0 %v2079
    %2594 = vmatprep.subr.mxu0 %v2083
    %2595 = vmatpush1.msra.mxu0 %v2082
    %2596 = vmatprep.subr.mxu0 %v2086
    %2597 = vmatpush1.msra.mxu0 %v2085
    %2598 = vmatprep.subr.mxu0 %v2089
    %2599 = vmatpush1.msra.mxu0 %v2088
    %2600 = vmatprep.subr.mxu0 %v2092
    %2601 = vmatpush1.msra.mxu0 %v2091
    %2602 = vmatprep.subr.mxu0 %v2095
    %2603 = vmatpush1.msra.mxu0 %v2094
    %2604 = vmatprep.subr.mxu0 %v2098
    %2605 = vmatpush1.msra.mxu0 %v2097
    %2606 = vmatprep.subr.mxu0 %v2101
    %2607 = vmatpush1.msra.mxu0 %v2100
    %2608 = vmatprep.subr.mxu0 %v2104
    %2609 = vmatpush1.msra.mxu0 %v2103
    %2610 = vmatprep.subr.mxu0 %v2107
    %2611 = vmatpush1.msra.mxu0 %v2106
    %2612 = vmatprep.subr.mxu0 %v2110
    %2613 = vmatpush1.msra.mxu0 %v2109
    %2614 = vmatprep.subr.mxu0 %v2113
    %2615 = vmatpush1.msra.mxu0 %v2112
    %2616 = vmatprep.subr.mxu0 %v2116
    %2617 = vmatpush1.msra.mxu0 %v2115
    %2618 = vmatprep.subr.mxu0 %v2119
    %2619 = vmatpush1.msra.mxu0 %v2118
    %2620 = vmatprep.subr.mxu0 %v2122
    %2621 = vmatpush1.msra.mxu0 %v2121
    %2622 = vmatprep.subr.mxu0 %v2125
    %2623 = vmatpush1.msra.mxu0 %v2124
    %2624 = vmatprep.subr.mxu0 %v2128
    %2625 = vmatpush1.msra.mxu0 %v2127
    %2626 = vmatprep.subr.mxu0 %v2131
    %2627 = vmatpush1.msra.mxu0 %v2130
    %2628 = vmatprep.subr.mxu0 %v2134
    %2629 = vmatpush1.msra.mxu0 %v2133
    %2630 = vmatprep.subr.mxu0 %v2137
    %2631 = vmatpush1.msra.mxu0 %v2136
    %2632 = vmatprep.subr.mxu0 %v2140
    %2633 = vmatpush1.msra.mxu0 %v2139
    %2634 = vmatprep.subr.mxu0 %v2143
    %2635 = vmatpush1.msra.mxu0 %v2142
    %2636 = vmatprep.subr.mxu0 %v2146
    %2637 = vmatpush1.msra.mxu0 %v2145
    %2638 = vmatprep.subr.mxu0 %v2149
    %2639 = vmatpush1.msra.mxu0 %v2148
    %2640 = vmatprep.subr.mxu0 %v2152
    %2641 = vmatpush1.msra.mxu0 %v2151
    %2642 = vmatprep.subr.mxu0 %v2155
    %2643 = vmatpush1.msra.mxu0 %v2154
    %2644 = vmatprep.subr.mxu0 %v2158
    %2645 = vmatpush1.msra.mxu0 %v2157
    %2646 = vmatprep.subr.mxu0 %v2161
    %2647 = vmatpush1.msra.mxu0 %v2160
    %2648 = vmatprep.mubr.f32.mxu0 %v1668
    %2649 = vmatmul.mubr.f32.gmra.mrb[0].mxu0 %v1667
    %v2650 = vpop.f32.mrb[0].mxu0
    %v2651 = vadd.f32 %v2574, %v2650
    %v2652 = vpop.f32.mrb[0].mxu0
    %v2653 = vadd.f32 %v2576, %v2652
    %2654 = vmatprep.mubr.f32.mxu0 %v1680
    %2655 = vmatmul.mubr.f32.gmra.mrb[0].mxu0 %v1679
    %v2656 = vpop.f32.mrb[0].mxu0
    %v2657 = vadd.f32 %v2580, %v2656
    %v2658 = vpop.f32.mrb[0].mxu0
    %v2659 = vadd.f32 %v2582, %v2658
    %2660 = vdwg.mxu0
    %2661 = vmatprep.subr.mxu0 %v2164
    %2662 = vmatpush1.msra.mxu0 %v2163
    %2663 = vmatprep.subr.mxu0 %v2167
    %2664 = vmatpush1.msra.mxu0 %v2166
    %2665 = vmatprep.subr.mxu0 %v2170
    %2666 = vmatpush1.msra.mxu0 %v2169
    %2667 = vmatprep.subr.mxu0 %v2173
    %2668 = vmatpush1.msra.mxu0 %v2172
    %2669 = vmatprep.subr.mxu0 %v2176
    %2670 = vmatpush1.msra.mxu0 %v2175
    %2671 = vmatprep.subr.mxu0 %v2179
    %2672 = vmatpush1.msra.mxu0 %v2178
    %2673 = vmatprep.subr.mxu0 %v2182
    %2674 = vmatpush1.msra.mxu0 %v2181
    %2675 = vmatprep.subr.mxu0 %v2185
    %2676 = vmatpush1.msra.mxu0 %v2184
    %2677 = vmatprep.subr.mxu0 %v2188
    %2678 = vmatpush1.msra.mxu0 %v2187
    %2679 = vmatprep.subr.mxu0 %v2191
    %2680 = vmatpush1.msra.mxu0 %v2190
    %2681 = vmatprep.subr.mxu0 %v2194
    %2682 = vmatpush1.msra.mxu0 %v2193
    %2683 = vmatprep.subr.mxu0 %v2197
    %2684 = vmatpush1.msra.mxu0 %v2196
    %2685 = vmatprep.subr.mxu0 %v2200
    %2686 = vmatpush1.msra.mxu0 %v2199
    %2687 = vmatprep.subr.mxu0 %v2203
    %2688 = vmatpush1.msra.mxu0 %v2202
    %2689 = vmatprep.subr.mxu0 %v2206
    %2690 = vmatpush1.msra.mxu0 %v2205
    %2691 = vmatprep.subr.mxu0 %v2209
    %2692 = vmatpush1.msra.mxu0 %v2208
    %2693 = vmatprep.subr.mxu0 %v2212
    %2694 = vmatpush1.msra.mxu0 %v2211
    %2695 = vmatprep.subr.mxu0 %v2215
    %2696 = vmatpush1.msra.mxu0 %v2214
    %2697 = vmatprep.subr.mxu0 %v2218
    %2698 = vmatpush1.msra.mxu0 %v2217
    %2699 = vmatprep.subr.mxu0 %v2221
    %2700 = vmatpush1.msra.mxu0 %v2220
    %2701 = vmatprep.subr.mxu0 %v2224
    %2702 = vmatpush1.msra.mxu0 %v2223
    %2703 = vmatprep.subr.mxu0 %v2227
    %2704 = vmatpush1.msra.mxu0 %v2226
    %2705 = vmatprep.subr.mxu0 %v2230
    %2706 = vmatpush1.msra.mxu0 %v2229
    %2707 = vmatprep.subr.mxu0 %v2233
    %2708 = vmatpush1.msra.mxu0 %v2232
    %2709 = vmatprep.subr.mxu0 %v2236
    %2710 = vmatpush1.msra.mxu0 %v2235
    %2711 = vmatprep.subr.mxu0 %v2239
    %2712 = vmatpush1.msra.mxu0 %v2238
    %2713 = vmatprep.subr.mxu0 %v2242
    %2714 = vmatpush1.msra.mxu0 %v2241
    %2715 = vmatprep.subr.mxu0 %v2245
    %2716 = vmatpush1.msra.mxu0 %v2244
    %2717 = vmatprep.subr.mxu0 %v2248
    %2718 = vmatpush1.msra.mxu0 %v2247
    %2719 = vmatprep.subr.mxu0 %v2251
    %2720 = vmatpush1.msra.mxu0 %v2250
    %2721 = vmatprep.subr.mxu0 %v2254
    %2722 = vmatpush1.msra.mxu0 %v2253
    %2723 = vmatprep.subr.mxu0 %v2257
    %2724 = vmatpush1.msra.mxu0 %v2256
    %2725 = vmatprep.mubr.f32.mxu0 %v1670
    %2726 = vmatmul.mubr.f32.gmra.mrb[0].mxu0 %v1669
    %v2727 = vpop.f32.mrb[0].mxu0
    %v2728 = vadd.f32 %v2651, %v2727
    %v2729 = vpop.f32.mrb[0].mxu0
    %v2730 = vadd.f32 %v2653, %v2729
    %2731 = vmatprep.mubr.f32.mxu0 %v1682
    %2732 = vmatmul.mubr.f32.gmra.mrb[0].mxu0 %v1681
    %v2733 = vpop.f32.mrb[0].mxu0
    %v2734 = vadd.f32 %v2657, %v2733
    %v2735 = vpop.f32.mrb[0].mxu0
    %v2736 = vadd.f32 %v2659, %v2735
    %2737 = vdwg.mxu0
    %2738 = vmatprep.subr.mxu0 0.0
    %2739 = vmatpush1.msra.mxu0 %v1685
    %2740 = vmatprep.subr.mxu0 0.0
    %2741 = vmatpush1.msra.mxu0 %v1688
    %2742 = vmatprep.subr.mxu0 0.0
    %2743 = vmatpush1.msra.mxu0 %v1691
    %2744 = vmatprep.subr.mxu0 0.0
    %2745 = vmatpush1.msra.mxu0 %v1694
    %2746 = vmatprep.subr.mxu0 0.0
    %2747 = vmatpush1.msra.mxu0 %v1697
    %2748 = vmatprep.subr.mxu0 0.0
    %2749 = vmatpush1.msra.mxu0 %v1700
    %2750 = vmatprep.subr.mxu0 0.0
    %2751 = vmatpush1.msra.mxu0 %v1703
    %2752 = vmatprep.subr.mxu0 0.0
    %2753 = vmatpush1.msra.mxu0 %v1706
    %2754 = vmatprep.subr.mxu0 0.0
    %2755 = vmatpush1.msra.mxu0 %v1709
    %2756 = vmatprep.subr.mxu0 0.0
    %2757 = vmatpush1.msra.mxu0 %v1712
    %2758 = vmatprep.subr.mxu0 0.0
    %2759 = vmatpush1.msra.mxu0 %v1715
    %2760 = vmatprep.subr.mxu0 0.0
    %2761 = vmatpush1.msra.mxu0 %v1718
    %2762 = vmatprep.subr.mxu0 0.0
    %2763 = vmatpush1.msra.mxu0 %v1721
    %2764 = vmatprep.subr.mxu0 0.0
    %2765 = vmatpush1.msra.mxu0 %v1724
    %2766 = vmatprep.subr.mxu0 0.0
    %2767 = vmatpush1.msra.mxu0 %v1727
    %2768 = vmatprep.subr.mxu0 0.0
    %2769 = vmatpush1.msra.mxu0 %v1730
    %2770 = vmatprep.subr.mxu0 0.0
    %2771 = vmatpush1.msra.mxu0 %v1733
    %2772 = vmatprep.subr.mxu0 0.0
    %2773 = vmatpush1.msra.mxu0 %v1736
    %2774 = vmatprep.subr.mxu0 0.0
    %2775 = vmatpush1.msra.mxu0 %v1739
    %2776 = vmatprep.subr.mxu0 0.0
    %2777 = vmatpush1.msra.mxu0 %v1742
    %2778 = vmatprep.subr.mxu0 0.0
    %2779 = vmatpush1.msra.mxu0 %v1745
    %2780 = vmatprep.subr.mxu0 0.0
    %2781 = vmatpush1.msra.mxu0 %v1748
    %2782 = vmatprep.subr.mxu0 0.0
    %2783 = vmatpush1.msra.mxu0 %v1751
    %2784 = vmatprep.subr.mxu0 0.0
    %2785 = vmatpush1.msra.mxu0 %v1754
    %2786 = vmatprep.subr.mxu0 0.0
    %2787 = vmatpush1.msra.mxu0 %v1757
    %2788 = vmatprep.subr.mxu0 0.0
    %2789 = vmatpush1.msra.mxu0 %v1760
    %2790 = vmatprep.subr.mxu0 0.0
    %2791 = vmatpush1.msra.mxu0 %v1763
    %2792 = vmatprep.subr.mxu0 0.0
    %2793 = vmatpush1.msra.mxu0 %v1766
    %2794 = vmatprep.subr.mxu0 0.0
    %2795 = vmatpush1.msra.mxu0 %v1769
    %2796 = vmatprep.subr.mxu0 0.0
    %2797 = vmatpush1.msra.mxu0 %v1772
    %2798 = vmatprep.subr.mxu0 0.0
    %2799 = vmatpush1.msra.mxu0 %v1775
    %2800 = vmatprep.subr.mxu0 0.0
    %2801 = vmatpush1.msra.mxu0 %v1778
    %2802 = vmatprep.mubr.f32.mxu0 %v1660
    %2803 = vmatmul.mubr.f32.gmra.mrb[0].mxu0 %v1659
    %v2804 = vpop.f32.mrb[0].mxu0
    %v2805 = vadd.f32 %v2272, %v2804
    %v2806 = vpop.f32.mrb[0].mxu0
    %2807 = vmatprep.mubr.f32.mxu0 %v1672
    %2808 = vmatmul.mubr.f32.gmra.mrb[0].mxu0 %v1671
    %v2809 = vpop.f32.mrb[0].mxu0
    %v2810 = vadd.f32 %v2272, %v2809
    %v2811 = vpop.f32.mrb[0].mxu0
    %2812 = vdwg.mxu0
    %2813 = vmatprep.subr.mxu0 0.0
    %2814 = vmatpush1.msra.mxu0 %v1781
    %2815 = vmatprep.subr.mxu0 0.0
    %2816 = vmatpush1.msra.mxu0 %v1784
    %2817 = vmatprep.subr.mxu0 0.0
    %2818 = vmatpush1.msra.mxu0 %v1787
    %2819 = vmatprep.subr.mxu0 0.0
    %2820 = vmatpush1.msra.mxu0 %v1790
    %2821 = vmatprep.subr.mxu0 0.0
    %2822 = vmatpush1.msra.mxu0 %v1793
    %2823 = vmatprep.subr.mxu0 0.0
    %2824 = vmatpush1.msra.mxu0 %v1796
    %2825 = vmatprep.subr.mxu0 0.0
    %2826 = vmatpush1.msra.mxu0 %v1799
    %2827 = vmatprep.subr.mxu0 0.0
    %2828 = vmatpush1.msra.mxu0 %v1802
    %2829 = vmatprep.subr.mxu0 0.0
    %2830 = vmatpush1.msra.mxu0 %v1805
    %2831 = vmatprep.subr.mxu0 0.0
    %2832 = vmatpush1.msra.mxu0 %v1808
    %2833 = vmatprep.subr.mxu0 0.0
    %2834 = vmatpush1.msra.mxu0 %v1811
    %2835 = vmatprep.subr.mxu0 0.0
    %2836 = vmatpush1.msra.mxu0 %v1814
    %2837 = vmatprep.subr.mxu0 0.0
    %2838 = vmatpush1.msra.mxu0 %v1817
    %2839 = vmatprep.subr.mxu0 0.0
    %2840 = vmatpush1.msra.mxu0 %v1820
    %2841 = vmatprep.subr.mxu0 0.0
    %2842 = vmatpush1.msra.mxu0 %v1823
    %2843 = vmatprep.subr.mxu0 0.0
    %2844 = vmatpush1.msra.mxu0 %v1826
    %2845 = vmatprep.subr.mxu0 0.0
    %2846 = vmatpush1.msra.mxu0 %v1829
    %2847 = vmatprep.subr.mxu0 0.0
    %2848 = vmatpush1.msra.mxu0 %v1832
    %2849 = vmatprep.subr.mxu0 0.0
    %2850 = vmatpush1.msra.mxu0 %v1835
    %2851 = vmatprep.subr.mxu0 0.0
    %2852 = vmatpush1.msra.mxu0 %v1838
    %2853 = vmatprep.subr.mxu0 0.0
    %2854 = vmatpush1.msra.mxu0 %v1841
    %2855 = vmatprep.subr.mxu0 0.0
    %2856 = vmatpush1.msra.mxu0 %v1844
    %2857 = vmatprep.subr.mxu0 0.0
    %2858 = vmatpush1.msra.mxu0 %v1847
    %2859 = vmatprep.subr.mxu0 0.0
    %2860 = vmatpush1.msra.mxu0 %v1850
    %2861 = vmatprep.subr.mxu0 0.0
    %2862 = vmatpush1.msra.mxu0 %v1853
    %2863 = vmatprep.subr.mxu0 0.0
    %2864 = vmatpush1.msra.mxu0 %v1856
    %2865 = vmatprep.subr.mxu0 0.0
    %2866 = vmatpush1.msra.mxu0 %v1859
    %2867 = vmatprep.subr.mxu0 0.0
    %2868 = vmatpush1.msra.mxu0 %v1862
    %2869 = vmatprep.subr.mxu0 0.0
    %2870 = vmatpush1.msra.mxu0 %v1865
    %2871 = vmatprep.subr.mxu0 0.0
    %2872 = vmatpush1.msra.mxu0 %v1868
    %2873 = vmatprep.subr.mxu0 0.0
    %2874 = vmatpush1.msra.mxu0 %v1871
    %2875 = vmatprep.subr.mxu0 0.0
    %2876 = vmatpush1.msra.mxu0 %v1874
    %2877 = vmatprep.mubr.f32.mxu0 %v1662
    %2878 = vmatmul.mubr.f32.gmra.mrb[0].mxu0 %v1661
    %v2879 = vpop.f32.mrb[0].mxu0
    %v2880 = vadd.f32 %v2805, %v2879
    %v2881 = vpop.f32.mrb[0].mxu0
    %2882 = vmatprep.mubr.f32.mxu0 %v1674
    %2883 = vmatmul.mubr.f32.gmra.mrb[0].mxu0 %v1673
    %v2884 = vpop.f32.mrb[0].mxu0
    %v2885 = vadd.f32 %v2810, %v2884
    %v2886 = vpop.f32.mrb[0].mxu0
    %2887 = vdwg.mxu0
    %2888 = vmatprep.subr.mxu0 0.0
    %2889 = vmatpush1.msra.mxu0 %v1877
    %2890 = vmatprep.subr.mxu0 0.0
    %2891 = vmatpush1.msra.mxu0 %v1880
    %2892 = vmatprep.subr.mxu0 0.0
    %2893 = vmatpush1.msra.mxu0 %v1883
    %2894 = vmatprep.subr.mxu0 0.0
    %2895 = vmatpush1.msra.mxu0 %v1886
    %2896 = vmatprep.subr.mxu0 0.0
    %2897 = vmatpush1.msra.mxu0 %v1889
    %2898 = vmatprep.subr.mxu0 0.0
    %2899 = vmatpush1.msra.mxu0 %v1892
    %2900 = vmatprep.subr.mxu0 0.0
    %2901 = vmatpush1.msra.mxu0 %v1895
    %2902 = vmatprep.subr.mxu0 0.0
    %2903 = vmatpush1.msra.mxu0 %v1898
    %2904 = vmatprep.subr.mxu0 0.0
    %2905 = vmatpush1.msra.mxu0 %v1901
    %2906 = vmatprep.subr.mxu0 0.0
    %2907 = vmatpush1.msra.mxu0 %v1904
    %2908 = vmatprep.subr.mxu0 0.0
    %2909 = vmatpush1.msra.mxu0 %v1907
    %2910 = vmatprep.subr.mxu0 0.0
    %2911 = vmatpush1.msra.mxu0 %v1910
    %2912 = vmatprep.subr.mxu0 0.0
    %2913 = vmatpush1.msra.mxu0 %v1913
    %2914 = vmatprep.subr.mxu0 0.0
    %2915 = vmatpush1.msra.mxu0 %v1916
    %2916 = vmatprep.subr.mxu0 0.0
    %2917 = vmatpush1.msra.mxu0 %v1919
    %2918 = vmatprep.subr.mxu0 0.0
    %2919 = vmatpush1.msra.mxu0 %v1922
    %2920 = vmatprep.subr.mxu0 0.0
    %2921 = vmatpush1.msra.mxu0 %v1925
    %2922 = vmatprep.subr.mxu0 0.0
    %2923 = vmatpush1.msra.mxu0 %v1928
    %2924 = vmatprep.subr.mxu0 0.0
    %2925 = vmatpush1.msra.mxu0 %v1931
    %2926 = vmatprep.subr.mxu0 0.0
    %2927 = vmatpush1.msra.mxu0 %v1934
    %2928 = vmatprep.subr.mxu0 0.0
    %2929 = vmatpush1.msra.mxu0 %v1937
    %2930 = vmatprep.subr.mxu0 0.0
    %2931 = vmatpush1.msra.mxu0 %v1940
    %2932 = vmatprep.subr.mxu0 0.0
    %2933 = vmatpush1.msra.mxu0 %v1943
    %2934 = vmatprep.subr.mxu0 0.0
    %2935 = vmatpush1.msra.mxu0 %v1946
    %2936 = vmatprep.subr.mxu0 0.0
    %2937 = vmatpush1.msra.mxu0 %v1949
    %2938 = vmatprep.subr.mxu0 0.0
    %2939 = vmatpush1.msra.mxu0 %v1952
    %2940 = vmatprep.subr.mxu0 0.0
    %2941 = vmatpush1.msra.mxu0 %v1955
    %2942 = vmatprep.subr.mxu0 0.0
    %2943 = vmatpush1.msra.mxu0 %v1958
    %2944 = vmatprep.subr.mxu0 0.0
    %2945 = vmatpush1.msra.mxu0 %v1961
    %2946 = vmatprep.subr.mxu0 0.0
    %2947 = vmatpush1.msra.mxu0 %v1964
    %2948 = vmatprep.subr.mxu0 0.0
    %2949 = vmatpush1.msra.mxu0 %v1967
    %2950 = vmatprep.subr.mxu0 0.0
    %2951 = vmatpush1.msra.mxu0 %v1970
    %2952 = vmatprep.mubr.f32.mxu0 %v1664
    %2953 = vmatmul.mubr.f32.gmra.mrb[0].mxu0 %v1663
    %v2954 = vpop.f32.mrb[0].mxu0
    %v2955 = vadd.f32 %v2880, %v2954
    %v2956 = vpop.f32.mrb[0].mxu0
    %2957 = vmatprep.mubr.f32.mxu0 %v1676
    %2958 = vmatmul.mubr.f32.gmra.mrb[0].mxu0 %v1675
    %v2959 = vpop.f32.mrb[0].mxu0
    %v2960 = vadd.f32 %v2885, %v2959
    %v2961 = vpop.f32.mrb[0].mxu0
    %2962 = vdwg.mxu0
    %2963 = vmatprep.subr.mxu0 0.0
    %2964 = vmatpush1.msra.mxu0 %v1973
    %2965 = vmatprep.subr.mxu0 0.0
    %2966 = vmatpush1.msra.mxu0 %v1976
    %2967 = vmatprep.subr.mxu0 0.0
    %2968 = vmatpush1.msra.mxu0 %v1979
    %2969 = vmatprep.subr.mxu0 0.0
    %2970 = vmatpush1.msra.mxu0 %v1982
    %2971 = vmatprep.subr.mxu0 0.0
    %2972 = vmatpush1.msra.mxu0 %v1985
    %2973 = vmatprep.subr.mxu0 0.0
    %2974 = vmatpush1.msra.mxu0 %v1988
    %2975 = vmatprep.subr.mxu0 0.0
    %2976 = vmatpush1.msra.mxu0 %v1991
    %2977 = vmatprep.subr.mxu0 0.0
    %2978 = vmatpush1.msra.mxu0 %v1994
    %2979 = vmatprep.subr.mxu0 0.0
    %2980 = vmatpush1.msra.mxu0 %v1997
    %2981 = vmatprep.subr.mxu0 0.0
    %2982 = vmatpush1.msra.mxu0 %v2000
    %2983 = vmatprep.subr.mxu0 0.0
    %2984 = vmatpush1.msra.mxu0 %v2003
    %2985 = vmatprep.subr.mxu0 0.0
    %2986 = vmatpush1.msra.mxu0 %v2006
    %2987 = vmatprep.subr.mxu0 0.0
    %2988 = vmatpush1.msra.mxu0 %v2009
    %2989 = vmatprep.subr.mxu0 0.0
    %2990 = vmatpush1.msra.mxu0 %v2012
    %2991 = vmatprep.subr.mxu0 0.0
    %2992 = vmatpush1.msra.mxu0 %v2015
    %2993 = vmatprep.subr.mxu0 0.0
    %2994 = vmatpush1.msra.mxu0 %v2018
    %2995 = vmatprep.subr.mxu0 0.0
    %2996 = vmatpush1.msra.mxu0 %v2021
    %2997 = vmatprep.subr.mxu0 0.0
    %2998 = vmatpush1.msra.mxu0 %v2024
    %2999 = vmatprep.subr.mxu0 0.0
    %3000 = vmatpush1.msra.mxu0 %v2027
    %3001 = vmatprep.subr.mxu0 0.0
    %3002 = vmatpush1.msra.mxu0 %v2030
    %3003 = vmatprep.subr.mxu0 0.0
    %3004 = vmatpush1.msra.mxu0 %v2033
    %3005 = vmatprep.subr.mxu0 0.0
    %3006 = vmatpush1.msra.mxu0 %v2036
    %3007 = vmatprep.subr.mxu0 0.0
    %3008 = vmatpush1.msra.mxu0 %v2039
    %3009 = vmatprep.subr.mxu0 0.0
    %3010 = vmatpush1.msra.mxu0 %v2042
    %3011 = vmatprep.subr.mxu0 0.0
    %3012 = vmatpush1.msra.mxu0 %v2045
    %3013 = vmatprep.subr.mxu0 0.0
    %3014 = vmatpush1.msra.mxu0 %v2048
    %3015 = vmatprep.subr.mxu0 0.0
    %3016 = vmatpush1.msra.mxu0 %v2051
    %3017 = vmatprep.subr.mxu0 0.0
    %3018 = vmatpush1.msra.mxu0 %v2054
    %3019 = vmatprep.subr.mxu0 0.0
    %3020 = vmatpush1.msra.mxu0 %v2057
    %3021 = vmatprep.subr.mxu0 0.0
    %3022 = vmatpush1.msra.mxu0 %v2060
    %3023 = vmatprep.subr.mxu0 0.0
    %3024 = vmatpush1.msra.mxu0 %v2063
    %3025 = vmatprep.subr.mxu0 0.0
    %3026 = vmatpush1.msra.mxu0 %v2066
    %3027 = vmatprep.mubr.f32.mxu0 %v1666
    %3028 = vmatmul.mubr.f32.gmra.mrb[0].mxu0 %v1665
    %v3029 = vpop.f32.mrb[0].mxu0
    %v3030 = vadd.f32 %v2955, %v3029
    %v3031 = vpop.f32.mrb[0].mxu0
    %3032 = vmatprep.mubr.f32.mxu0 %v1678
    %3033 = vmatmul.mubr.f32.gmra.mrb[0].mxu0 %v1677
    %v3034 = vpop.f32.mrb[0].mxu0
    %v3035 = vadd.f32 %v2960, %v3034
    %v3036 = vpop.f32.mrb[0].mxu0
    %3037 = vdwg.mxu0
    %3038 = vmatprep.subr.mxu0 0.0
    %3039 = vmatpush1.msra.mxu0 %v2069
    %3040 = vmatprep.subr.mxu0 0.0
    %3041 = vmatpush1.msra.mxu0 %v2072
    %3042 = vmatprep.subr.mxu0 0.0
    %3043 = vmatpush1.msra.mxu0 %v2075
    %3044 = vmatprep.subr.mxu0 0.0
    %3045 = vmatpush1.msra.mxu0 %v2078
    %3046 = vmatprep.subr.mxu0 0.0
    %3047 = vmatpush1.msra.mxu0 %v2081
    %3048 = vmatprep.subr.mxu0 0.0
    %3049 = vmatpush1.msra.mxu0 %v2084
    %3050 = vmatprep.subr.mxu0 0.0
    %3051 = vmatpush1.msra.mxu0 %v2087
    %3052 = vmatprep.subr.mxu0 0.0
    %3053 = vmatpush1.msra.mxu0 %v2090
    %3054 = vmatprep.subr.mxu0 0.0
    %3055 = vmatpush1.msra.mxu0 %v2093
    %3056 = vmatprep.subr.mxu0 0.0
    %3057 = vmatpush1.msra.mxu0 %v2096
    %3058 = vmatprep.subr.mxu0 0.0
    %3059 = vmatpush1.msra.mxu0 %v2099
    %3060 = vmatprep.subr.mxu0 0.0
    %3061 = vmatpush1.msra.mxu0 %v2102
    %3062 = vmatprep.subr.mxu0 0.0
    %3063 = vmatpush1.msra.mxu0 %v2105
    %3064 = vmatprep.subr.mxu0 0.0
    %3065 = vmatpush1.msra.mxu0 %v2108
    %3066 = vmatprep.subr.mxu0 0.0
    %3067 = vmatpush1.msra.mxu0 %v2111
    %3068 = vmatprep.subr.mxu0 0.0
    %3069 = vmatpush1.msra.mxu0 %v2114
    %3070 = vmatprep.subr.mxu0 0.0
    %3071 = vmatpush1.msra.mxu0 %v2117
    %3072 = vmatprep.subr.mxu0 0.0
    %3073 = vmatpush1.msra.mxu0 %v2120
    %3074 = vmatprep.subr.mxu0 0.0
    %3075 = vmatpush1.msra.mxu0 %v2123
    %3076 = vmatprep.subr.mxu0 0.0
    %3077 = vmatpush1.msra.mxu0 %v2126
    %3078 = vmatprep.subr.mxu0 0.0
    %3079 = vmatpush1.msra.mxu0 %v2129
    %3080 = vmatprep.subr.mxu0 0.0
    %3081 = vmatpush1.msra.mxu0 %v2132
    %3082 = vmatprep.subr.mxu0 0.0
    %3083 = vmatpush1.msra.mxu0 %v2135
    %3084 = vmatprep.subr.mxu0 0.0
    %3085 = vmatpush1.msra.mxu0 %v2138
    %3086 = vmatprep.subr.mxu0 0.0
    %3087 = vmatpush1.msra.mxu0 %v2141
    %3088 = vmatprep.subr.mxu0 0.0
    %3089 = vmatpush1.msra.mxu0 %v2144
    %3090 = vmatprep.subr.mxu0 0.0
    %3091 = vmatpush1.msra.mxu0 %v2147
    %3092 = vmatprep.subr.mxu0 0.0
    %3093 = vmatpush1.msra.mxu0 %v2150
    %3094 = vmatprep.subr.mxu0 0.0
    %3095 = vmatpush1.msra.mxu0 %v2153
    %3096 = vmatprep.subr.mxu0 0.0
    %3097 = vmatpush1.msra.mxu0 %v2156
    %3098 = vmatprep.subr.mxu0 0.0
    %3099 = vmatpush1.msra.mxu0 %v2159
    %3100 = vmatprep.subr.mxu0 0.0
    %3101 = vmatpush1.msra.mxu0 %v2162
    %3102 = vmatprep.mubr.f32.mxu0 %v1668
    %3103 = vmatmul.mubr.f32.gmra.mrb[0].mxu0 %v1667
    %v3104 = vpop.f32.mrb[0].mxu0
    %v3105 = vadd.f32 %v3030, %v3104
    %v3106 = vpop.f32.mrb[0].mxu0
    %3107 = vmatprep.mubr.f32.mxu0 %v1680
    %3108 = vmatmul.mubr.f32.gmra.mrb[0].mxu0 %v1679
    %v3109 = vpop.f32.mrb[0].mxu0
    %v3110 = vadd.f32 %v3035, %v3109
    %v3111 = vpop.f32.mrb[0].mxu0
    %3112 = vdwg.mxu0
    %3113 = vmatprep.subr.mxu0 0.0
    %3114 = vmatpush1.msra.mxu0 %v2165
    %3115 = vmatprep.subr.mxu0 0.0
    %3116 = vmatpush1.msra.mxu0 %v2168
    %3117 = vmatprep.subr.mxu0 0.0
    %3118 = vmatpush1.msra.mxu0 %v2171
    %3119 = vmatprep.subr.mxu0 0.0
    %3120 = vmatpush1.msra.mxu0 %v2174
    %3121 = vmatprep.subr.mxu0 0.0
    %3122 = vmatpush1.msra.mxu0 %v2177
    %3123 = vmatprep.subr.mxu0 0.0
    %3124 = vmatpush1.msra.mxu0 %v2180
    %3125 = vmatprep.subr.mxu0 0.0
    %3126 = vmatpush1.msra.mxu0 %v2183
    %3127 = vmatprep.subr.mxu0 0.0
    %3128 = vmatpush1.msra.mxu0 %v2186
    %3129 = vmatprep.subr.mxu0 0.0
    %3130 = vmatpush1.msra.mxu0 %v2189
    %3131 = vmatprep.subr.mxu0 0.0
    %3132 = vmatpush1.msra.mxu0 %v2192
    %3133 = vmatprep.subr.mxu0 0.0
    %3134 = vmatpush1.msra.mxu0 %v2195
    %3135 = vmatprep.subr.mxu0 0.0
    %3136 = vmatpush1.msra.mxu0 %v2198
    %3137 = vmatprep.subr.mxu0 0.0
    %3138 = vmatpush1.msra.mxu0 %v2201
    %3139 = vmatprep.subr.mxu0 0.0
    %3140 = vmatpush1.msra.mxu0 %v2204
    %3141 = vmatprep.subr.mxu0 0.0
    %3142 = vmatpush1.msra.mxu0 %v2207
    %3143 = vmatprep.subr.mxu0 0.0
    %3144 = vmatpush1.msra.mxu0 %v2210
    %3145 = vmatprep.subr.mxu0 0.0
    %3146 = vmatpush1.msra.mxu0 %v2213
    %3147 = vmatprep.subr.mxu0 0.0
    %3148 = vmatpush1.msra.mxu0 %v2216
    %3149 = vmatprep.subr.mxu0 0.0
    %3150 = vmatpush1.msra.mxu0 %v2219
    %3151 = vmatprep.subr.mxu0 0.0
    %3152 = vmatpush1.msra.mxu0 %v2222
    %3153 = vmatprep.subr.mxu0 0.0
    %3154 = vmatpush1.msra.mxu0 %v2225
    %3155 = vmatprep.subr.mxu0 0.0
    %3156 = vmatpush1.msra.mxu0 %v2228
    %3157 = vmatprep.subr.mxu0 0.0
    %3158 = vmatpush1.msra.mxu0 %v2231
    %3159 = vmatprep.subr.mxu0 0.0
    %3160 = vmatpush1.msra.mxu0 %v2234
    %3161 = vmatprep.subr.mxu0 0.0
    %3162 = vmatpush1.msra.mxu0 %v2237
    %3163 = vmatprep.subr.mxu0 0.0
    %3164 = vmatpush1.msra.mxu0 %v2240
    %3165 = vmatprep.subr.mxu0 0.0
    %3166 = vmatpush1.msra.mxu0 %v2243
    %3167 = vmatprep.subr.mxu0 0.0
    %3168 = vmatpush1.msra.mxu0 %v2246
    %3169 = vmatprep.subr.mxu0 0.0
    %3170 = vmatpush1.msra.mxu0 %v2249
    %3171 = vmatprep.subr.mxu0 0.0
    %3172 = vmatpush1.msra.mxu0 %v2252
    %3173 = vmatprep.subr.mxu0 0.0
    %3174 = vmatpush1.msra.mxu0 %v2255
    %3175 = vmatprep.subr.mxu0 0.0
    %3176 = vmatpush1.msra.mxu0 %v2258
    %3177 = vmatprep.mubr.f32.mxu0 %v1670
    %3178 = vmatmul.mubr.f32.gmra.mrb[0].mxu0 %v1669
    %v3179 = vpop.f32.mrb[0].mxu0
    %v3180 = vadd.f32 %v3105, %v3179
    %v3181 = vpop.f32.mrb[0].mxu0
    %3182 = vmatprep.mubr.f32.mxu0 %v1682
    %3183 = vmatmul.mubr.f32.gmra.mrb[0].mxu0 %v1681
    %v3184 = vpop.f32.mrb[0].mxu0
    %v3185 = vadd.f32 %v3110, %v3184
    %v3186 = vpop.f32.mrb[0].mxu0
    %3187 = vdwg.mxu0
    %3188 = vst [vmem:[#allocation12] sm:$0xff] %v2728
    %3189 = vst [vmem:[#allocation12 + $0x8] sm:$0xff] %v2730
    %3190 = vst [vmem:[#allocation12 + $0x10] sm:$0xff] %v3180
    %3191 = vst [vmem:[#allocation12 + $0x18] sm:$0xff] %v2734
    %3192 = vst [vmem:[#allocation12 + $0x20] sm:$0xff] %v2736
    %3193 = vst [vmem:[#allocation12 + $0x28] sm:$0xff] %v3185
    // Predicated region
    $region46: #{feed_forward.1} parent=1 // pred_check
      _
    $region47: #{feed_forward.1} parent=1 // pred_check_branch
      %3195 = sbr.rel (0) target = $region49
    $region48: #{feed_forward.1} parent=1 // pred_region
      %s3197 = ssub.s32 768, 768
      %3198 = vsyncadd [#allocation5], %s3197
      %s3199 = sshll.u32 [#allocation12], 4
      %s3200 = int_to_ptr.vmem [resolvable:$true] %s3199
      %3205 = dma.vmem_to_hbm [thread:$0]  %s3200, 768, %s6, [#allocation5], 384, 384, 24
    $region49: #{feed_forward.1} parent=1 // pred_fallthru
      _
    // Predicated region
    $region50: #{feed_forward.1} parent=1 // pred_check
      _
    $region51: #{feed_forward.1} parent=1 // pred_check_branch
      %3207 = sbr.rel (0) target = $region53
    $region52: #{feed_forward.1} parent=1 // pred_region
      %3208 = dma.done [#allocation5], 768
    $region53: #{feed_forward.1} parent=1 // pred_fallthru
      _
    %3209 = vsyncpa [#allocation4], 1
    %3210 = vsyncpa [#allocation7], 1
    %3211 = vsyncpa [#allocation10], 1
    %3212 = vsyncpa [#allocation5], 1

</llo_original>
